<compile_context>
chip_gen: v7x
topology: tpu7x:2x2x1
jax: 0.10.0
libtpu: 0.0.40
codegen_flags: <defaults>
</compile_context>

<pallas_src>
import jax
import jax.numpy as jnp
from jax.experimental import pallas as pl
from jax.experimental.pallas import tpu as pltpu


D_IN = 100
D_IN_PAD = 128          # 100 -> 128 (lane-aligned contraction dim for layer 1)
D_H1 = 256
D_H2 = 512
D_H3 = 1024
D_OUT = 28 * 28         # 784 (written directly; last block dim == full dim)


def _round_up(n, m):
    return ((n + m - 1) // m) * m


# ----------------------------------------------------------------------------
# Kernel
# ----------------------------------------------------------------------------
def _generator_kernel(x_ref,
                      w1_ref, b1_ref,
                      w2_ref, b2_ref,
                      w3_ref, b3_ref,
                      w4_ref, b4_ref,
                      o_ref):
    # x tile: (TM, 128) bf16.  Weights bf16 (resident across grid steps),
    # biases f32.  All accumulation in f32; activations/bias adds in f32;
    # downcast to bf16 only at the next matmul's input.
    h = jnp.dot(x_ref[...], w1_ref[...], preferred_element_type=jnp.float32)
    h = jnp.maximum(h + b1_ref[...], 0.0)

    h = jnp.dot(h.astype(jnp.bfloat16), w2_ref[...],
                preferred_element_type=jnp.float32)
    h = jnp.maximum(h + b2_ref[...], 0.0)

    h = jnp.dot(h.astype(jnp.bfloat16), w3_ref[...],
                preferred_element_type=jnp.float32)
    h = jnp.maximum(h + b3_ref[...], 0.0)

    h = jnp.dot(h.astype(jnp.bfloat16), w4_ref[...],
                preferred_element_type=jnp.float32)
    o_ref[...] = jnp.tanh(h + b4_ref[...]).astype(o_ref.dtype)


# ----------------------------------------------------------------------------
# One-time parameter preparation (hoisted out of the per-call path)
# ----------------------------------------------------------------------------
def prepare_params(params):
    """Cast weights to bf16 and zero-pad W1's contraction dim 100 -> 128.

    Call once (e.g. after init / after every optimizer step) and reuse the
    result for every generator_forward call.
    """
    w1 = jnp.pad(params["W1"].astype(jnp.bfloat16),
                 ((0, D_IN_PAD - D_IN), (0, 0)))
    return {
        "W1": w1,
        "W2": params["W2"].astype(jnp.bfloat16),
        "W3": params["W3"].astype(jnp.bfloat16),
        "W4": params["W4"].astype(jnp.bfloat16),
        "b1": params["b1"].astype(jnp.float32),
        "b2": params["b2"].astype(jnp.float32),
        "b3": params["b3"].astype(jnp.float32),
        "b4": params["b4"].astype(jnp.float32),
    }


def _choose_tile(B):
    """Pick the batch tile TM and padded batch size."""
    b8 = _round_up(B, 8)
    # Large tile amortizes the ~0.35us per-grid-step overhead (v6e/v7x).
    tm = min(512, b8)
    tm = _round_up(tm, 8)
    b_pad = _round_up(B, tm)
    # v7x has 2 TensorCores: the "parallel" grid axis only shards across them
    # when there are >= 2 grid steps.  Halve the tile until that holds.
    while b_pad // tm < 2 and tm > 8:
        tm = max(8, _round_up(tm // 2, 8))
        b_pad = _round_up(B, tm)
    return tm, b_pad


# ----------------------------------------------------------------------------
# Forward wrapper
# ----------------------------------------------------------------------------
def generator_forward(x, prepared_params, *, out_dtype=jnp.float32):
    """x: [B, 100] f32; prepared_params: output of prepare_params().

    Returns [B, 784] `out_dtype` (default f32; bf16 halves output writeback
    bandwidth on v5e/v6e if the consumer accepts it).
    """
    B = x.shape[0]
    tm, b_pad = _choose_tile(B)
    grid = (b_pad // tm,)

    # Only per-call prep: pad the latent 100 -> 128 and the batch -> b_pad,
    # cast to bf16.  (~B*256 bytes; weights are already prepared once.)
    x_p = jnp.pad(x.astype(jnp.bfloat16),
                  ((0, b_pad - B), (0, D_IN_PAD - D_IN)))

    p = prepared_params

    def resident(shape):
        # Full array, same block every grid step -> stays in VMEM across steps.
        return pl.BlockSpec(shape, lambda i: (0, 0))

    # --- cost estimate (hint for XLA scheduling around the custom call) -----
    mm_terms = (D_IN_PAD * D_H1 + D_H1 * D_H2 + D_H2 * D_H3 + D_H3 * D_OUT)
    weight_bytes = 2 * mm_terms + 4 * (D_H1 + D_H2 + D_H3 + D_OUT)
    out_itemsize = jnp.dtype(out_dtype).itemsize
    cost = pl.CostEstimate(
        flops=2 * b_pad * mm_terms,
        transcendentals=b_pad * D_OUT,
        bytes_accessed=(weight_bytes
                        + b_pad * D_IN_PAD * 2
                        + b_pad * D_OUT * out_itemsize),
    )

    out = pl.pallas_call(
        _generator_kernel,
        out_shape=jax.ShapeDtypeStruct((b_pad, D_OUT), out_dtype),
        grid=grid,
        in_specs=[
            pl.BlockSpec((tm, D_IN_PAD), lambda i: (i, 0)),   # x: batch-tiled
            resident((D_IN_PAD, D_H1)), resident((1, D_H1)),
            resident((D_H1, D_H2)),     resident((1, D_H2)),
            resident((D_H2, D_H3)),     resident((1, D_H3)),
            resident((D_H3, D_OUT)),    resident((1, D_OUT)),
        ],
        # Output last dim == full array dim (784): no post-kernel depad slice.
        out_specs=pl.BlockSpec((tm, D_OUT), lambda i: (i, 0)),
        compiler_params=pltpu.CompilerParams(
            dimension_semantics=("parallel",),   # shard batch tiles over TCs
            vmem_limit_bytes=48 << 20,           # headroom for TM up to 512
        ),
        cost_estimate=cost,
    )(x_p,
      p["W1"], p["b1"], p["W2"], p["b2"],
      p["W3"], p["b3"], p["W4"], p["b4"])

    # Row depad only when the batch wasn't a tile multiple.
    return out if b_pad == B else out[:B]


# ----------------------------------------------------------------------------
# Parameter init + references (for the self-test)
# ----------------------------------------------------------------------------
def init_params(key):
    """Deterministic init mimicking torch.nn.Linear default (U[-1/sqrt(fan_in), +])."""
    dims = [(D_IN, D_H1), (D_H1, D_H2), (D_H2, D_H3), (D_H3, D_OUT)]
    params = {}
    keys = jax.random.split(key, 2 * len(dims))
    for i, (fan_in, fan_out) in enumerate(dims):
        bound = 1.0 / jnp.sqrt(jnp.asarray(fan_in, jnp.float32))
        params[f"W{i+1}"] = jax.random.uniform(
            keys[2 * i], (fan_in, fan_out), jnp.float32, -bound, bound)
        # bias kept 2-D [1, fan_out] for clean TPU lane layout; broadcasts over batch
        params[f"b{i+1}"] = jax.random.uniform(
            keys[2 * i + 1], (1, fan_out), jnp.float32, -bound, bound)
    return params


def reference_forward_bf16(x, params):
    """Same math as the kernel (bf16 matmul inputs, f32 accum/activations)."""
    def layer(h, w, b, act):
        y = jnp.dot(h.astype(jnp.bfloat16), w.astype(jnp.bfloat16),
                    preferred_element_type=jnp.float32) + b
        return act(y)
    h = layer(x, params["W1"], params["b1"], lambda v: jnp.maximum(v, 0.0))
    h = layer(h, params["W2"], params["b2"], lambda v: jnp.maximum(v, 0.0))
    h = layer(h, params["W3"], params["b3"], lambda v: jnp.maximum(v, 0.0))
    return layer(h, params["W4"], params["b4"], jnp.tanh)


def reference_forward_f32(x, params):
    h = jnp.maximum(x @ params["W1"] + params["b1"], 0.0)
    h = jnp.maximum(h @ params["W2"] + params["b2"], 0.0)
    h = jnp.maximum(h @ params["W3"] + params["b3"], 0.0)
    return jnp.tanh(h @ params["W4"] + params["b4"])


if __name__ == "__main__":
    key = jax.random.PRNGKey(0)
    k_params, k_x = jax.random.split(key)

    params = init_params(k_params)
    prepared = prepare_params(params)   # one-time weight cast/pad (hoisted)

    # --- small batch (single grid step) -------------------------------------
    B = 8  # latent dim fixed at 100 by the module
    x = jax.random.normal(k_x, (B, D_IN), jnp.float32)
    out = jax.block_until_ready(generator_forward(x, prepared))
    assert out.shape == (B, D_OUT), out.shape

    ref_bf16 = reference_forward_bf16(x, params)
    assert jnp.allclose(out, ref_bf16, atol=2e-3, rtol=2e-3), "mismatch vs bf16 reference"
    ref_f32 = reference_forward_f32(x, params)
    assert jnp.allclose(out, ref_f32, atol=5e-2, rtol=5e-2), "mismatch vs f32 reference"

    # --- larger batch: exercises >=2 grid steps (megacore) + row depad ------
    B2 = 200
    x2 = jax.random.normal(jax.random.PRNGKey(1), (B2, D_IN), jnp.float32)
    out2 = jax.block_until_ready(generator_forward(x2, prepared))
    assert out2.shape == (B2, D_OUT), out2.shape
    ref2 = reference_forward_bf16(x2, params)
    assert jnp.allclose(out2, ref2, atol=2e-3, rtol=2e-3), "mismatch vs bf16 reference (B=200)"

    print("KERNEL_OK")
</pallas_src>

<mosaic_0001>
module attributes {stable_mosaic.version = 11 : i64} {
  func.func @_generator_kernel(%arg0: i32, %arg1: memref<8x128xbf16, #tpu.memory_space<vmem>>, %arg2: memref<128x256xbf16, #tpu.memory_space<vmem>>, %arg3: memref<1x256xf32, #tpu.memory_space<vmem>>, %arg4: memref<256x512xbf16, #tpu.memory_space<vmem>>, %arg5: memref<1x512xf32, #tpu.memory_space<vmem>>, %arg6: memref<512x1024xbf16, #tpu.memory_space<vmem>>, %arg7: memref<1x1024xf32, #tpu.memory_space<vmem>>, %arg8: memref<1024x784xbf16, #tpu.memory_space<vmem>>, %arg9: memref<1x784xf32, #tpu.memory_space<vmem>>, %arg10: memref<8x784xf32, #tpu.memory_space<vmem>>) attributes {dimension_semantics = [#tpu.dimension_semantics<parallel>], iteration_bounds = array<i64: 1>, scalar_prefetch = 0 : i64, scratch_operands = 0 : i64, tpu.core_type = #tpu.core_type<tc>, window_params = [{transform_indices = @transform_0, window_bounds = array<i64: 8, 128>}, {pipeline_mode = #tpu.pipeline_mode<synchronous>, transform_indices = @transform_1, window_bounds = array<i64: 128, 256>}, {pipeline_mode = #tpu.pipeline_mode<synchronous>, transform_indices = @transform_2, window_bounds = array<i64: 1, 256>}, {pipeline_mode = #tpu.pipeline_mode<synchronous>, transform_indices = @transform_3, window_bounds = array<i64: 256, 512>}, {pipeline_mode = #tpu.pipeline_mode<synchronous>, transform_indices = @transform_4, window_bounds = array<i64: 1, 512>}, {pipeline_mode = #tpu.pipeline_mode<synchronous>, transform_indices = @transform_5, window_bounds = array<i64: 512, 1024>}, {pipeline_mode = #tpu.pipeline_mode<synchronous>, transform_indices = @transform_6, window_bounds = array<i64: 1, 1024>}, {pipeline_mode = #tpu.pipeline_mode<synchronous>, transform_indices = @transform_7, window_bounds = array<i64: 1024, 784>}, {pipeline_mode = #tpu.pipeline_mode<synchronous>, transform_indices = @transform_8, window_bounds = array<i64: 1, 784>}, {transform_indices = @transform_9, window_bounds = array<i64: 8, 784>}]} {
    %c0 = arith.constant 0 : index
    %c0_0 = arith.constant 0 : index
    %0 = vector.load %arg1[%c0, %c0_0] : memref<8x128xbf16, #tpu.memory_space<vmem>>, vector<8x128xbf16>
    %c0_1 = arith.constant 0 : index
    %c0_2 = arith.constant 0 : index
    %1 = vector.load %arg2[%c0_1, %c0_2] : memref<128x256xbf16, #tpu.memory_space<vmem>>, vector<128x256xbf16>
    %cst = arith.constant dense<0.000000e+00> : vector<8x256xf32>
    %2 = tpu.matmul %0, %1, %cst {dimension_numbers = #tpu.dot_dimension_numbers<[1], [0], [0], [1], [0, 0, 1, 1], [], []>} : vector<8x128xbf16>, vector<128x256xbf16>, vector<8x256xf32> -> vector<8x256xf32>
    %c0_3 = arith.constant 0 : index
    %c0_4 = arith.constant 0 : index
    %3 = vector.load %arg3[%c0_3, %c0_4] : memref<1x256xf32, #tpu.memory_space<vmem>>, vector<1x256xf32>
    %4 = vector.broadcast %3 : vector<1x256xf32> to vector<8x256xf32>
    %5 = arith.addf %2, %4 : vector<8x256xf32>
    %cst_5 = arith.constant 0.000000e+00 : f32
    %6 = vector.broadcast %cst_5 : f32 to vector<8x256xf32>
    %7 = arith.maximumf %5, %6 : vector<8x256xf32>
    %8 = arith.truncf %7 : vector<8x256xf32> to vector<8x256xbf16>
    %c0_6 = arith.constant 0 : index
    %c0_7 = arith.constant 0 : index
    %9 = vector.load %arg4[%c0_6, %c0_7] : memref<256x512xbf16, #tpu.memory_space<vmem>>, vector<256x512xbf16>
    %cst_8 = arith.constant dense<0.000000e+00> : vector<8x512xf32>
    %10 = tpu.matmul %8, %9, %cst_8 {dimension_numbers = #tpu.dot_dimension_numbers<[1], [0], [0], [1], [0, 0, 1, 1], [], []>} : vector<8x256xbf16>, vector<256x512xbf16>, vector<8x512xf32> -> vector<8x512xf32>
    %c0_9 = arith.constant 0 : index
    %c0_10 = arith.constant 0 : index
    %11 = vector.load %arg5[%c0_9, %c0_10] : memref<1x512xf32, #tpu.memory_space<vmem>>, vector<1x512xf32>
    %12 = vector.broadcast %11 : vector<1x512xf32> to vector<8x512xf32>
    %13 = arith.addf %10, %12 : vector<8x512xf32>
    %cst_11 = arith.constant 0.000000e+00 : f32
    %14 = vector.broadcast %cst_11 : f32 to vector<8x512xf32>
    %15 = arith.maximumf %13, %14 : vector<8x512xf32>
    %16 = arith.truncf %15 : vector<8x512xf32> to vector<8x512xbf16>
    %c0_12 = arith.constant 0 : index
    %c0_13 = arith.constant 0 : index
    %17 = vector.load %arg6[%c0_12, %c0_13] : memref<512x1024xbf16, #tpu.memory_space<vmem>>, vector<512x1024xbf16>
    %cst_14 = arith.constant dense<0.000000e+00> : vector<8x1024xf32>
    %18 = tpu.matmul %16, %17, %cst_14 {dimension_numbers = #tpu.dot_dimension_numbers<[1], [0], [0], [1], [0, 0, 1, 1], [], []>} : vector<8x512xbf16>, vector<512x1024xbf16>, vector<8x1024xf32> -> vector<8x1024xf32>
    %c0_15 = arith.constant 0 : index
    %c0_16 = arith.constant 0 : index
    %19 = vector.load %arg7[%c0_15, %c0_16] : memref<1x1024xf32, #tpu.memory_space<vmem>>, vector<1x1024xf32>
    %20 = vector.broadcast %19 : vector<1x1024xf32> to vector<8x1024xf32>
    %21 = arith.addf %18, %20 : vector<8x1024xf32>
    %cst_17 = arith.constant 0.000000e+00 : f32
    %22 = vector.broadcast %cst_17 : f32 to vector<8x1024xf32>
    %23 = arith.maximumf %21, %22 : vector<8x1024xf32>
    %24 = arith.truncf %23 : vector<8x1024xf32> to vector<8x1024xbf16>
    %c0_18 = arith.constant 0 : index
    %c0_19 = arith.constant 0 : index
    %25 = vector.load %arg8[%c0_18, %c0_19] : memref<1024x784xbf16, #tpu.memory_space<vmem>>, vector<1024x784xbf16>
    %cst_20 = arith.constant dense<0.000000e+00> : vector<8x784xf32>
    %26 = tpu.matmul %24, %25, %cst_20 {dimension_numbers = #tpu.dot_dimension_numbers<[1], [0], [0], [1], [0, 0, 1, 1], [], []>} : vector<8x1024xbf16>, vector<1024x784xbf16>, vector<8x784xf32> -> vector<8x784xf32>
    %c0_21 = arith.constant 0 : index
    %c0_22 = arith.constant 0 : index
    %27 = vector.load %arg9[%c0_21, %c0_22] : memref<1x784xf32, #tpu.memory_space<vmem>>, vector<1x784xf32>
    %28 = vector.broadcast %27 : vector<1x784xf32> to vector<8x784xf32>
    %29 = arith.addf %26, %28 : vector<8x784xf32>
    %30 = math.tanh %29 : vector<8x784xf32>
    %c0_23 = arith.constant 0 : index
    %c0_24 = arith.constant 0 : index
    %31 = vector.load %arg10[%c0_23, %c0_24] : memref<8x784xf32, #tpu.memory_space<vmem>>, vector<8x784xf32>
    tpu.vector_store %arg10[%c0_23, %c0_24], %30 {strides = array<i32>} : memref<8x784xf32, #tpu.memory_space<vmem>>, vector<8x784xf32>,
    return
  }
  func.func @transform_0(%arg0: i32) -> (i32, i32) {
    %c0_i32 = arith.constant 0 : i32
    %c0_i32_0 = arith.constant 0 : i32
    return %arg0, %c0_i32 : i32, i32
  }
  func.func @transform_1(%arg0: i32) -> (i32, i32) {
    %c0_i32 = arith.constant 0 : i32
    %c0_i32_0 = arith.constant 0 : i32
    %c0_i32_1 = arith.constant 0 : i32
    return %c0_i32, %c0_i32_0 : i32, i32
  }
  func.func @transform_2(%arg0: i32) -> (i32, i32) {
    %c0_i32 = arith.constant 0 : i32
    %c0_i32_0 = arith.constant 0 : i32
    %c0_i32_1 = arith.constant 0 : i32
    return %c0_i32, %c0_i32_0 : i32, i32
  }
  func.func @transform_3(%arg0: i32) -> (i32, i32) {
    %c0_i32 = arith.constant 0 : i32
    %c0_i32_0 = arith.constant 0 : i32
    %c0_i32_1 = arith.constant 0 : i32
    return %c0_i32, %c0_i32_0 : i32, i32
  }
  func.func @transform_4(%arg0: i32) -> (i32, i32) {
    %c0_i32 = arith.constant 0 : i32
    %c0_i32_0 = arith.constant 0 : i32
    %c0_i32_1 = arith.constant 0 : i32
    return %c0_i32, %c0_i32_0 : i32, i32
  }
  func.func @transform_5(%arg0: i32) -> (i32, i32) {
    %c0_i32 = arith.constant 0 : i32
    %c0_i32_0 = arith.constant 0 : i32
    %c0_i32_1 = arith.constant 0 : i32
    return %c0_i32, %c0_i32_0 : i32, i32
  }
  func.func @transform_6(%arg0: i32) -> (i32, i32) {
    %c0_i32 = arith.constant 0 : i32
    %c0_i32_0 = arith.constant 0 : i32
    %c0_i32_1 = arith.constant 0 : i32
    return %c0_i32, %c0_i32_0 : i32, i32
  }
  func.func @transform_7(%arg0: i32) -> (i32, i32) {
    %c0_i32 = arith.constant 0 : i32
    %c0_i32_0 = arith.constant 0 : i32
    %c0_i32_1 = arith.constant 0 : i32
    return %c0_i32, %c0_i32_0 : i32, i32
  }
  func.func @transform_8(%arg0: i32) -> (i32, i32) {
    %c0_i32 = arith.constant 0 : i32
    %c0_i32_0 = arith.constant 0 : i32
    %c0_i32_1 = arith.constant 0 : i32
    return %c0_i32, %c0_i32_0 : i32, i32
  }
  func.func @transform_9(%arg0: i32) -> (i32, i32) {
    %c0_i32 = arith.constant 0 : i32
    %c0_i32_0 = arith.constant 0 : i32
    return %arg0, %c0_i32 : i32, i32
  }
}

</mosaic_0001>

<llo_original>
// kernel: tpu_custom_call.1
$region0: #{tpu_custom_call.1}
  #allocation0 [shape = 'u32[]', space=smem, size = 0x4, offset = 0x4, fixed_abs, tag = 'smem constant byte address 0x4 - core index']
  #allocation1 [shape = 'u32[144,128]{1,0:T(1,128)}', space=vmem, size = 0x12000, scoped, tag = 'internal scratch']
  %s0 = inlined_call_operand.vmem [shape: bf16[8,128], index: 0, kind: input, shape index: {}]
  %s1 = inlined_call_operand.vmem [shape: bf16[128,256], index: 1, kind: input, shape index: {}]
  %s2 = inlined_call_operand.vmem [shape: f32[1,256], index: 2, kind: input, shape index: {}]
  %s3 = inlined_call_operand.vmem [shape: bf16[256,512], index: 3, kind: input, shape index: {}]
  %s4 = inlined_call_operand.vmem [shape: f32[1,512], index: 4, kind: input, shape index: {}]
  %s5 = inlined_call_operand.vmem [shape: bf16[512,1024], index: 5, kind: input, shape index: {}]
  %s6 = inlined_call_operand.vmem [shape: f32[1,1024], index: 6, kind: input, shape index: {}]
  %s7 = inlined_call_operand.vmem [shape: bf16[1024,784], index: 7, kind: input, shape index: {}]
  %s8 = inlined_call_operand.vmem [shape: f32[1,784], index: 8, kind: input, shape index: {}]
  %s9 = inlined_call_operand.hbm [shape: f32[8,784], index: 9, kind: output, shape index: {}]
  %s10 = sld [smem:[#allocation0]]
  $region46: #{tpu_custom_call.1} parent=0
    _
  %s12 = ssub.s32 1, %s10
  %s13 = scalar_select 0, %s12, %s10
  $region1: #{tpu_custom_call.1} parent=0
    #allocation2 [shape = 'u8[28672]{0}', space=vmem, size = 0x7000, scoped, tag = 'output window, operand 0, single buffered']
    #allocation3 [shape = 's32[1]{0}', space=sflag, size = 0x4, scoped, tag = 'scoped memory for tpu_custom_call.1']
    %14 = vsyncpa [#allocation3], 0
    // Predicated region
    $region2: #{tpu_custom_call.1} parent=1 // pred_check
      _
    $region3: #{tpu_custom_call.1} parent=1 // pred_check_branch
      %16 = sbr.rel (0) target = $region5
    $region4: #{tpu_custom_call.1} parent=1 // pred_region
      _
    $region5: #{tpu_custom_call.1} parent=1 // pred_fallthru
      _
    // Predicated region
    $region6: #{tpu_custom_call.1} parent=1 // pred_check
      _
    $region7: #{tpu_custom_call.1} parent=1 // pred_check_branch
      %18 = sbr.rel (0) target = $region9
    $region8: #{tpu_custom_call.1} parent=1 // pred_region
      _
    $region9: #{tpu_custom_call.1} parent=1 // pred_fallthru
      _
    // Predicated region
    $region10: #{tpu_custom_call.1} parent=1 // pred_check
      _
    $region11: #{tpu_custom_call.1} parent=1 // pred_check_branch
      %20 = sbr.rel (0) target = $region13
    $region12: #{tpu_custom_call.1} parent=1 // pred_region
      _
    $region13: #{tpu_custom_call.1} parent=1 // pred_fallthru
      _
    // Predicated region
    $region14: #{tpu_custom_call.1} parent=1 // pred_check
      _
    $region15: #{tpu_custom_call.1} parent=1 // pred_check_branch
      %22 = sbr.rel (0) target = $region17
    $region16: #{tpu_custom_call.1} parent=1 // pred_region
      _
    $region17: #{tpu_custom_call.1} parent=1 // pred_fallthru
      _
    // Predicated region
    $region18: #{tpu_custom_call.1} parent=1 // pred_check
      _
    $region19: #{tpu_custom_call.1} parent=1 // pred_check_branch
      %24 = sbr.rel (0) target = $region21
    $region20: #{tpu_custom_call.1} parent=1 // pred_region
      _
    $region21: #{tpu_custom_call.1} parent=1 // pred_fallthru
      _
    // Predicated region
    $region22: #{tpu_custom_call.1} parent=1 // pred_check
      _
    $region23: #{tpu_custom_call.1} parent=1 // pred_check_branch
      %26 = sbr.rel (0) target = $region25
    $region24: #{tpu_custom_call.1} parent=1 // pred_region
      _
    $region25: #{tpu_custom_call.1} parent=1 // pred_fallthru
      _
    // Predicated region
    $region26: #{tpu_custom_call.1} parent=1 // pred_check
      _
    $region27: #{tpu_custom_call.1} parent=1 // pred_check_branch
      %28 = sbr.rel (0) target = $region29
    $region28: #{tpu_custom_call.1} parent=1 // pred_region
      _
    $region29: #{tpu_custom_call.1} parent=1 // pred_fallthru
      _
    // Predicated region
    $region30: #{tpu_custom_call.1} parent=1 // pred_check
      _
    $region31: #{tpu_custom_call.1} parent=1 // pred_check_branch
      %30 = sbr.rel (0) target = $region33
    $region32: #{tpu_custom_call.1} parent=1 // pred_region
      _
    $region33: #{tpu_custom_call.1} parent=1 // pred_fallthru
      _
    // Predicated region
    $region34: #{tpu_custom_call.1} parent=1 // pred_check
      _
    $region35: #{tpu_custom_call.1} parent=1 // pred_check_branch
      %32 = sbr.rel (0) target = $region37
    $region36: #{tpu_custom_call.1} parent=1 // pred_region
      _
    $region37: #{tpu_custom_call.1} parent=1 // pred_fallthru
      _
    %v34 = vld [vmem:[%s0] sm:$0xf]
    %v35 = vld [vmem:[%s1] sm:$0xff]
    %v36 = vld [vmem:[%s1 + $0x8] sm:$0xff]
    %v37 = vld [vmem:[%s1 + $0x10] sm:$0xff]
    %v38 = vld [vmem:[%s1 + $0x18] sm:$0xff]
    %v39 = vld [vmem:[%s1 + $0x20] sm:$0xff]
    %v40 = vld [vmem:[%s1 + $0x28] sm:$0xff]
    %v41 = vld [vmem:[%s1 + $0x30] sm:$0xff]
    %v42 = vld [vmem:[%s1 + $0x38] sm:$0xff]
    %v43 = vld [vmem:[%s1 + $0x40] sm:$0xff]
    %v44 = vld [vmem:[%s1 + $0x48] sm:$0xff]
    %v45 = vld [vmem:[%s1 + $0x50] sm:$0xff]
    %v46 = vld [vmem:[%s1 + $0x58] sm:$0xff]
    %v47 = vld [vmem:[%s1 + $0x60] sm:$0xff]
    %v48 = vld [vmem:[%s1 + $0x68] sm:$0xff]
    %v49 = vld [vmem:[%s1 + $0x70] sm:$0xff]
    %v50 = vld [vmem:[%s1 + $0x78] sm:$0xff]
    %v51 = vld [vmem:[%s2] sm:$0x3]
    %v53 = vlaneseq
    %v54 = vshrl.u32 %v53, 7
    %v55 = vsub.s32 0, %v54
    %v56 = vrot.slane %v51, %v55
    %v57 = vlaneseq
    %v58 = vshrl.u32 %v57, 7
    %v59 = vsub.s32 1, %v58
    %v60 = vrot.slane %v51, %v59
    %v79 = vunpack.c.l.b16 %v35
    %v80 = vunpack.c.h.b16 %v35
    %v81 = vunpack.c.l.b16 %v36
    %v82 = vunpack.c.h.b16 %v36
    %v83 = vunpack.c.l.b16 %v37
    %v84 = vunpack.c.h.b16 %v37
    %v85 = vunpack.c.l.b16 %v38
    %v86 = vunpack.c.h.b16 %v38
    %v87 = vunpack.c.l.b16 %v39
    %v88 = vunpack.c.h.b16 %v39
    %v89 = vunpack.c.l.b16 %v40
    %v90 = vunpack.c.h.b16 %v40
    %v91 = vunpack.c.l.b16 %v41
    %v92 = vunpack.c.h.b16 %v41
    %v93 = vunpack.c.l.b16 %v42
    %v94 = vunpack.c.h.b16 %v42
    %v95 = vunpack.c.l.b16 %v43
    %v96 = vunpack.c.h.b16 %v43
    %v97 = vunpack.c.l.b16 %v44
    %v98 = vunpack.c.h.b16 %v44
    %v99 = vunpack.c.l.b16 %v45
    %v100 = vunpack.c.h.b16 %v45
    %v101 = vunpack.c.l.b16 %v46
    %v102 = vunpack.c.h.b16 %v46
    %v103 = vunpack.c.l.b16 %v47
    %v104 = vunpack.c.h.b16 %v47
    %v105 = vunpack.c.l.b16 %v48
    %v106 = vunpack.c.h.b16 %v48
    %v107 = vunpack.c.l.b16 %v49
    %v108 = vunpack.c.h.b16 %v49
    %v109 = vunpack.c.l.b16 %v50
    %v110 = vunpack.c.h.b16 %v50
    %v111 = vpack.c.b16 %v81, %v79
    %v112 = vpack.c.b16 %v82, %v80
    %v113 = vpack.c.b16 %v85, %v83
    %v114 = vpack.c.b16 %v86, %v84
    %v115 = vpack.c.b16 %v89, %v87
    %v116 = vpack.c.b16 %v90, %v88
    %v117 = vpack.c.b16 %v93, %v91
    %v118 = vpack.c.b16 %v94, %v92
    %v119 = vpack.c.b16 %v97, %v95
    %v120 = vpack.c.b16 %v98, %v96
    %v121 = vpack.c.b16 %v101, %v99
    %v122 = vpack.c.b16 %v102, %v100
    %v123 = vpack.c.b16 %v105, %v103
    %v124 = vpack.c.b16 %v106, %v104
    %v125 = vpack.c.b16 %v109, %v107
    %v126 = vpack.c.b16 %v110, %v108
    %143 = vmatprep.subr.bf16.mxu0 %v112
    %144 = vmatpush1.bf16.msra.mxu0 %v111
    %145 = vmatprep.subr.bf16.mxu0 %v114
    %146 = vmatpush1.bf16.msra.mxu0 %v113
    %147 = vmatprep.subr.bf16.mxu0 %v116
    %148 = vmatpush1.bf16.msra.mxu0 %v115
    %149 = vmatprep.subr.bf16.mxu0 %v118
    %150 = vmatpush1.bf16.msra.mxu0 %v117
    %151 = vmatprep.subr.bf16.mxu0 %v120
    %152 = vmatpush1.bf16.msra.mxu0 %v119
    %153 = vmatprep.subr.bf16.mxu0 %v122
    %154 = vmatpush1.bf16.msra.mxu0 %v121
    %155 = vmatprep.subr.bf16.mxu0 %v124
    %156 = vmatpush1.bf16.msra.mxu0 %v123
    %157 = vmatprep.subr.bf16.mxu0 %v126
    %158 = vmatpush1.bf16.msra.mxu0 %v125
    %159 = vmatprep.subr.bf16.mxu0 0
    %160 = vmatpush1.bf16.msra.mxu0 0
    %161 = vmatprep.subr.bf16.mxu0 0
    %162 = vmatpush1.bf16.msra.mxu0 0
    %163 = vmatprep.subr.bf16.mxu0 0
    %164 = vmatpush1.bf16.msra.mxu0 0
    %165 = vmatprep.subr.bf16.mxu0 0
    %166 = vmatpush1.bf16.msra.mxu0 0
    %167 = vmatprep.subr.bf16.mxu0 0
    %168 = vmatpush1.bf16.msra.mxu0 0
    %169 = vmatprep.subr.bf16.mxu0 0
    %170 = vmatpush1.bf16.msra.mxu0 0
    %171 = vmatprep.subr.bf16.mxu0 0
    %172 = vmatpush1.bf16.msra.mxu0 0
    %173 = vmatprep.subr.bf16.mxu0 0
    %174 = vmatpush1.bf16.msra.mxu0 0
    %175 = vmatprep.mubr.bf16.mxu0 0
    %176 = vmatmul.mubr.bf16.gmra.mrb[0].mxu0 %v34
    %v177 = vpop.f32.mrb[0].mxu0
    %v178 = vadd.f32 %v56, %v177
    %v179 = vpop.f32.mrb[0].mxu0
    %v180 = vadd.f32 %v60, %v179
    %v181 = vpop.f32.mrb[0].mxu0
    %v182 = vpop.f32.mrb[0].mxu0
    %183 = vdwg.mxu0
    %v184 = vmax.f32 %v178, 0.0
    %v185 = vmax.f32 %v180, 0.0
    %v186 = vpack.c.bf16 %v184, %v184
    %v187 = vpack.c.bf16 %v185, %v185
    %v188 = vld [vmem:[%s3] sm:$0xff]
    %v189 = vld [vmem:[%s3 + $0x8] sm:$0xff]
    %v190 = vld [vmem:[%s3 + $0x10] sm:$0xff]
    %v191 = vld [vmem:[%s3 + $0x18] sm:$0xff]
    %v192 = vld [vmem:[%s3 + $0x20] sm:$0xff]
    %v193 = vld [vmem:[%s3 + $0x28] sm:$0xff]
    %v194 = vld [vmem:[%s3 + $0x30] sm:$0xff]
    %v195 = vld [vmem:[%s3 + $0x38] sm:$0xff]
    %v196 = vld [vmem:[%s3 + $0x40] sm:$0xff]
    %v197 = vld [vmem:[%s3 + $0x48] sm:$0xff]
    %v198 = vld [vmem:[%s3 + $0x50] sm:$0xff]
    %v199 = vld [vmem:[%s3 + $0x58] sm:$0xff]
    %v200 = vld [vmem:[%s3 + $0x60] sm:$0xff]
    %v201 = vld [vmem:[%s3 + $0x68] sm:$0xff]
    %v202 = vld [vmem:[%s3 + $0x70] sm:$0xff]
    %v203 = vld [vmem:[%s3 + $0x78] sm:$0xff]
    %v204 = vld [vmem:[%s3 + $0x80] sm:$0xff]
    %v205 = vld [vmem:[%s3 + $0x88] sm:$0xff]
    %v206 = vld [vmem:[%s3 + $0x90] sm:$0xff]
    %v207 = vld [vmem:[%s3 + $0x98] sm:$0xff]
    %v208 = vld [vmem:[%s3 + $0xa0] sm:$0xff]
    %v209 = vld [vmem:[%s3 + $0xa8] sm:$0xff]
    %v210 = vld [vmem:[%s3 + $0xb0] sm:$0xff]
    %v211 = vld [vmem:[%s3 + $0xb8] sm:$0xff]
    %v212 = vld [vmem:[%s3 + $0xc0] sm:$0xff]
    %v213 = vld [vmem:[%s3 + $0xc8] sm:$0xff]
    %v214 = vld [vmem:[%s3 + $0xd0] sm:$0xff]
    %v215 = vld [vmem:[%s3 + $0xd8] sm:$0xff]
    %v216 = vld [vmem:[%s3 + $0xe0] sm:$0xff]
    %v217 = vld [vmem:[%s3 + $0xe8] sm:$0xff]
    %v218 = vld [vmem:[%s3 + $0xf0] sm:$0xff]
    %v219 = vld [vmem:[%s3 + $0xf8] sm:$0xff]
    %v220 = vld [vmem:[%s3 + $0x100] sm:$0xff]
    %v221 = vld [vmem:[%s3 + $0x108] sm:$0xff]
    %v222 = vld [vmem:[%s3 + $0x110] sm:$0xff]
    %v223 = vld [vmem:[%s3 + $0x118] sm:$0xff]
    %v224 = vld [vmem:[%s3 + $0x120] sm:$0xff]
    %v225 = vld [vmem:[%s3 + $0x128] sm:$0xff]
    %v226 = vld [vmem:[%s3 + $0x130] sm:$0xff]
    %v227 = vld [vmem:[%s3 + $0x138] sm:$0xff]
    %v228 = vld [vmem:[%s3 + $0x140] sm:$0xff]
    %v229 = vld [vmem:[%s3 + $0x148] sm:$0xff]
    %v230 = vld [vmem:[%s3 + $0x150] sm:$0xff]
    %v231 = vld [vmem:[%s3 + $0x158] sm:$0xff]
    %v232 = vld [vmem:[%s3 + $0x160] sm:$0xff]
    %v233 = vld [vmem:[%s3 + $0x168] sm:$0xff]
    %v234 = vld [vmem:[%s3 + $0x170] sm:$0xff]
    %v235 = vld [vmem:[%s3 + $0x178] sm:$0xff]
    %v236 = vld [vmem:[%s3 + $0x180] sm:$0xff]
    %v237 = vld [vmem:[%s3 + $0x188] sm:$0xff]
    %v238 = vld [vmem:[%s3 + $0x190] sm:$0xff]
    %v239 = vld [vmem:[%s3 + $0x198] sm:$0xff]
    %v240 = vld [vmem:[%s3 + $0x1a0] sm:$0xff]
    %v241 = vld [vmem:[%s3 + $0x1a8] sm:$0xff]
    %v242 = vld [vmem:[%s3 + $0x1b0] sm:$0xff]
    %v243 = vld [vmem:[%s3 + $0x1b8] sm:$0xff]
    %v244 = vld [vmem:[%s3 + $0x1c0] sm:$0xff]
    %v245 = vld [vmem:[%s3 + $0x1c8] sm:$0xff]
    %v246 = vld [vmem:[%s3 + $0x1d0] sm:$0xff]
    %v247 = vld [vmem:[%s3 + $0x1d8] sm:$0xff]
    %v248 = vld [vmem:[%s3 + $0x1e0] sm:$0xff]
    %v249 = vld [vmem:[%s3 + $0x1e8] sm:$0xff]
    %v250 = vld [vmem:[%s3 + $0x1f0] sm:$0xff]
    %v251 = vld [vmem:[%s3 + $0x1f8] sm:$0xff]
    %v252 = vld [vmem:[%s4] sm:$0xf]
    %v254 = vlaneseq
    %v255 = vshrl.u32 %v254, 7
    %v256 = vsub.s32 0, %v255
    %v257 = vrot.slane %v252, %v256
    %v258 = vlaneseq
    %v259 = vshrl.u32 %v258, 7
    %v260 = vsub.s32 1, %v259
    %v261 = vrot.slane %v252, %v260
    %v262 = vlaneseq
    %v263 = vshrl.u32 %v262, 7
    %v264 = vsub.s32 2, %v263
    %v265 = vrot.slane %v252, %v264
    %v266 = vlaneseq
    %v267 = vshrl.u32 %v266, 7
    %v268 = vsub.s32 3, %v267
    %v269 = vrot.slane %v252, %v268
    %v338 = vunpack.c.l.b16 %v188
    %v339 = vunpack.c.h.b16 %v188
    %v340 = vunpack.c.l.b16 %v189
    %v341 = vunpack.c.h.b16 %v189
    %v342 = vunpack.c.l.b16 %v190
    %v343 = vunpack.c.h.b16 %v190
    %v344 = vunpack.c.l.b16 %v191
    %v345 = vunpack.c.h.b16 %v191
    %v346 = vunpack.c.l.b16 %v192
    %v347 = vunpack.c.h.b16 %v192
    %v348 = vunpack.c.l.b16 %v193
    %v349 = vunpack.c.h.b16 %v193
    %v350 = vunpack.c.l.b16 %v194
    %v351 = vunpack.c.h.b16 %v194
    %v352 = vunpack.c.l.b16 %v195
    %v353 = vunpack.c.h.b16 %v195
    %v354 = vunpack.c.l.b16 %v196
    %v355 = vunpack.c.h.b16 %v196
    %v356 = vunpack.c.l.b16 %v197
    %v357 = vunpack.c.h.b16 %v197
    %v358 = vunpack.c.l.b16 %v198
    %v359 = vunpack.c.h.b16 %v198
    %v360 = vunpack.c.l.b16 %v199
    %v361 = vunpack.c.h.b16 %v199
    %v362 = vunpack.c.l.b16 %v200
    %v363 = vunpack.c.h.b16 %v200
    %v364 = vunpack.c.l.b16 %v201
    %v365 = vunpack.c.h.b16 %v201
    %v366 = vunpack.c.l.b16 %v202
    %v367 = vunpack.c.h.b16 %v202
    %v368 = vunpack.c.l.b16 %v203
    %v369 = vunpack.c.h.b16 %v203
    %v370 = vunpack.c.l.b16 %v204
    %v371 = vunpack.c.h.b16 %v204
    %v372 = vunpack.c.l.b16 %v205
    %v373 = vunpack.c.h.b16 %v205
    %v374 = vunpack.c.l.b16 %v206
    %v375 = vunpack.c.h.b16 %v206
    %v376 = vunpack.c.l.b16 %v207
    %v377 = vunpack.c.h.b16 %v207
    %v378 = vunpack.c.l.b16 %v208
    %v379 = vunpack.c.h.b16 %v208
    %v380 = vunpack.c.l.b16 %v209
    %v381 = vunpack.c.h.b16 %v209
    %v382 = vunpack.c.l.b16 %v210
    %v383 = vunpack.c.h.b16 %v210
    %v384 = vunpack.c.l.b16 %v211
    %v385 = vunpack.c.h.b16 %v211
    %v386 = vunpack.c.l.b16 %v212
    %v387 = vunpack.c.h.b16 %v212
    %v388 = vunpack.c.l.b16 %v213
    %v389 = vunpack.c.h.b16 %v213
    %v390 = vunpack.c.l.b16 %v214
    %v391 = vunpack.c.h.b16 %v214
    %v392 = vunpack.c.l.b16 %v215
    %v393 = vunpack.c.h.b16 %v215
    %v394 = vunpack.c.l.b16 %v216
    %v395 = vunpack.c.h.b16 %v216
    %v396 = vunpack.c.l.b16 %v217
    %v397 = vunpack.c.h.b16 %v217
    %v398 = vunpack.c.l.b16 %v218
    %v399 = vunpack.c.h.b16 %v218
    %v400 = vunpack.c.l.b16 %v219
    %v401 = vunpack.c.h.b16 %v219
    %v402 = vunpack.c.l.b16 %v220
    %v403 = vunpack.c.h.b16 %v220
    %v404 = vunpack.c.l.b16 %v221
    %v405 = vunpack.c.h.b16 %v221
    %v406 = vunpack.c.l.b16 %v222
    %v407 = vunpack.c.h.b16 %v222
    %v408 = vunpack.c.l.b16 %v223
    %v409 = vunpack.c.h.b16 %v223
    %v410 = vunpack.c.l.b16 %v224
    %v411 = vunpack.c.h.b16 %v224
    %v412 = vunpack.c.l.b16 %v225
    %v413 = vunpack.c.h.b16 %v225
    %v414 = vunpack.c.l.b16 %v226
    %v415 = vunpack.c.h.b16 %v226
    %v416 = vunpack.c.l.b16 %v227
    %v417 = vunpack.c.h.b16 %v227
    %v418 = vunpack.c.l.b16 %v228
    %v419 = vunpack.c.h.b16 %v228
    %v420 = vunpack.c.l.b16 %v229
    %v421 = vunpack.c.h.b16 %v229
    %v422 = vunpack.c.l.b16 %v230
    %v423 = vunpack.c.h.b16 %v230
    %v424 = vunpack.c.l.b16 %v231
    %v425 = vunpack.c.h.b16 %v231
    %v426 = vunpack.c.l.b16 %v232
    %v427 = vunpack.c.h.b16 %v232
    %v428 = vunpack.c.l.b16 %v233
    %v429 = vunpack.c.h.b16 %v233
    %v430 = vunpack.c.l.b16 %v234
    %v431 = vunpack.c.h.b16 %v234
    %v432 = vunpack.c.l.b16 %v235
    %v433 = vunpack.c.h.b16 %v235
    %v434 = vunpack.c.l.b16 %v236
    %v435 = vunpack.c.h.b16 %v236
    %v436 = vunpack.c.l.b16 %v237
    %v437 = vunpack.c.h.b16 %v237
    %v438 = vunpack.c.l.b16 %v238
    %v439 = vunpack.c.h.b16 %v238
    %v440 = vunpack.c.l.b16 %v239
    %v441 = vunpack.c.h.b16 %v239
    %v442 = vunpack.c.l.b16 %v240
    %v443 = vunpack.c.h.b16 %v240
    %v444 = vunpack.c.l.b16 %v241
    %v445 = vunpack.c.h.b16 %v241
    %v446 = vunpack.c.l.b16 %v242
    %v447 = vunpack.c.h.b16 %v242
    %v448 = vunpack.c.l.b16 %v243
    %v449 = vunpack.c.h.b16 %v243
    %v450 = vunpack.c.l.b16 %v244
    %v451 = vunpack.c.h.b16 %v244
    %v452 = vunpack.c.l.b16 %v245
    %v453 = vunpack.c.h.b16 %v245
    %v454 = vunpack.c.l.b16 %v246
    %v455 = vunpack.c.h.b16 %v246
    %v456 = vunpack.c.l.b16 %v247
    %v457 = vunpack.c.h.b16 %v247
    %v458 = vunpack.c.l.b16 %v248
    %v459 = vunpack.c.h.b16 %v248
    %v460 = vunpack.c.l.b16 %v249
    %v461 = vunpack.c.h.b16 %v249
    %v462 = vunpack.c.l.b16 %v250
    %v463 = vunpack.c.h.b16 %v250
    %v464 = vunpack.c.l.b16 %v251
    %v465 = vunpack.c.h.b16 %v251
    %v466 = vpack.c.b16 %v342, %v338
    %v467 = vpack.c.b16 %v343, %v339
    %v468 = vpack.c.b16 %v344, %v340
    %v469 = vpack.c.b16 %v345, %v341
    %v470 = vpack.c.b16 %v350, %v346
    %v471 = vpack.c.b16 %v351, %v347
    %v472 = vpack.c.b16 %v352, %v348
    %v473 = vpack.c.b16 %v353, %v349
    %v474 = vpack.c.b16 %v358, %v354
    %v475 = vpack.c.b16 %v359, %v355
    %v476 = vpack.c.b16 %v360, %v356
    %v477 = vpack.c.b16 %v361, %v357
    %v478 = vpack.c.b16 %v366, %v362
    %v479 = vpack.c.b16 %v367, %v363
    %v480 = vpack.c.b16 %v368, %v364
    %v481 = vpack.c.b16 %v369, %v365
    %v482 = vpack.c.b16 %v374, %v370
    %v483 = vpack.c.b16 %v375, %v371
    %v484 = vpack.c.b16 %v376, %v372
    %v485 = vpack.c.b16 %v377, %v373
    %v486 = vpack.c.b16 %v382, %v378
    %v487 = vpack.c.b16 %v383, %v379
    %v488 = vpack.c.b16 %v384, %v380
    %v489 = vpack.c.b16 %v385, %v381
    %v490 = vpack.c.b16 %v390, %v386
    %v491 = vpack.c.b16 %v391, %v387
    %v492 = vpack.c.b16 %v392, %v388
    %v493 = vpack.c.b16 %v393, %v389
    %v494 = vpack.c.b16 %v398, %v394
    %v495 = vpack.c.b16 %v399, %v395
    %v496 = vpack.c.b16 %v400, %v396
    %v497 = vpack.c.b16 %v401, %v397
    %v498 = vpack.c.b16 %v406, %v402
    %v499 = vpack.c.b16 %v407, %v403
    %v500 = vpack.c.b16 %v408, %v404
    %v501 = vpack.c.b16 %v409, %v405
    %v502 = vpack.c.b16 %v414, %v410
    %v503 = vpack.c.b16 %v415, %v411
    %v504 = vpack.c.b16 %v416, %v412
    %v505 = vpack.c.b16 %v417, %v413
    %v506 = vpack.c.b16 %v422, %v418
    %v507 = vpack.c.b16 %v423, %v419
    %v508 = vpack.c.b16 %v424, %v420
    %v509 = vpack.c.b16 %v425, %v421
    %v510 = vpack.c.b16 %v430, %v426
    %v511 = vpack.c.b16 %v431, %v427
    %v512 = vpack.c.b16 %v432, %v428
    %v513 = vpack.c.b16 %v433, %v429
    %v514 = vpack.c.b16 %v438, %v434
    %v515 = vpack.c.b16 %v439, %v435
    %v516 = vpack.c.b16 %v440, %v436
    %v517 = vpack.c.b16 %v441, %v437
    %v518 = vpack.c.b16 %v446, %v442
    %v519 = vpack.c.b16 %v447, %v443
    %v520 = vpack.c.b16 %v448, %v444
    %v521 = vpack.c.b16 %v449, %v445
    %v522 = vpack.c.b16 %v454, %v450
    %v523 = vpack.c.b16 %v455, %v451
    %v524 = vpack.c.b16 %v456, %v452
    %v525 = vpack.c.b16 %v457, %v453
    %v526 = vpack.c.b16 %v462, %v458
    %v527 = vpack.c.b16 %v463, %v459
    %v528 = vpack.c.b16 %v464, %v460
    %v529 = vpack.c.b16 %v465, %v461
    %594 = vmatprep.subr.bf16.mxu0 %v467
    %595 = vmatpush1.bf16.msra.mxu0 %v466
    %596 = vmatprep.subr.bf16.mxu0 %v471
    %597 = vmatpush1.bf16.msra.mxu0 %v470
    %598 = vmatprep.subr.bf16.mxu0 %v475
    %599 = vmatpush1.bf16.msra.mxu0 %v474
    %600 = vmatprep.subr.bf16.mxu0 %v479
    %601 = vmatpush1.bf16.msra.mxu0 %v478
    %602 = vmatprep.subr.bf16.mxu0 %v483
    %603 = vmatpush1.bf16.msra.mxu0 %v482
    %604 = vmatprep.subr.bf16.mxu0 %v487
    %605 = vmatpush1.bf16.msra.mxu0 %v486
    %606 = vmatprep.subr.bf16.mxu0 %v491
    %607 = vmatpush1.bf16.msra.mxu0 %v490
    %608 = vmatprep.subr.bf16.mxu0 %v495
    %609 = vmatpush1.bf16.msra.mxu0 %v494
    %610 = vmatprep.subr.bf16.mxu0 %v499
    %611 = vmatpush1.bf16.msra.mxu0 %v498
    %612 = vmatprep.subr.bf16.mxu0 %v503
    %613 = vmatpush1.bf16.msra.mxu0 %v502
    %614 = vmatprep.subr.bf16.mxu0 %v507
    %615 = vmatpush1.bf16.msra.mxu0 %v506
    %616 = vmatprep.subr.bf16.mxu0 %v511
    %617 = vmatpush1.bf16.msra.mxu0 %v510
    %618 = vmatprep.subr.bf16.mxu0 %v515
    %619 = vmatpush1.bf16.msra.mxu0 %v514
    %620 = vmatprep.subr.bf16.mxu0 %v519
    %621 = vmatpush1.bf16.msra.mxu0 %v518
    %622 = vmatprep.subr.bf16.mxu0 %v523
    %623 = vmatpush1.bf16.msra.mxu0 %v522
    %624 = vmatprep.subr.bf16.mxu0 %v527
    %625 = vmatpush1.bf16.msra.mxu0 %v526
    %626 = vmatprep.mubr.bf16.mxu0 %v187
    %627 = vmatmul.mubr.bf16.gmra.mrb[0].mxu0 %v186
    %v628 = vpop.f32.mrb[0].mxu0
    %v629 = vadd.f32 %v257, %v628
    %v630 = vpop.f32.mrb[0].mxu0
    %v631 = vadd.f32 %v261, %v630
    %v632 = vpop.f32.mrb[0].mxu0
    %v633 = vpop.f32.mrb[0].mxu0
    %634 = vdwg.mxu0
    %635 = vmatprep.subr.bf16.mxu0 %v469
    %636 = vmatpush1.bf16.msra.mxu0 %v468
    %637 = vmatprep.subr.bf16.mxu0 %v473
    %638 = vmatpush1.bf16.msra.mxu0 %v472
    %639 = vmatprep.subr.bf16.mxu0 %v477
    %640 = vmatpush1.bf16.msra.mxu0 %v476
    %641 = vmatprep.subr.bf16.mxu0 %v481
    %642 = vmatpush1.bf16.msra.mxu0 %v480
    %643 = vmatprep.subr.bf16.mxu0 %v485
    %644 = vmatpush1.bf16.msra.mxu0 %v484
    %645 = vmatprep.subr.bf16.mxu0 %v489
    %646 = vmatpush1.bf16.msra.mxu0 %v488
    %647 = vmatprep.subr.bf16.mxu0 %v493
    %648 = vmatpush1.bf16.msra.mxu0 %v492
    %649 = vmatprep.subr.bf16.mxu0 %v497
    %650 = vmatpush1.bf16.msra.mxu0 %v496
    %651 = vmatprep.subr.bf16.mxu0 %v501
    %652 = vmatpush1.bf16.msra.mxu0 %v500
    %653 = vmatprep.subr.bf16.mxu0 %v505
    %654 = vmatpush1.bf16.msra.mxu0 %v504
    %655 = vmatprep.subr.bf16.mxu0 %v509
    %656 = vmatpush1.bf16.msra.mxu0 %v508
    %657 = vmatprep.subr.bf16.mxu0 %v513
    %658 = vmatpush1.bf16.msra.mxu0 %v512
    %659 = vmatprep.subr.bf16.mxu0 %v517
    %660 = vmatpush1.bf16.msra.mxu0 %v516
    %661 = vmatprep.subr.bf16.mxu0 %v521
    %662 = vmatpush1.bf16.msra.mxu0 %v520
    %663 = vmatprep.subr.bf16.mxu0 %v525
    %664 = vmatpush1.bf16.msra.mxu0 %v524
    %665 = vmatprep.subr.bf16.mxu0 %v529
    %666 = vmatpush1.bf16.msra.mxu0 %v528
    %667 = vmatprep.mubr.bf16.mxu0 %v187
    %668 = vmatmul.mubr.bf16.gmra.mrb[0].mxu0 %v186
    %v669 = vpop.f32.mrb[0].mxu0
    %v670 = vadd.f32 %v265, %v669
    %v671 = vpop.f32.mrb[0].mxu0
    %v672 = vadd.f32 %v269, %v671
    %v673 = vpop.f32.mrb[0].mxu0
    %v674 = vpop.f32.mrb[0].mxu0
    %675 = vdwg.mxu0
    %v676 = vmax.f32 %v629, 0.0
    %v677 = vmax.f32 %v631, 0.0
    %v678 = vmax.f32 %v670, 0.0
    %v679 = vmax.f32 %v672, 0.0
    %v680 = vpack.c.bf16 %v676, %v676
    %v681 = vpack.c.bf16 %v677, %v677
    %v682 = vpack.c.bf16 %v678, %v678
    %v683 = vpack.c.bf16 %v679, %v679
    %v684 = vld [vmem:[%s5] sm:$0xff]
    %v685 = vld [vmem:[%s5 + $0x8] sm:$0xff]
    %v686 = vld [vmem:[%s5 + $0x10] sm:$0xff]
    %v687 = vld [vmem:[%s5 + $0x18] sm:$0xff]
    %v688 = vld [vmem:[%s5 + $0x20] sm:$0xff]
    %v689 = vld [vmem:[%s5 + $0x28] sm:$0xff]
    %v690 = vld [vmem:[%s5 + $0x30] sm:$0xff]
    %v691 = vld [vmem:[%s5 + $0x38] sm:$0xff]
    %v692 = vld [vmem:[%s5 + $0x40] sm:$0xff]
    %v693 = vld [vmem:[%s5 + $0x48] sm:$0xff]
    %v694 = vld [vmem:[%s5 + $0x50] sm:$0xff]
    %v695 = vld [vmem:[%s5 + $0x58] sm:$0xff]
    %v696 = vld [vmem:[%s5 + $0x60] sm:$0xff]
    %v697 = vld [vmem:[%s5 + $0x68] sm:$0xff]
    %v698 = vld [vmem:[%s5 + $0x70] sm:$0xff]
    %v699 = vld [vmem:[%s5 + $0x78] sm:$0xff]
    %v700 = vld [vmem:[%s5 + $0x80] sm:$0xff]
    %v701 = vld [vmem:[%s5 + $0x88] sm:$0xff]
    %v702 = vld [vmem:[%s5 + $0x90] sm:$0xff]
    %v703 = vld [vmem:[%s5 + $0x98] sm:$0xff]
    %v704 = vld [vmem:[%s5 + $0xa0] sm:$0xff]
    %v705 = vld [vmem:[%s5 + $0xa8] sm:$0xff]
    %v706 = vld [vmem:[%s5 + $0xb0] sm:$0xff]
    %v707 = vld [vmem:[%s5 + $0xb8] sm:$0xff]
    %v708 = vld [vmem:[%s5 + $0xc0] sm:$0xff]
    %v709 = vld [vmem:[%s5 + $0xc8] sm:$0xff]
    %v710 = vld [vmem:[%s5 + $0xd0] sm:$0xff]
    %v711 = vld [vmem:[%s5 + $0xd8] sm:$0xff]
    %v712 = vld [vmem:[%s5 + $0xe0] sm:$0xff]
    %v713 = vld [vmem:[%s5 + $0xe8] sm:$0xff]
    %v714 = vld [vmem:[%s5 + $0xf0] sm:$0xff]
    %v715 = vld [vmem:[%s5 + $0xf8] sm:$0xff]
    %v716 = vld [vmem:[%s5 + $0x100] sm:$0xff]
    %v717 = vld [vmem:[%s5 + $0x108] sm:$0xff]
    %v718 = vld [vmem:[%s5 + $0x110] sm:$0xff]
    %v719 = vld [vmem:[%s5 + $0x118] sm:$0xff]
    %v720 = vld [vmem:[%s5 + $0x120] sm:$0xff]
    %v721 = vld [vmem:[%s5 + $0x128] sm:$0xff]
    %v722 = vld [vmem:[%s5 + $0x130] sm:$0xff]
    %v723 = vld [vmem:[%s5 + $0x138] sm:$0xff]
    %v724 = vld [vmem:[%s5 + $0x140] sm:$0xff]
    %v725 = vld [vmem:[%s5 + $0x148] sm:$0xff]
    %v726 = vld [vmem:[%s5 + $0x150] sm:$0xff]
    %v727 = vld [vmem:[%s5 + $0x158] sm:$0xff]
    %v728 = vld [vmem:[%s5 + $0x160] sm:$0xff]
    %v729 = vld [vmem:[%s5 + $0x168] sm:$0xff]
    %v730 = vld [vmem:[%s5 + $0x170] sm:$0xff]
    %v731 = vld [vmem:[%s5 + $0x178] sm:$0xff]
    %v732 = vld [vmem:[%s5 + $0x180] sm:$0xff]
    %v733 = vld [vmem:[%s5 + $0x188] sm:$0xff]
    %v734 = vld [vmem:[%s5 + $0x190] sm:$0xff]
    %v735 = vld [vmem:[%s5 + $0x198] sm:$0xff]
    %v736 = vld [vmem:[%s5 + $0x1a0] sm:$0xff]
    %v737 = vld [vmem:[%s5 + $0x1a8] sm:$0xff]
    %v738 = vld [vmem:[%s5 + $0x1b0] sm:$0xff]
    %v739 = vld [vmem:[%s5 + $0x1b8] sm:$0xff]
    %v740 = vld [vmem:[%s5 + $0x1c0] sm:$0xff]
    %v741 = vld [vmem:[%s5 + $0x1c8] sm:$0xff]
    %v742 = vld [vmem:[%s5 + $0x1d0] sm:$0xff]
    %v743 = vld [vmem:[%s5 + $0x1d8] sm:$0xff]
    %v744 = vld [vmem:[%s5 + $0x1e0] sm:$0xff]
    %v745 = vld [vmem:[%s5 + $0x1e8] sm:$0xff]
    %v746 = vld [vmem:[%s5 + $0x1f0] sm:$0xff]
    %v747 = vld [vmem:[%s5 + $0x1f8] sm:$0xff]
    %v748 = vld [vmem:[%s5 + $0x200] sm:$0xff]
    %v749 = vld [vmem:[%s5 + $0x208] sm:$0xff]
    %v750 = vld [vmem:[%s5 + $0x210] sm:$0xff]
    %v751 = vld [vmem:[%s5 + $0x218] sm:$0xff]
    %v752 = vld [vmem:[%s5 + $0x220] sm:$0xff]
    %v753 = vld [vmem:[%s5 + $0x228] sm:$0xff]
    %v754 = vld [vmem:[%s5 + $0x230] sm:$0xff]
    %v755 = vld [vmem:[%s5 + $0x238] sm:$0xff]
    %v756 = vld [vmem:[%s5 + $0x240] sm:$0xff]
    %v757 = vld [vmem:[%s5 + $0x248] sm:$0xff]
    %v758 = vld [vmem:[%s5 + $0x250] sm:$0xff]
    %v759 = vld [vmem:[%s5 + $0x258] sm:$0xff]
    %v760 = vld [vmem:[%s5 + $0x260] sm:$0xff]
    %v761 = vld [vmem:[%s5 + $0x268] sm:$0xff]
    %v762 = vld [vmem:[%s5 + $0x270] sm:$0xff]
    %v763 = vld [vmem:[%s5 + $0x278] sm:$0xff]
    %v764 = vld [vmem:[%s5 + $0x280] sm:$0xff]
    %v765 = vld [vmem:[%s5 + $0x288] sm:$0xff]
    %v766 = vld [vmem:[%s5 + $0x290] sm:$0xff]
    %v767 = vld [vmem:[%s5 + $0x298] sm:$0xff]
    %v768 = vld [vmem:[%s5 + $0x2a0] sm:$0xff]
    %v769 = vld [vmem:[%s5 + $0x2a8] sm:$0xff]
    %v770 = vld [vmem:[%s5 + $0x2b0] sm:$0xff]
    %v771 = vld [vmem:[%s5 + $0x2b8] sm:$0xff]
    %v772 = vld [vmem:[%s5 + $0x2c0] sm:$0xff]
    %v773 = vld [vmem:[%s5 + $0x2c8] sm:$0xff]
    %v774 = vld [vmem:[%s5 + $0x2d0] sm:$0xff]
    %v775 = vld [vmem:[%s5 + $0x2d8] sm:$0xff]
    %v776 = vld [vmem:[%s5 + $0x2e0] sm:$0xff]
    %v777 = vld [vmem:[%s5 + $0x2e8] sm:$0xff]
    %v778 = vld [vmem:[%s5 + $0x2f0] sm:$0xff]
    %v779 = vld [vmem:[%s5 + $0x2f8] sm:$0xff]
    %v780 = vld [vmem:[%s5 + $0x300] sm:$0xff]
    %v781 = vld [vmem:[%s5 + $0x308] sm:$0xff]
    %v782 = vld [vmem:[%s5 + $0x310] sm:$0xff]
    %v783 = vld [vmem:[%s5 + $0x318] sm:$0xff]
    %v784 = vld [vmem:[%s5 + $0x320] sm:$0xff]
    %v785 = vld [vmem:[%s5 + $0x328] sm:$0xff]
    %v786 = vld [vmem:[%s5 + $0x330] sm:$0xff]
    %v787 = vld [vmem:[%s5 + $0x338] sm:$0xff]
    %v788 = vld [vmem:[%s5 + $0x340] sm:$0xff]
    %v789 = vld [vmem:[%s5 + $0x348] sm:$0xff]
    %v790 = vld [vmem:[%s5 + $0x350] sm:$0xff]
    %v791 = vld [vmem:[%s5 + $0x358] sm:$0xff]
    %v792 = vld [vmem:[%s5 + $0x360] sm:$0xff]
    %v793 = vld [vmem:[%s5 + $0x368] sm:$0xff]
    %v794 = vld [vmem:[%s5 + $0x370] sm:$0xff]
    %v795 = vld [vmem:[%s5 + $0x378] sm:$0xff]
    %v796 = vld [vmem:[%s5 + $0x380] sm:$0xff]
    %v797 = vld [vmem:[%s5 + $0x388] sm:$0xff]
    %v798 = vld [vmem:[%s5 + $0x390] sm:$0xff]
    %v799 = vld [vmem:[%s5 + $0x398] sm:$0xff]
    %v800 = vld [vmem:[%s5 + $0x3a0] sm:$0xff]
    %v801 = vld [vmem:[%s5 + $0x3a8] sm:$0xff]
    %v802 = vld [vmem:[%s5 + $0x3b0] sm:$0xff]
    %v803 = vld [vmem:[%s5 + $0x3b8] sm:$0xff]
    %v804 = vld [vmem:[%s5 + $0x3c0] sm:$0xff]
    %v805 = vld [vmem:[%s5 + $0x3c8] sm:$0xff]
    %v806 = vld [vmem:[%s5 + $0x3d0] sm:$0xff]
    %v807 = vld [vmem:[%s5 + $0x3d8] sm:$0xff]
    %v808 = vld [vmem:[%s5 + $0x3e0] sm:$0xff]
    %v809 = vld [vmem:[%s5 + $0x3e8] sm:$0xff]
    %v810 = vld [vmem:[%s5 + $0x3f0] sm:$0xff]
    %v811 = vld [vmem:[%s5 + $0x3f8] sm:$0xff]
    %v812 = vld [vmem:[%s5 + $0x400] sm:$0xff]
    %v813 = vld [vmem:[%s5 + $0x408] sm:$0xff]
    %v814 = vld [vmem:[%s5 + $0x410] sm:$0xff]
    %v815 = vld [vmem:[%s5 + $0x418] sm:$0xff]
    %v816 = vld [vmem:[%s5 + $0x420] sm:$0xff]
    %v817 = vld [vmem:[%s5 + $0x428] sm:$0xff]
    %v818 = vld [vmem:[%s5 + $0x430] sm:$0xff]
    %v819 = vld [vmem:[%s5 + $0x438] sm:$0xff]
    %v820 = vld [vmem:[%s5 + $0x440] sm:$0xff]
    %v821 = vld [vmem:[%s5 + $0x448] sm:$0xff]
    %v822 = vld [vmem:[%s5 + $0x450] sm:$0xff]
    %v823 = vld [vmem:[%s5 + $0x458] sm:$0xff]
    %v824 = vld [vmem:[%s5 + $0x460] sm:$0xff]
    %v825 = vld [vmem:[%s5 + $0x468] sm:$0xff]
    %v826 = vld [vmem:[%s5 + $0x470] sm:$0xff]
    %v827 = vld [vmem:[%s5 + $0x478] sm:$0xff]
    %v828 = vld [vmem:[%s5 + $0x480] sm:$0xff]
    %v829 = vld [vmem:[%s5 + $0x488] sm:$0xff]
    %v830 = vld [vmem:[%s5 + $0x490] sm:$0xff]
    %v831 = vld [vmem:[%s5 + $0x498] sm:$0xff]
    %v832 = vld [vmem:[%s5 + $0x4a0] sm:$0xff]
    %v833 = vld [vmem:[%s5 + $0x4a8] sm:$0xff]
    %v834 = vld [vmem:[%s5 + $0x4b0] sm:$0xff]
    %v835 = vld [vmem:[%s5 + $0x4b8] sm:$0xff]
    %v836 = vld [vmem:[%s5 + $0x4c0] sm:$0xff]
    %v837 = vld [vmem:[%s5 + $0x4c8] sm:$0xff]
    %v838 = vld [vmem:[%s5 + $0x4d0] sm:$0xff]
    %v839 = vld [vmem:[%s5 + $0x4d8] sm:$0xff]
    %v840 = vld [vmem:[%s5 + $0x4e0] sm:$0xff]
    %v841 = vld [vmem:[%s5 + $0x4e8] sm:$0xff]
    %v842 = vld [vmem:[%s5 + $0x4f0] sm:$0xff]
    %v843 = vld [vmem:[%s5 + $0x4f8] sm:$0xff]
    %v844 = vld [vmem:[%s5 + $0x500] sm:$0xff]
    %v845 = vld [vmem:[%s5 + $0x508] sm:$0xff]
    %v846 = vld [vmem:[%s5 + $0x510] sm:$0xff]
    %v847 = vld [vmem:[%s5 + $0x518] sm:$0xff]
    %v848 = vld [vmem:[%s5 + $0x520] sm:$0xff]
    %v849 = vld [vmem:[%s5 + $0x528] sm:$0xff]
    %v850 = vld [vmem:[%s5 + $0x530] sm:$0xff]
    %v851 = vld [vmem:[%s5 + $0x538] sm:$0xff]
    %v852 = vld [vmem:[%s5 + $0x540] sm:$0xff]
    %v853 = vld [vmem:[%s5 + $0x548] sm:$0xff]
    %v854 = vld [vmem:[%s5 + $0x550] sm:$0xff]
    %v855 = vld [vmem:[%s5 + $0x558] sm:$0xff]
    %v856 = vld [vmem:[%s5 + $0x560] sm:$0xff]
    %v857 = vld [vmem:[%s5 + $0x568] sm:$0xff]
    %v858 = vld [vmem:[%s5 + $0x570] sm:$0xff]
    %v859 = vld [vmem:[%s5 + $0x578] sm:$0xff]
    %v860 = vld [vmem:[%s5 + $0x580] sm:$0xff]
    %v861 = vld [vmem:[%s5 + $0x588] sm:$0xff]
    %v862 = vld [vmem:[%s5 + $0x590] sm:$0xff]
    %v863 = vld [vmem:[%s5 + $0x598] sm:$0xff]
    %v864 = vld [vmem:[%s5 + $0x5a0] sm:$0xff]
    %v865 = vld [vmem:[%s5 + $0x5a8] sm:$0xff]
    %v866 = vld [vmem:[%s5 + $0x5b0] sm:$0xff]
    %v867 = vld [vmem:[%s5 + $0x5b8] sm:$0xff]
    %v868 = vld [vmem:[%s5 + $0x5c0] sm:$0xff]
    %v869 = vld [vmem:[%s5 + $0x5c8] sm:$0xff]
    %v870 = vld [vmem:[%s5 + $0x5d0] sm:$0xff]
    %v871 = vld [vmem:[%s5 + $0x5d8] sm:$0xff]
    %v872 = vld [vmem:[%s5 + $0x5e0] sm:$0xff]
    %v873 = vld [vmem:[%s5 + $0x5e8] sm:$0xff]
    %v874 = vld [vmem:[%s5 + $0x5f0] sm:$0xff]
    %v875 = vld [vmem:[%s5 + $0x5f8] sm:$0xff]
    %v876 = vld [vmem:[%s5 + $0x600] sm:$0xff]
    %v877 = vld [vmem:[%s5 + $0x608] sm:$0xff]
    %v878 = vld [vmem:[%s5 + $0x610] sm:$0xff]
    %v879 = vld [vmem:[%s5 + $0x618] sm:$0xff]
    %v880 = vld [vmem:[%s5 + $0x620] sm:$0xff]
    %v881 = vld [vmem:[%s5 + $0x628] sm:$0xff]
    %v882 = vld [vmem:[%s5 + $0x630] sm:$0xff]
    %v883 = vld [vmem:[%s5 + $0x638] sm:$0xff]
    %v884 = vld [vmem:[%s5 + $0x640] sm:$0xff]
    %v885 = vld [vmem:[%s5 + $0x648] sm:$0xff]
    %v886 = vld [vmem:[%s5 + $0x650] sm:$0xff]
    %v887 = vld [vmem:[%s5 + $0x658] sm:$0xff]
    %v888 = vld [vmem:[%s5 + $0x660] sm:$0xff]
    %v889 = vld [vmem:[%s5 + $0x668] sm:$0xff]
    %v890 = vld [vmem:[%s5 + $0x670] sm:$0xff]
    %v891 = vld [vmem:[%s5 + $0x678] sm:$0xff]
    %v892 = vld [vmem:[%s5 + $0x680] sm:$0xff]
    %v893 = vld [vmem:[%s5 + $0x688] sm:$0xff]
    %v894 = vld [vmem:[%s5 + $0x690] sm:$0xff]
    %v895 = vld [vmem:[%s5 + $0x698] sm:$0xff]
    %v896 = vld [vmem:[%s5 + $0x6a0] sm:$0xff]
    %v897 = vld [vmem:[%s5 + $0x6a8] sm:$0xff]
    %v898 = vld [vmem:[%s5 + $0x6b0] sm:$0xff]
    %v899 = vld [vmem:[%s5 + $0x6b8] sm:$0xff]
    %v900 = vld [vmem:[%s5 + $0x6c0] sm:$0xff]
    %v901 = vld [vmem:[%s5 + $0x6c8] sm:$0xff]
    %v902 = vld [vmem:[%s5 + $0x6d0] sm:$0xff]
    %v903 = vld [vmem:[%s5 + $0x6d8] sm:$0xff]
    %v904 = vld [vmem:[%s5 + $0x6e0] sm:$0xff]
    %v905 = vld [vmem:[%s5 + $0x6e8] sm:$0xff]
    %v906 = vld [vmem:[%s5 + $0x6f0] sm:$0xff]
    %v907 = vld [vmem:[%s5 + $0x6f8] sm:$0xff]
    %v908 = vld [vmem:[%s5 + $0x700] sm:$0xff]
    %v909 = vld [vmem:[%s5 + $0x708] sm:$0xff]
    %v910 = vld [vmem:[%s5 + $0x710] sm:$0xff]
    %v911 = vld [vmem:[%s5 + $0x718] sm:$0xff]
    %v912 = vld [vmem:[%s5 + $0x720] sm:$0xff]
    %v913 = vld [vmem:[%s5 + $0x728] sm:$0xff]
    %v914 = vld [vmem:[%s5 + $0x730] sm:$0xff]
    %v915 = vld [vmem:[%s5 + $0x738] sm:$0xff]
    %v916 = vld [vmem:[%s5 + $0x740] sm:$0xff]
    %v917 = vld [vmem:[%s5 + $0x748] sm:$0xff]
    %v918 = vld [vmem:[%s5 + $0x750] sm:$0xff]
    %v919 = vld [vmem:[%s5 + $0x758] sm:$0xff]
    %v920 = vld [vmem:[%s5 + $0x760] sm:$0xff]
    %v921 = vld [vmem:[%s5 + $0x768] sm:$0xff]
    %v922 = vld [vmem:[%s5 + $0x770] sm:$0xff]
    %v923 = vld [vmem:[%s5 + $0x778] sm:$0xff]
    %v924 = vld [vmem:[%s5 + $0x780] sm:$0xff]
    %v925 = vld [vmem:[%s5 + $0x788] sm:$0xff]
    %v926 = vld [vmem:[%s5 + $0x790] sm:$0xff]
    %v927 = vld [vmem:[%s5 + $0x798] sm:$0xff]
    %v928 = vld [vmem:[%s5 + $0x7a0] sm:$0xff]
    %v929 = vld [vmem:[%s5 + $0x7a8] sm:$0xff]
    %v930 = vld [vmem:[%s5 + $0x7b0] sm:$0xff]
    %v931 = vld [vmem:[%s5 + $0x7b8] sm:$0xff]
    %v932 = vld [vmem:[%s5 + $0x7c0] sm:$0xff]
    %v933 = vld [vmem:[%s5 + $0x7c8] sm:$0xff]
    %v934 = vld [vmem:[%s5 + $0x7d0] sm:$0xff]
    %v935 = vld [vmem:[%s5 + $0x7d8] sm:$0xff]
    %v936 = vld [vmem:[%s5 + $0x7e0] sm:$0xff]
    %v937 = vld [vmem:[%s5 + $0x7e8] sm:$0xff]
    %v938 = vld [vmem:[%s5 + $0x7f0] sm:$0xff]
    %v939 = vld [vmem:[%s5 + $0x7f8] sm:$0xff]
    %v940 = vld [vmem:[%s6] sm:$0xff]
    %v942 = vlaneseq
    %v943 = vshrl.u32 %v942, 7
    %v944 = vsub.s32 0, %v943
    %v945 = vrot.slane %v940, %v944
    %v946 = vlaneseq
    %v947 = vshrl.u32 %v946, 7
    %v948 = vsub.s32 1, %v947
    %v949 = vrot.slane %v940, %v948
    %v950 = vlaneseq
    %v951 = vshrl.u32 %v950, 7
    %v952 = vsub.s32 2, %v951
    %v953 = vrot.slane %v940, %v952
    %v954 = vlaneseq
    %v955 = vshrl.u32 %v954, 7
    %v956 = vsub.s32 3, %v955
    %v957 = vrot.slane %v940, %v956
    %v958 = vlaneseq
    %v959 = vshrl.u32 %v958, 7
    %v960 = vsub.s32 4, %v959
    %v961 = vrot.slane %v940, %v960
    %v962 = vlaneseq
    %v963 = vshrl.u32 %v962, 7
    %v964 = vsub.s32 5, %v963
    %v965 = vrot.slane %v940, %v964
    %v966 = vlaneseq
    %v967 = vshrl.u32 %v966, 7
    %v968 = vsub.s32 6, %v967
    %v969 = vrot.slane %v940, %v968
    %v970 = vlaneseq
    %v971 = vshrl.u32 %v970, 7
    %v972 = vsub.s32 7, %v971
    %v973 = vrot.slane %v940, %v972
    %v1238 = vunpack.c.l.b16 %v684
    %v1239 = vunpack.c.h.b16 %v684
    %v1240 = vunpack.c.l.b16 %v685
    %v1241 = vunpack.c.h.b16 %v685
    %v1242 = vunpack.c.l.b16 %v686
    %v1243 = vunpack.c.h.b16 %v686
    %v1244 = vunpack.c.l.b16 %v687
    %v1245 = vunpack.c.h.b16 %v687
    %v1246 = vunpack.c.l.b16 %v688
    %v1247 = vunpack.c.h.b16 %v688
    %v1248 = vunpack.c.l.b16 %v689
    %v1249 = vunpack.c.h.b16 %v689
    %v1250 = vunpack.c.l.b16 %v690
    %v1251 = vunpack.c.h.b16 %v690
    %v1252 = vunpack.c.l.b16 %v691
    %v1253 = vunpack.c.h.b16 %v691
    %v1254 = vunpack.c.l.b16 %v692
    %v1255 = vunpack.c.h.b16 %v692
    %v1256 = vunpack.c.l.b16 %v693
    %v1257 = vunpack.c.h.b16 %v693
    %v1258 = vunpack.c.l.b16 %v694
    %v1259 = vunpack.c.h.b16 %v694
    %v1260 = vunpack.c.l.b16 %v695
    %v1261 = vunpack.c.h.b16 %v695
    %v1262 = vunpack.c.l.b16 %v696
    %v1263 = vunpack.c.h.b16 %v696
    %v1264 = vunpack.c.l.b16 %v697
    %v1265 = vunpack.c.h.b16 %v697
    %v1266 = vunpack.c.l.b16 %v698
    %v1267 = vunpack.c.h.b16 %v698
    %v1268 = vunpack.c.l.b16 %v699
    %v1269 = vunpack.c.h.b16 %v699
    %v1270 = vunpack.c.l.b16 %v700
    %v1271 = vunpack.c.h.b16 %v700
    %v1272 = vunpack.c.l.b16 %v701
    %v1273 = vunpack.c.h.b16 %v701
    %v1274 = vunpack.c.l.b16 %v702
    %v1275 = vunpack.c.h.b16 %v702
    %v1276 = vunpack.c.l.b16 %v703
    %v1277 = vunpack.c.h.b16 %v703
    %v1278 = vunpack.c.l.b16 %v704
    %v1279 = vunpack.c.h.b16 %v704
    %v1280 = vunpack.c.l.b16 %v705
    %v1281 = vunpack.c.h.b16 %v705
    %v1282 = vunpack.c.l.b16 %v706
    %v1283 = vunpack.c.h.b16 %v706
    %v1284 = vunpack.c.l.b16 %v707
    %v1285 = vunpack.c.h.b16 %v707
    %v1286 = vunpack.c.l.b16 %v708
    %v1287 = vunpack.c.h.b16 %v708
    %v1288 = vunpack.c.l.b16 %v709
    %v1289 = vunpack.c.h.b16 %v709
    %v1290 = vunpack.c.l.b16 %v710
    %v1291 = vunpack.c.h.b16 %v710
    %v1292 = vunpack.c.l.b16 %v711
    %v1293 = vunpack.c.h.b16 %v711
    %v1294 = vunpack.c.l.b16 %v712
    %v1295 = vunpack.c.h.b16 %v712
    %v1296 = vunpack.c.l.b16 %v713
    %v1297 = vunpack.c.h.b16 %v713
    %v1298 = vunpack.c.l.b16 %v714
    %v1299 = vunpack.c.h.b16 %v714
    %v1300 = vunpack.c.l.b16 %v715
    %v1301 = vunpack.c.h.b16 %v715
    %v1302 = vunpack.c.l.b16 %v716
    %v1303 = vunpack.c.h.b16 %v716
    %v1304 = vunpack.c.l.b16 %v717
    %v1305 = vunpack.c.h.b16 %v717
    %v1306 = vunpack.c.l.b16 %v718
    %v1307 = vunpack.c.h.b16 %v718
    %v1308 = vunpack.c.l.b16 %v719
    %v1309 = vunpack.c.h.b16 %v719
    %v1310 = vunpack.c.l.b16 %v720
    %v1311 = vunpack.c.h.b16 %v720
    %v1312 = vunpack.c.l.b16 %v721
    %v1313 = vunpack.c.h.b16 %v721
    %v1314 = vunpack.c.l.b16 %v722
    %v1315 = vunpack.c.h.b16 %v722
    %v1316 = vunpack.c.l.b16 %v723
    %v1317 = vunpack.c.h.b16 %v723
    %v1318 = vunpack.c.l.b16 %v724
    %v1319 = vunpack.c.h.b16 %v724
    %v1320 = vunpack.c.l.b16 %v725
    %v1321 = vunpack.c.h.b16 %v725
    %v1322 = vunpack.c.l.b16 %v726
    %v1323 = vunpack.c.h.b16 %v726
    %v1324 = vunpack.c.l.b16 %v727
    %v1325 = vunpack.c.h.b16 %v727
    %v1326 = vunpack.c.l.b16 %v728
    %v1327 = vunpack.c.h.b16 %v728
    %v1328 = vunpack.c.l.b16 %v729
    %v1329 = vunpack.c.h.b16 %v729
    %v1330 = vunpack.c.l.b16 %v730
    %v1331 = vunpack.c.h.b16 %v730
    %v1332 = vunpack.c.l.b16 %v731
    %v1333 = vunpack.c.h.b16 %v731
    %v1334 = vunpack.c.l.b16 %v732
    %v1335 = vunpack.c.h.b16 %v732
    %v1336 = vunpack.c.l.b16 %v733
    %v1337 = vunpack.c.h.b16 %v733
    %v1338 = vunpack.c.l.b16 %v734
    %v1339 = vunpack.c.h.b16 %v734
    %v1340 = vunpack.c.l.b16 %v735
    %v1341 = vunpack.c.h.b16 %v735
    %v1342 = vunpack.c.l.b16 %v736
    %v1343 = vunpack.c.h.b16 %v736
    %v1344 = vunpack.c.l.b16 %v737
    %v1345 = vunpack.c.h.b16 %v737
    %v1346 = vunpack.c.l.b16 %v738
    %v1347 = vunpack.c.h.b16 %v738
    %v1348 = vunpack.c.l.b16 %v739
    %v1349 = vunpack.c.h.b16 %v739
    %v1350 = vunpack.c.l.b16 %v740
    %v1351 = vunpack.c.h.b16 %v740
    %v1352 = vunpack.c.l.b16 %v741
    %v1353 = vunpack.c.h.b16 %v741
    %v1354 = vunpack.c.l.b16 %v742
    %v1355 = vunpack.c.h.b16 %v742
    %v1356 = vunpack.c.l.b16 %v743
    %v1357 = vunpack.c.h.b16 %v743
    %v1358 = vunpack.c.l.b16 %v744
    %v1359 = vunpack.c.h.b16 %v744
    %v1360 = vunpack.c.l.b16 %v745
    %v1361 = vunpack.c.h.b16 %v745
    %v1362 = vunpack.c.l.b16 %v746
    %v1363 = vunpack.c.h.b16 %v746
    %v1364 = vunpack.c.l.b16 %v747
    %v1365 = vunpack.c.h.b16 %v747
    %v1366 = vunpack.c.l.b16 %v748
    %v1367 = vunpack.c.h.b16 %v748
    %v1368 = vunpack.c.l.b16 %v749
    %v1369 = vunpack.c.h.b16 %v749
    %v1370 = vunpack.c.l.b16 %v750
    %v1371 = vunpack.c.h.b16 %v750
    %v1372 = vunpack.c.l.b16 %v751
    %v1373 = vunpack.c.h.b16 %v751
    %v1374 = vunpack.c.l.b16 %v752
    %v1375 = vunpack.c.h.b16 %v752
    %v1376 = vunpack.c.l.b16 %v753
    %v1377 = vunpack.c.h.b16 %v753
    %v1378 = vunpack.c.l.b16 %v754
    %v1379 = vunpack.c.h.b16 %v754
    %v1380 = vunpack.c.l.b16 %v755
    %v1381 = vunpack.c.h.b16 %v755
    %v1382 = vunpack.c.l.b16 %v756
    %v1383 = vunpack.c.h.b16 %v756
    %v1384 = vunpack.c.l.b16 %v757
    %v1385 = vunpack.c.h.b16 %v757
    %v1386 = vunpack.c.l.b16 %v758
    %v1387 = vunpack.c.h.b16 %v758
    %v1388 = vunpack.c.l.b16 %v759
    %v1389 = vunpack.c.h.b16 %v759
    %v1390 = vunpack.c.l.b16 %v760
    %v1391 = vunpack.c.h.b16 %v760
    %v1392 = vunpack.c.l.b16 %v761
    %v1393 = vunpack.c.h.b16 %v761
    %v1394 = vunpack.c.l.b16 %v762
    %v1395 = vunpack.c.h.b16 %v762
    %v1396 = vunpack.c.l.b16 %v763
    %v1397 = vunpack.c.h.b16 %v763
    %v1398 = vunpack.c.l.b16 %v764
    %v1399 = vunpack.c.h.b16 %v764
    %v1400 = vunpack.c.l.b16 %v765
    %v1401 = vunpack.c.h.b16 %v765
    %v1402 = vunpack.c.l.b16 %v766
    %v1403 = vunpack.c.h.b16 %v766
    %v1404 = vunpack.c.l.b16 %v767
    %v1405 = vunpack.c.h.b16 %v767
    %v1406 = vunpack.c.l.b16 %v768
    %v1407 = vunpack.c.h.b16 %v768
    %v1408 = vunpack.c.l.b16 %v769
    %v1409 = vunpack.c.h.b16 %v769
    %v1410 = vunpack.c.l.b16 %v770
    %v1411 = vunpack.c.h.b16 %v770
    %v1412 = vunpack.c.l.b16 %v771
    %v1413 = vunpack.c.h.b16 %v771
    %v1414 = vunpack.c.l.b16 %v772
    %v1415 = vunpack.c.h.b16 %v772
    %v1416 = vunpack.c.l.b16 %v773
    %v1417 = vunpack.c.h.b16 %v773
    %v1418 = vunpack.c.l.b16 %v774
    %v1419 = vunpack.c.h.b16 %v774
    %v1420 = vunpack.c.l.b16 %v775
    %v1421 = vunpack.c.h.b16 %v775
    %v1422 = vunpack.c.l.b16 %v776
    %v1423 = vunpack.c.h.b16 %v776
    %v1424 = vunpack.c.l.b16 %v777
    %v1425 = vunpack.c.h.b16 %v777
    %v1426 = vunpack.c.l.b16 %v778
    %v1427 = vunpack.c.h.b16 %v778
    %v1428 = vunpack.c.l.b16 %v779
    %v1429 = vunpack.c.h.b16 %v779
    %v1430 = vunpack.c.l.b16 %v780
    %v1431 = vunpack.c.h.b16 %v780
    %v1432 = vunpack.c.l.b16 %v781
    %v1433 = vunpack.c.h.b16 %v781
    %v1434 = vunpack.c.l.b16 %v782
    %v1435 = vunpack.c.h.b16 %v782
    %v1436 = vunpack.c.l.b16 %v783
    %v1437 = vunpack.c.h.b16 %v783
    %v1438 = vunpack.c.l.b16 %v784
    %v1439 = vunpack.c.h.b16 %v784
    %v1440 = vunpack.c.l.b16 %v785
    %v1441 = vunpack.c.h.b16 %v785
    %v1442 = vunpack.c.l.b16 %v786
    %v1443 = vunpack.c.h.b16 %v786
    %v1444 = vunpack.c.l.b16 %v787
    %v1445 = vunpack.c.h.b16 %v787
    %v1446 = vunpack.c.l.b16 %v788
    %v1447 = vunpack.c.h.b16 %v788
    %v1448 = vunpack.c.l.b16 %v789
    %v1449 = vunpack.c.h.b16 %v789
    %v1450 = vunpack.c.l.b16 %v790
    %v1451 = vunpack.c.h.b16 %v790
    %v1452 = vunpack.c.l.b16 %v791
    %v1453 = vunpack.c.h.b16 %v791
    %v1454 = vunpack.c.l.b16 %v792
    %v1455 = vunpack.c.h.b16 %v792
    %v1456 = vunpack.c.l.b16 %v793
    %v1457 = vunpack.c.h.b16 %v793
    %v1458 = vunpack.c.l.b16 %v794
    %v1459 = vunpack.c.h.b16 %v794
    %v1460 = vunpack.c.l.b16 %v795
    %v1461 = vunpack.c.h.b16 %v795
    %v1462 = vunpack.c.l.b16 %v796
    %v1463 = vunpack.c.h.b16 %v796
    %v1464 = vunpack.c.l.b16 %v797
    %v1465 = vunpack.c.h.b16 %v797
    %v1466 = vunpack.c.l.b16 %v798
    %v1467 = vunpack.c.h.b16 %v798
    %v1468 = vunpack.c.l.b16 %v799
    %v1469 = vunpack.c.h.b16 %v799
    %v1470 = vunpack.c.l.b16 %v800
    %v1471 = vunpack.c.h.b16 %v800
    %v1472 = vunpack.c.l.b16 %v801
    %v1473 = vunpack.c.h.b16 %v801
    %v1474 = vunpack.c.l.b16 %v802
    %v1475 = vunpack.c.h.b16 %v802
    %v1476 = vunpack.c.l.b16 %v803
    %v1477 = vunpack.c.h.b16 %v803
    %v1478 = vunpack.c.l.b16 %v804
    %v1479 = vunpack.c.h.b16 %v804
    %v1480 = vunpack.c.l.b16 %v805
    %v1481 = vunpack.c.h.b16 %v805
    %v1482 = vunpack.c.l.b16 %v806
    %v1483 = vunpack.c.h.b16 %v806
    %v1484 = vunpack.c.l.b16 %v807
    %v1485 = vunpack.c.h.b16 %v807
    %v1486 = vunpack.c.l.b16 %v808
    %v1487 = vunpack.c.h.b16 %v808
    %v1488 = vunpack.c.l.b16 %v809
    %v1489 = vunpack.c.h.b16 %v809
    %v1490 = vunpack.c.l.b16 %v810
    %v1491 = vunpack.c.h.b16 %v810
    %v1492 = vunpack.c.l.b16 %v811
    %v1493 = vunpack.c.h.b16 %v811
    %v1494 = vunpack.c.l.b16 %v812
    %v1495 = vunpack.c.h.b16 %v812
    %v1496 = vunpack.c.l.b16 %v813
    %v1497 = vunpack.c.h.b16 %v813
    %v1498 = vunpack.c.l.b16 %v814
    %v1499 = vunpack.c.h.b16 %v814
    %v1500 = vunpack.c.l.b16 %v815
    %v1501 = vunpack.c.h.b16 %v815
    %v1502 = vunpack.c.l.b16 %v816
    %v1503 = vunpack.c.h.b16 %v816
    %v1504 = vunpack.c.l.b16 %v817
    %v1505 = vunpack.c.h.b16 %v817
    %v1506 = vunpack.c.l.b16 %v818
    %v1507 = vunpack.c.h.b16 %v818
    %v1508 = vunpack.c.l.b16 %v819
    %v1509 = vunpack.c.h.b16 %v819
    %v1510 = vunpack.c.l.b16 %v820
    %v1511 = vunpack.c.h.b16 %v820
    %v1512 = vunpack.c.l.b16 %v821
    %v1513 = vunpack.c.h.b16 %v821
    %v1514 = vunpack.c.l.b16 %v822
    %v1515 = vunpack.c.h.b16 %v822
    %v1516 = vunpack.c.l.b16 %v823
    %v1517 = vunpack.c.h.b16 %v823
    %v1518 = vunpack.c.l.b16 %v824
    %v1519 = vunpack.c.h.b16 %v824
    %v1520 = vunpack.c.l.b16 %v825
    %v1521 = vunpack.c.h.b16 %v825
    %v1522 = vunpack.c.l.b16 %v826
    %v1523 = vunpack.c.h.b16 %v826
    %v1524 = vunpack.c.l.b16 %v827
    %v1525 = vunpack.c.h.b16 %v827
    %v1526 = vunpack.c.l.b16 %v828
    %v1527 = vunpack.c.h.b16 %v828
    %v1528 = vunpack.c.l.b16 %v829
    %v1529 = vunpack.c.h.b16 %v829
    %v1530 = vunpack.c.l.b16 %v830
    %v1531 = vunpack.c.h.b16 %v830
    %v1532 = vunpack.c.l.b16 %v831
    %v1533 = vunpack.c.h.b16 %v831
    %v1534 = vunpack.c.l.b16 %v832
    %v1535 = vunpack.c.h.b16 %v832
    %v1536 = vunpack.c.l.b16 %v833
    %v1537 = vunpack.c.h.b16 %v833
    %v1538 = vunpack.c.l.b16 %v834
    %v1539 = vunpack.c.h.b16 %v834
    %v1540 = vunpack.c.l.b16 %v835
    %v1541 = vunpack.c.h.b16 %v835
    %v1542 = vunpack.c.l.b16 %v836
    %v1543 = vunpack.c.h.b16 %v836
    %v1544 = vunpack.c.l.b16 %v837
    %v1545 = vunpack.c.h.b16 %v837
    %v1546 = vunpack.c.l.b16 %v838
    %v1547 = vunpack.c.h.b16 %v838
    %v1548 = vunpack.c.l.b16 %v839
    %v1549 = vunpack.c.h.b16 %v839
    %v1550 = vunpack.c.l.b16 %v840
    %v1551 = vunpack.c.h.b16 %v840
    %v1552 = vunpack.c.l.b16 %v841
    %v1553 = vunpack.c.h.b16 %v841
    %v1554 = vunpack.c.l.b16 %v842
    %v1555 = vunpack.c.h.b16 %v842
    %v1556 = vunpack.c.l.b16 %v843
    %v1557 = vunpack.c.h.b16 %v843
    %v1558 = vunpack.c.l.b16 %v844
    %v1559 = vunpack.c.h.b16 %v844
    %v1560 = vunpack.c.l.b16 %v845
    %v1561 = vunpack.c.h.b16 %v845
    %v1562 = vunpack.c.l.b16 %v846
    %v1563 = vunpack.c.h.b16 %v846
    %v1564 = vunpack.c.l.b16 %v847
    %v1565 = vunpack.c.h.b16 %v847
    %v1566 = vunpack.c.l.b16 %v848
    %v1567 = vunpack.c.h.b16 %v848
    %v1568 = vunpack.c.l.b16 %v849
    %v1569 = vunpack.c.h.b16 %v849
    %v1570 = vunpack.c.l.b16 %v850
    %v1571 = vunpack.c.h.b16 %v850
    %v1572 = vunpack.c.l.b16 %v851
    %v1573 = vunpack.c.h.b16 %v851
    %v1574 = vunpack.c.l.b16 %v852
    %v1575 = vunpack.c.h.b16 %v852
    %v1576 = vunpack.c.l.b16 %v853
    %v1577 = vunpack.c.h.b16 %v853
    %v1578 = vunpack.c.l.b16 %v854
    %v1579 = vunpack.c.h.b16 %v854
    %v1580 = vunpack.c.l.b16 %v855
    %v1581 = vunpack.c.h.b16 %v855
    %v1582 = vunpack.c.l.b16 %v856
    %v1583 = vunpack.c.h.b16 %v856
    %v1584 = vunpack.c.l.b16 %v857
    %v1585 = vunpack.c.h.b16 %v857
    %v1586 = vunpack.c.l.b16 %v858
    %v1587 = vunpack.c.h.b16 %v858
    %v1588 = vunpack.c.l.b16 %v859
    %v1589 = vunpack.c.h.b16 %v859
    %v1590 = vunpack.c.l.b16 %v860
    %v1591 = vunpack.c.h.b16 %v860
    %v1592 = vunpack.c.l.b16 %v861
    %v1593 = vunpack.c.h.b16 %v861
    %v1594 = vunpack.c.l.b16 %v862
    %v1595 = vunpack.c.h.b16 %v862
    %v1596 = vunpack.c.l.b16 %v863
    %v1597 = vunpack.c.h.b16 %v863
    %v1598 = vunpack.c.l.b16 %v864
    %v1599 = vunpack.c.h.b16 %v864
    %v1600 = vunpack.c.l.b16 %v865
    %v1601 = vunpack.c.h.b16 %v865
    %v1602 = vunpack.c.l.b16 %v866
    %v1603 = vunpack.c.h.b16 %v866
    %v1604 = vunpack.c.l.b16 %v867
    %v1605 = vunpack.c.h.b16 %v867
    %v1606 = vunpack.c.l.b16 %v868
    %v1607 = vunpack.c.h.b16 %v868
    %v1608 = vunpack.c.l.b16 %v869
    %v1609 = vunpack.c.h.b16 %v869
    %v1610 = vunpack.c.l.b16 %v870
    %v1611 = vunpack.c.h.b16 %v870
    %v1612 = vunpack.c.l.b16 %v871
    %v1613 = vunpack.c.h.b16 %v871
    %v1614 = vunpack.c.l.b16 %v872
    %v1615 = vunpack.c.h.b16 %v872
    %v1616 = vunpack.c.l.b16 %v873
    %v1617 = vunpack.c.h.b16 %v873
    %v1618 = vunpack.c.l.b16 %v874
    %v1619 = vunpack.c.h.b16 %v874
    %v1620 = vunpack.c.l.b16 %v875
    %v1621 = vunpack.c.h.b16 %v875
    %v1622 = vunpack.c.l.b16 %v876
    %v1623 = vunpack.c.h.b16 %v876
    %v1624 = vunpack.c.l.b16 %v877
    %v1625 = vunpack.c.h.b16 %v877
    %v1626 = vunpack.c.l.b16 %v878
    %v1627 = vunpack.c.h.b16 %v878
    %v1628 = vunpack.c.l.b16 %v879
    %v1629 = vunpack.c.h.b16 %v879
    %v1630 = vunpack.c.l.b16 %v880
    %v1631 = vunpack.c.h.b16 %v880
    %v1632 = vunpack.c.l.b16 %v881
    %v1633 = vunpack.c.h.b16 %v881
    %v1634 = vunpack.c.l.b16 %v882
    %v1635 = vunpack.c.h.b16 %v882
    %v1636 = vunpack.c.l.b16 %v883
    %v1637 = vunpack.c.h.b16 %v883
    %v1638 = vunpack.c.l.b16 %v884
    %v1639 = vunpack.c.h.b16 %v884
    %v1640 = vunpack.c.l.b16 %v885
    %v1641 = vunpack.c.h.b16 %v885
    %v1642 = vunpack.c.l.b16 %v886
    %v1643 = vunpack.c.h.b16 %v886
    %v1644 = vunpack.c.l.b16 %v887
    %v1645 = vunpack.c.h.b16 %v887
    %v1646 = vunpack.c.l.b16 %v888
    %v1647 = vunpack.c.h.b16 %v888
    %v1648 = vunpack.c.l.b16 %v889
    %v1649 = vunpack.c.h.b16 %v889
    %v1650 = vunpack.c.l.b16 %v890
    %v1651 = vunpack.c.h.b16 %v890
    %v1652 = vunpack.c.l.b16 %v891
    %v1653 = vunpack.c.h.b16 %v891
    %v1654 = vunpack.c.l.b16 %v892
    %v1655 = vunpack.c.h.b16 %v892
    %v1656 = vunpack.c.l.b16 %v893
    %v1657 = vunpack.c.h.b16 %v893
    %v1658 = vunpack.c.l.b16 %v894
    %v1659 = vunpack.c.h.b16 %v894
    %v1660 = vunpack.c.l.b16 %v895
    %v1661 = vunpack.c.h.b16 %v895
    %v1662 = vunpack.c.l.b16 %v896
    %v1663 = vunpack.c.h.b16 %v896
    %v1664 = vunpack.c.l.b16 %v897
    %v1665 = vunpack.c.h.b16 %v897
    %v1666 = vunpack.c.l.b16 %v898
    %v1667 = vunpack.c.h.b16 %v898
    %v1668 = vunpack.c.l.b16 %v899
    %v1669 = vunpack.c.h.b16 %v899
    %v1670 = vunpack.c.l.b16 %v900
    %v1671 = vunpack.c.h.b16 %v900
    %v1672 = vunpack.c.l.b16 %v901
    %v1673 = vunpack.c.h.b16 %v901
    %v1674 = vunpack.c.l.b16 %v902
    %v1675 = vunpack.c.h.b16 %v902
    %v1676 = vunpack.c.l.b16 %v903
    %v1677 = vunpack.c.h.b16 %v903
    %v1678 = vunpack.c.l.b16 %v904
    %v1679 = vunpack.c.h.b16 %v904
    %v1680 = vunpack.c.l.b16 %v905
    %v1681 = vunpack.c.h.b16 %v905
    %v1682 = vunpack.c.l.b16 %v906
    %v1683 = vunpack.c.h.b16 %v906
    %v1684 = vunpack.c.l.b16 %v907
    %v1685 = vunpack.c.h.b16 %v907
    %v1686 = vunpack.c.l.b16 %v908
    %v1687 = vunpack.c.h.b16 %v908
    %v1688 = vunpack.c.l.b16 %v909
    %v1689 = vunpack.c.h.b16 %v909
    %v1690 = vunpack.c.l.b16 %v910
    %v1691 = vunpack.c.h.b16 %v910
    %v1692 = vunpack.c.l.b16 %v911
    %v1693 = vunpack.c.h.b16 %v911
    %v1694 = vunpack.c.l.b16 %v912
    %v1695 = vunpack.c.h.b16 %v912
    %v1696 = vunpack.c.l.b16 %v913
    %v1697 = vunpack.c.h.b16 %v913
    %v1698 = vunpack.c.l.b16 %v914
    %v1699 = vunpack.c.h.b16 %v914
    %v1700 = vunpack.c.l.b16 %v915
    %v1701 = vunpack.c.h.b16 %v915
    %v1702 = vunpack.c.l.b16 %v916
    %v1703 = vunpack.c.h.b16 %v916
    %v1704 = vunpack.c.l.b16 %v917
    %v1705 = vunpack.c.h.b16 %v917
    %v1706 = vunpack.c.l.b16 %v918
    %v1707 = vunpack.c.h.b16 %v918
    %v1708 = vunpack.c.l.b16 %v919
    %v1709 = vunpack.c.h.b16 %v919
    %v1710 = vunpack.c.l.b16 %v920
    %v1711 = vunpack.c.h.b16 %v920
    %v1712 = vunpack.c.l.b16 %v921
    %v1713 = vunpack.c.h.b16 %v921
    %v1714 = vunpack.c.l.b16 %v922
    %v1715 = vunpack.c.h.b16 %v922
    %v1716 = vunpack.c.l.b16 %v923
    %v1717 = vunpack.c.h.b16 %v923
    %v1718 = vunpack.c.l.b16 %v924
    %v1719 = vunpack.c.h.b16 %v924
    %v1720 = vunpack.c.l.b16 %v925
    %v1721 = vunpack.c.h.b16 %v925
    %v1722 = vunpack.c.l.b16 %v926
    %v1723 = vunpack.c.h.b16 %v926
    %v1724 = vunpack.c.l.b16 %v927
    %v1725 = vunpack.c.h.b16 %v927
    %v1726 = vunpack.c.l.b16 %v928
    %v1727 = vunpack.c.h.b16 %v928
    %v1728 = vunpack.c.l.b16 %v929
    %v1729 = vunpack.c.h.b16 %v929
    %v1730 = vunpack.c.l.b16 %v930
    %v1731 = vunpack.c.h.b16 %v930
    %v1732 = vunpack.c.l.b16 %v931
    %v1733 = vunpack.c.h.b16 %v931
    %v1734 = vunpack.c.l.b16 %v932
    %v1735 = vunpack.c.h.b16 %v932
    %v1736 = vunpack.c.l.b16 %v933
    %v1737 = vunpack.c.h.b16 %v933
    %v1738 = vunpack.c.l.b16 %v934
    %v1739 = vunpack.c.h.b16 %v934
    %v1740 = vunpack.c.l.b16 %v935
    %v1741 = vunpack.c.h.b16 %v935
    %v1742 = vunpack.c.l.b16 %v936
    %v1743 = vunpack.c.h.b16 %v936
    %v1744 = vunpack.c.l.b16 %v937
    %v1745 = vunpack.c.h.b16 %v937
    %v1746 = vunpack.c.l.b16 %v938
    %v1747 = vunpack.c.h.b16 %v938
    %v1748 = vunpack.c.l.b16 %v939
    %v1749 = vunpack.c.h.b16 %v939
    %v1750 = vpack.c.b16 %v1246, %v1238
    %v1751 = vpack.c.b16 %v1247, %v1239
    %v1752 = vpack.c.b16 %v1248, %v1240
    %v1753 = vpack.c.b16 %v1249, %v1241
    %v1754 = vpack.c.b16 %v1250, %v1242
    %v1755 = vpack.c.b16 %v1251, %v1243
    %v1756 = vpack.c.b16 %v1252, %v1244
    %v1757 = vpack.c.b16 %v1253, %v1245
    %v1758 = vpack.c.b16 %v1262, %v1254
    %v1759 = vpack.c.b16 %v1263, %v1255
    %v1760 = vpack.c.b16 %v1264, %v1256
    %v1761 = vpack.c.b16 %v1265, %v1257
    %v1762 = vpack.c.b16 %v1266, %v1258
    %v1763 = vpack.c.b16 %v1267, %v1259
    %v1764 = vpack.c.b16 %v1268, %v1260
    %v1765 = vpack.c.b16 %v1269, %v1261
    %v1766 = vpack.c.b16 %v1278, %v1270
    %v1767 = vpack.c.b16 %v1279, %v1271
    %v1768 = vpack.c.b16 %v1280, %v1272
    %v1769 = vpack.c.b16 %v1281, %v1273
    %v1770 = vpack.c.b16 %v1282, %v1274
    %v1771 = vpack.c.b16 %v1283, %v1275
    %v1772 = vpack.c.b16 %v1284, %v1276
    %v1773 = vpack.c.b16 %v1285, %v1277
    %v1774 = vpack.c.b16 %v1294, %v1286
    %v1775 = vpack.c.b16 %v1295, %v1287
    %v1776 = vpack.c.b16 %v1296, %v1288
    %v1777 = vpack.c.b16 %v1297, %v1289
    %v1778 = vpack.c.b16 %v1298, %v1290
    %v1779 = vpack.c.b16 %v1299, %v1291
    %v1780 = vpack.c.b16 %v1300, %v1292
    %v1781 = vpack.c.b16 %v1301, %v1293
    %v1782 = vpack.c.b16 %v1310, %v1302
    %v1783 = vpack.c.b16 %v1311, %v1303
    %v1784 = vpack.c.b16 %v1312, %v1304
    %v1785 = vpack.c.b16 %v1313, %v1305
    %v1786 = vpack.c.b16 %v1314, %v1306
    %v1787 = vpack.c.b16 %v1315, %v1307
    %v1788 = vpack.c.b16 %v1316, %v1308
    %v1789 = vpack.c.b16 %v1317, %v1309
    %v1790 = vpack.c.b16 %v1326, %v1318
    %v1791 = vpack.c.b16 %v1327, %v1319
    %v1792 = vpack.c.b16 %v1328, %v1320
    %v1793 = vpack.c.b16 %v1329, %v1321
    %v1794 = vpack.c.b16 %v1330, %v1322
    %v1795 = vpack.c.b16 %v1331, %v1323
    %v1796 = vpack.c.b16 %v1332, %v1324
    %v1797 = vpack.c.b16 %v1333, %v1325
    %v1798 = vpack.c.b16 %v1342, %v1334
    %v1799 = vpack.c.b16 %v1343, %v1335
    %v1800 = vpack.c.b16 %v1344, %v1336
    %v1801 = vpack.c.b16 %v1345, %v1337
    %v1802 = vpack.c.b16 %v1346, %v1338
    %v1803 = vpack.c.b16 %v1347, %v1339
    %v1804 = vpack.c.b16 %v1348, %v1340
    %v1805 = vpack.c.b16 %v1349, %v1341
    %v1806 = vpack.c.b16 %v1358, %v1350
    %v1807 = vpack.c.b16 %v1359, %v1351
    %v1808 = vpack.c.b16 %v1360, %v1352
    %v1809 = vpack.c.b16 %v1361, %v1353
    %v1810 = vpack.c.b16 %v1362, %v1354
    %v1811 = vpack.c.b16 %v1363, %v1355
    %v1812 = vpack.c.b16 %v1364, %v1356
    %v1813 = vpack.c.b16 %v1365, %v1357
    %v1814 = vpack.c.b16 %v1374, %v1366
    %v1815 = vpack.c.b16 %v1375, %v1367
    %v1816 = vpack.c.b16 %v1376, %v1368
    %v1817 = vpack.c.b16 %v1377, %v1369
    %v1818 = vpack.c.b16 %v1378, %v1370
    %v1819 = vpack.c.b16 %v1379, %v1371
    %v1820 = vpack.c.b16 %v1380, %v1372
    %v1821 = vpack.c.b16 %v1381, %v1373
    %v1822 = vpack.c.b16 %v1390, %v1382
    %v1823 = vpack.c.b16 %v1391, %v1383
    %v1824 = vpack.c.b16 %v1392, %v1384
    %v1825 = vpack.c.b16 %v1393, %v1385
    %v1826 = vpack.c.b16 %v1394, %v1386
    %v1827 = vpack.c.b16 %v1395, %v1387
    %v1828 = vpack.c.b16 %v1396, %v1388
    %v1829 = vpack.c.b16 %v1397, %v1389
    %v1830 = vpack.c.b16 %v1406, %v1398
    %v1831 = vpack.c.b16 %v1407, %v1399
    %v1832 = vpack.c.b16 %v1408, %v1400
    %v1833 = vpack.c.b16 %v1409, %v1401
    %v1834 = vpack.c.b16 %v1410, %v1402
    %v1835 = vpack.c.b16 %v1411, %v1403
    %v1836 = vpack.c.b16 %v1412, %v1404
    %v1837 = vpack.c.b16 %v1413, %v1405
    %v1838 = vpack.c.b16 %v1422, %v1414
    %v1839 = vpack.c.b16 %v1423, %v1415
    %v1840 = vpack.c.b16 %v1424, %v1416
    %v1841 = vpack.c.b16 %v1425, %v1417
    %v1842 = vpack.c.b16 %v1426, %v1418
    %v1843 = vpack.c.b16 %v1427, %v1419
    %v1844 = vpack.c.b16 %v1428, %v1420
    %v1845 = vpack.c.b16 %v1429, %v1421
    %v1846 = vpack.c.b16 %v1438, %v1430
    %v1847 = vpack.c.b16 %v1439, %v1431
    %v1848 = vpack.c.b16 %v1440, %v1432
    %v1849 = vpack.c.b16 %v1441, %v1433
    %v1850 = vpack.c.b16 %v1442, %v1434
    %v1851 = vpack.c.b16 %v1443, %v1435
    %v1852 = vpack.c.b16 %v1444, %v1436
    %v1853 = vpack.c.b16 %v1445, %v1437
    %v1854 = vpack.c.b16 %v1454, %v1446
    %v1855 = vpack.c.b16 %v1455, %v1447
    %v1856 = vpack.c.b16 %v1456, %v1448
    %v1857 = vpack.c.b16 %v1457, %v1449
    %v1858 = vpack.c.b16 %v1458, %v1450
    %v1859 = vpack.c.b16 %v1459, %v1451
    %v1860 = vpack.c.b16 %v1460, %v1452
    %v1861 = vpack.c.b16 %v1461, %v1453
    %v1862 = vpack.c.b16 %v1470, %v1462
    %v1863 = vpack.c.b16 %v1471, %v1463
    %v1864 = vpack.c.b16 %v1472, %v1464
    %v1865 = vpack.c.b16 %v1473, %v1465
    %v1866 = vpack.c.b16 %v1474, %v1466
    %v1867 = vpack.c.b16 %v1475, %v1467
    %v1868 = vpack.c.b16 %v1476, %v1468
    %v1869 = vpack.c.b16 %v1477, %v1469
    %v1870 = vpack.c.b16 %v1486, %v1478
    %v1871 = vpack.c.b16 %v1487, %v1479
    %v1872 = vpack.c.b16 %v1488, %v1480
    %v1873 = vpack.c.b16 %v1489, %v1481
    %v1874 = vpack.c.b16 %v1490, %v1482
    %v1875 = vpack.c.b16 %v1491, %v1483
    %v1876 = vpack.c.b16 %v1492, %v1484
    %v1877 = vpack.c.b16 %v1493, %v1485
    %v1878 = vpack.c.b16 %v1502, %v1494
    %v1879 = vpack.c.b16 %v1503, %v1495
    %v1880 = vpack.c.b16 %v1504, %v1496
    %v1881 = vpack.c.b16 %v1505, %v1497
    %v1882 = vpack.c.b16 %v1506, %v1498
    %v1883 = vpack.c.b16 %v1507, %v1499
    %v1884 = vpack.c.b16 %v1508, %v1500
    %v1885 = vpack.c.b16 %v1509, %v1501
    %v1886 = vpack.c.b16 %v1518, %v1510
    %v1887 = vpack.c.b16 %v1519, %v1511
    %v1888 = vpack.c.b16 %v1520, %v1512
    %v1889 = vpack.c.b16 %v1521, %v1513
    %v1890 = vpack.c.b16 %v1522, %v1514
    %v1891 = vpack.c.b16 %v1523, %v1515
    %v1892 = vpack.c.b16 %v1524, %v1516
    %v1893 = vpack.c.b16 %v1525, %v1517
    %v1894 = vpack.c.b16 %v1534, %v1526
    %v1895 = vpack.c.b16 %v1535, %v1527
    %v1896 = vpack.c.b16 %v1536, %v1528
    %v1897 = vpack.c.b16 %v1537, %v1529
    %v1898 = vpack.c.b16 %v1538, %v1530
    %v1899 = vpack.c.b16 %v1539, %v1531
    %v1900 = vpack.c.b16 %v1540, %v1532
    %v1901 = vpack.c.b16 %v1541, %v1533
    %v1902 = vpack.c.b16 %v1550, %v1542
    %v1903 = vpack.c.b16 %v1551, %v1543
    %v1904 = vpack.c.b16 %v1552, %v1544
    %v1905 = vpack.c.b16 %v1553, %v1545
    %v1906 = vpack.c.b16 %v1554, %v1546
    %v1907 = vpack.c.b16 %v1555, %v1547
    %v1908 = vpack.c.b16 %v1556, %v1548
    %v1909 = vpack.c.b16 %v1557, %v1549
    %v1910 = vpack.c.b16 %v1566, %v1558
    %v1911 = vpack.c.b16 %v1567, %v1559
    %v1912 = vpack.c.b16 %v1568, %v1560
    %v1913 = vpack.c.b16 %v1569, %v1561
    %v1914 = vpack.c.b16 %v1570, %v1562
    %v1915 = vpack.c.b16 %v1571, %v1563
    %v1916 = vpack.c.b16 %v1572, %v1564
    %v1917 = vpack.c.b16 %v1573, %v1565
    %v1918 = vpack.c.b16 %v1582, %v1574
    %v1919 = vpack.c.b16 %v1583, %v1575
    %v1920 = vpack.c.b16 %v1584, %v1576
    %v1921 = vpack.c.b16 %v1585, %v1577
    %v1922 = vpack.c.b16 %v1586, %v1578
    %v1923 = vpack.c.b16 %v1587, %v1579
    %v1924 = vpack.c.b16 %v1588, %v1580
    %v1925 = vpack.c.b16 %v1589, %v1581
    %v1926 = vpack.c.b16 %v1598, %v1590
    %v1927 = vpack.c.b16 %v1599, %v1591
    %v1928 = vpack.c.b16 %v1600, %v1592
    %v1929 = vpack.c.b16 %v1601, %v1593
    %v1930 = vpack.c.b16 %v1602, %v1594
    %v1931 = vpack.c.b16 %v1603, %v1595
    %v1932 = vpack.c.b16 %v1604, %v1596
    %v1933 = vpack.c.b16 %v1605, %v1597
    %v1934 = vpack.c.b16 %v1614, %v1606
    %v1935 = vpack.c.b16 %v1615, %v1607
    %v1936 = vpack.c.b16 %v1616, %v1608
    %v1937 = vpack.c.b16 %v1617, %v1609
    %v1938 = vpack.c.b16 %v1618, %v1610
    %v1939 = vpack.c.b16 %v1619, %v1611
    %v1940 = vpack.c.b16 %v1620, %v1612
    %v1941 = vpack.c.b16 %v1621, %v1613
    %v1942 = vpack.c.b16 %v1630, %v1622
    %v1943 = vpack.c.b16 %v1631, %v1623
    %v1944 = vpack.c.b16 %v1632, %v1624
    %v1945 = vpack.c.b16 %v1633, %v1625
    %v1946 = vpack.c.b16 %v1634, %v1626
    %v1947 = vpack.c.b16 %v1635, %v1627
    %v1948 = vpack.c.b16 %v1636, %v1628
    %v1949 = vpack.c.b16 %v1637, %v1629
    %v1950 = vpack.c.b16 %v1646, %v1638
    %v1951 = vpack.c.b16 %v1647, %v1639
    %v1952 = vpack.c.b16 %v1648, %v1640
    %v1953 = vpack.c.b16 %v1649, %v1641
    %v1954 = vpack.c.b16 %v1650, %v1642
    %v1955 = vpack.c.b16 %v1651, %v1643
    %v1956 = vpack.c.b16 %v1652, %v1644
    %v1957 = vpack.c.b16 %v1653, %v1645
    %v1958 = vpack.c.b16 %v1662, %v1654
    %v1959 = vpack.c.b16 %v1663, %v1655
    %v1960 = vpack.c.b16 %v1664, %v1656
    %v1961 = vpack.c.b16 %v1665, %v1657
    %v1962 = vpack.c.b16 %v1666, %v1658
    %v1963 = vpack.c.b16 %v1667, %v1659
    %v1964 = vpack.c.b16 %v1668, %v1660
    %v1965 = vpack.c.b16 %v1669, %v1661
    %v1966 = vpack.c.b16 %v1678, %v1670
    %v1967 = vpack.c.b16 %v1679, %v1671
    %v1968 = vpack.c.b16 %v1680, %v1672
    %v1969 = vpack.c.b16 %v1681, %v1673
    %v1970 = vpack.c.b16 %v1682, %v1674
    %v1971 = vpack.c.b16 %v1683, %v1675
    %v1972 = vpack.c.b16 %v1684, %v1676
    %v1973 = vpack.c.b16 %v1685, %v1677
    %v1974 = vpack.c.b16 %v1694, %v1686
    %v1975 = vpack.c.b16 %v1695, %v1687
    %v1976 = vpack.c.b16 %v1696, %v1688
    %v1977 = vpack.c.b16 %v1697, %v1689
    %v1978 = vpack.c.b16 %v1698, %v1690
    %v1979 = vpack.c.b16 %v1699, %v1691
    %v1980 = vpack.c.b16 %v1700, %v1692
    %v1981 = vpack.c.b16 %v1701, %v1693
    %v1982 = vpack.c.b16 %v1710, %v1702
    %v1983 = vpack.c.b16 %v1711, %v1703
    %v1984 = vpack.c.b16 %v1712, %v1704
    %v1985 = vpack.c.b16 %v1713, %v1705
    %v1986 = vpack.c.b16 %v1714, %v1706
    %v1987 = vpack.c.b16 %v1715, %v1707
    %v1988 = vpack.c.b16 %v1716, %v1708
    %v1989 = vpack.c.b16 %v1717, %v1709
    %v1990 = vpack.c.b16 %v1726, %v1718
    %v1991 = vpack.c.b16 %v1727, %v1719
    %v1992 = vpack.c.b16 %v1728, %v1720
    %v1993 = vpack.c.b16 %v1729, %v1721
    %v1994 = vpack.c.b16 %v1730, %v1722
    %v1995 = vpack.c.b16 %v1731, %v1723
    %v1996 = vpack.c.b16 %v1732, %v1724
    %v1997 = vpack.c.b16 %v1733, %v1725
    %v1998 = vpack.c.b16 %v1742, %v1734
    %v1999 = vpack.c.b16 %v1743, %v1735
    %v2000 = vpack.c.b16 %v1744, %v1736
    %v2001 = vpack.c.b16 %v1745, %v1737
    %v2002 = vpack.c.b16 %v1746, %v1738
    %v2003 = vpack.c.b16 %v1747, %v1739
    %v2004 = vpack.c.b16 %v1748, %v1740
    %v2005 = vpack.c.b16 %v1749, %v1741
    %2262 = vmatprep.subr.bf16.mxu0 %v1751
    %2263 = vmatpush1.bf16.msra.mxu0 %v1750
    %2264 = vmatprep.subr.bf16.mxu0 %v1759
    %2265 = vmatpush1.bf16.msra.mxu0 %v1758
    %2266 = vmatprep.subr.bf16.mxu0 %v1767
    %2267 = vmatpush1.bf16.msra.mxu0 %v1766
    %2268 = vmatprep.subr.bf16.mxu0 %v1775
    %2269 = vmatpush1.bf16.msra.mxu0 %v1774
    %2270 = vmatprep.subr.bf16.mxu0 %v1783
    %2271 = vmatpush1.bf16.msra.mxu0 %v1782
    %2272 = vmatprep.subr.bf16.mxu0 %v1791
    %2273 = vmatpush1.bf16.msra.mxu0 %v1790
    %2274 = vmatprep.subr.bf16.mxu0 %v1799
    %2275 = vmatpush1.bf16.msra.mxu0 %v1798
    %2276 = vmatprep.subr.bf16.mxu0 %v1807
    %2277 = vmatpush1.bf16.msra.mxu0 %v1806
    %2278 = vmatprep.subr.bf16.mxu0 %v1815
    %2279 = vmatpush1.bf16.msra.mxu0 %v1814
    %2280 = vmatprep.subr.bf16.mxu0 %v1823
    %2281 = vmatpush1.bf16.msra.mxu0 %v1822
    %2282 = vmatprep.subr.bf16.mxu0 %v1831
    %2283 = vmatpush1.bf16.msra.mxu0 %v1830
    %2284 = vmatprep.subr.bf16.mxu0 %v1839
    %2285 = vmatpush1.bf16.msra.mxu0 %v1838
    %2286 = vmatprep.subr.bf16.mxu0 %v1847
    %2287 = vmatpush1.bf16.msra.mxu0 %v1846
    %2288 = vmatprep.subr.bf16.mxu0 %v1855
    %2289 = vmatpush1.bf16.msra.mxu0 %v1854
    %2290 = vmatprep.subr.bf16.mxu0 %v1863
    %2291 = vmatpush1.bf16.msra.mxu0 %v1862
    %2292 = vmatprep.subr.bf16.mxu0 %v1871
    %2293 = vmatpush1.bf16.msra.mxu0 %v1870
    %2294 = vmatprep.mubr.bf16.mxu0 %v681
    %2295 = vmatmul.mubr.bf16.gmra.mrb[0].mxu0 %v680
    %v2296 = vpop.f32.mrb[0].mxu0
    %v2297 = vadd.f32 %v945, %v2296
    %v2298 = vpop.f32.mrb[0].mxu0
    %v2299 = vadd.f32 %v949, %v2298
    %v2300 = vpop.f32.mrb[0].mxu0
    %v2301 = vpop.f32.mrb[0].mxu0
    %2302 = vdwg.mxu0
    %2303 = vmatprep.subr.bf16.mxu0 %v1879
    %2304 = vmatpush1.bf16.msra.mxu0 %v1878
    %2305 = vmatprep.subr.bf16.mxu0 %v1887
    %2306 = vmatpush1.bf16.msra.mxu0 %v1886
    %2307 = vmatprep.subr.bf16.mxu0 %v1895
    %2308 = vmatpush1.bf16.msra.mxu0 %v1894
    %2309 = vmatprep.subr.bf16.mxu0 %v1903
    %2310 = vmatpush1.bf16.msra.mxu0 %v1902
    %2311 = vmatprep.subr.bf16.mxu0 %v1911
    %2312 = vmatpush1.bf16.msra.mxu0 %v1910
    %2313 = vmatprep.subr.bf16.mxu0 %v1919
    %2314 = vmatpush1.bf16.msra.mxu0 %v1918
    %2315 = vmatprep.subr.bf16.mxu0 %v1927
    %2316 = vmatpush1.bf16.msra.mxu0 %v1926
    %2317 = vmatprep.subr.bf16.mxu0 %v1935
    %2318 = vmatpush1.bf16.msra.mxu0 %v1934
    %2319 = vmatprep.subr.bf16.mxu0 %v1943
    %2320 = vmatpush1.bf16.msra.mxu0 %v1942
    %2321 = vmatprep.subr.bf16.mxu0 %v1951
    %2322 = vmatpush1.bf16.msra.mxu0 %v1950
    %2323 = vmatprep.subr.bf16.mxu0 %v1959
    %2324 = vmatpush1.bf16.msra.mxu0 %v1958
    %2325 = vmatprep.subr.bf16.mxu0 %v1967
    %2326 = vmatpush1.bf16.msra.mxu0 %v1966
    %2327 = vmatprep.subr.bf16.mxu0 %v1975
    %2328 = vmatpush1.bf16.msra.mxu0 %v1974
    %2329 = vmatprep.subr.bf16.mxu0 %v1983
    %2330 = vmatpush1.bf16.msra.mxu0 %v1982
    %2331 = vmatprep.subr.bf16.mxu0 %v1991
    %2332 = vmatpush1.bf16.msra.mxu0 %v1990
    %2333 = vmatprep.subr.bf16.mxu0 %v1999
    %2334 = vmatpush1.bf16.msra.mxu0 %v1998
    %2335 = vmatprep.mubr.bf16.mxu0 %v683
    %2336 = vmatmul.mubr.bf16.gmra.mrb[0].mxu0 %v682
    %v2337 = vpop.f32.mrb[0].mxu0
    %v2338 = vadd.f32 %v2297, %v2337
    %v2339 = vpop.f32.mrb[0].mxu0
    %v2340 = vadd.f32 %v2299, %v2339
    %v2341 = vpop.f32.mrb[0].mxu0
    %v2342 = vpop.f32.mrb[0].mxu0
    %2343 = vdwg.mxu0
    %2344 = vmatprep.subr.bf16.mxu0 %v1753
    %2345 = vmatpush1.bf16.msra.mxu0 %v1752
    %2346 = vmatprep.subr.bf16.mxu0 %v1761
    %2347 = vmatpush1.bf16.msra.mxu0 %v1760
    %2348 = vmatprep.subr.bf16.mxu0 %v1769
    %2349 = vmatpush1.bf16.msra.mxu0 %v1768
    %2350 = vmatprep.subr.bf16.mxu0 %v1777
    %2351 = vmatpush1.bf16.msra.mxu0 %v1776
    %2352 = vmatprep.subr.bf16.mxu0 %v1785
    %2353 = vmatpush1.bf16.msra.mxu0 %v1784
    %2354 = vmatprep.subr.bf16.mxu0 %v1793
    %2355 = vmatpush1.bf16.msra.mxu0 %v1792
    %2356 = vmatprep.subr.bf16.mxu0 %v1801
    %2357 = vmatpush1.bf16.msra.mxu0 %v1800
    %2358 = vmatprep.subr.bf16.mxu0 %v1809
    %2359 = vmatpush1.bf16.msra.mxu0 %v1808
    %2360 = vmatprep.subr.bf16.mxu0 %v1817
    %2361 = vmatpush1.bf16.msra.mxu0 %v1816
    %2362 = vmatprep.subr.bf16.mxu0 %v1825
    %2363 = vmatpush1.bf16.msra.mxu0 %v1824
    %2364 = vmatprep.subr.bf16.mxu0 %v1833
    %2365 = vmatpush1.bf16.msra.mxu0 %v1832
    %2366 = vmatprep.subr.bf16.mxu0 %v1841
    %2367 = vmatpush1.bf16.msra.mxu0 %v1840
    %2368 = vmatprep.subr.bf16.mxu0 %v1849
    %2369 = vmatpush1.bf16.msra.mxu0 %v1848
    %2370 = vmatprep.subr.bf16.mxu0 %v1857
    %2371 = vmatpush1.bf16.msra.mxu0 %v1856
    %2372 = vmatprep.subr.bf16.mxu0 %v1865
    %2373 = vmatpush1.bf16.msra.mxu0 %v1864
    %2374 = vmatprep.subr.bf16.mxu0 %v1873
    %2375 = vmatpush1.bf16.msra.mxu0 %v1872
    %2376 = vmatprep.mubr.bf16.mxu0 %v681
    %2377 = vmatmul.mubr.bf16.gmra.mrb[0].mxu0 %v680
    %v2378 = vpop.f32.mrb[0].mxu0
    %v2379 = vadd.f32 %v953, %v2378
    %v2380 = vpop.f32.mrb[0].mxu0
    %v2381 = vadd.f32 %v957, %v2380
    %v2382 = vpop.f32.mrb[0].mxu0
    %v2383 = vpop.f32.mrb[0].mxu0
    %2384 = vdwg.mxu0
    %2385 = vmatprep.subr.bf16.mxu0 %v1881
    %2386 = vmatpush1.bf16.msra.mxu0 %v1880
    %2387 = vmatprep.subr.bf16.mxu0 %v1889
    %2388 = vmatpush1.bf16.msra.mxu0 %v1888
    %2389 = vmatprep.subr.bf16.mxu0 %v1897
    %2390 = vmatpush1.bf16.msra.mxu0 %v1896
    %2391 = vmatprep.subr.bf16.mxu0 %v1905
    %2392 = vmatpush1.bf16.msra.mxu0 %v1904
    %2393 = vmatprep.subr.bf16.mxu0 %v1913
    %2394 = vmatpush1.bf16.msra.mxu0 %v1912
    %2395 = vmatprep.subr.bf16.mxu0 %v1921
    %2396 = vmatpush1.bf16.msra.mxu0 %v1920
    %2397 = vmatprep.subr.bf16.mxu0 %v1929
    %2398 = vmatpush1.bf16.msra.mxu0 %v1928
    %2399 = vmatprep.subr.bf16.mxu0 %v1937
    %2400 = vmatpush1.bf16.msra.mxu0 %v1936
    %2401 = vmatprep.subr.bf16.mxu0 %v1945
    %2402 = vmatpush1.bf16.msra.mxu0 %v1944
    %2403 = vmatprep.subr.bf16.mxu0 %v1953
    %2404 = vmatpush1.bf16.msra.mxu0 %v1952
    %2405 = vmatprep.subr.bf16.mxu0 %v1961
    %2406 = vmatpush1.bf16.msra.mxu0 %v1960
    %2407 = vmatprep.subr.bf16.mxu0 %v1969
    %2408 = vmatpush1.bf16.msra.mxu0 %v1968
    %2409 = vmatprep.subr.bf16.mxu0 %v1977
    %2410 = vmatpush1.bf16.msra.mxu0 %v1976
    %2411 = vmatprep.subr.bf16.mxu0 %v1985
    %2412 = vmatpush1.bf16.msra.mxu0 %v1984
    %2413 = vmatprep.subr.bf16.mxu0 %v1993
    %2414 = vmatpush1.bf16.msra.mxu0 %v1992
    %2415 = vmatprep.subr.bf16.mxu0 %v2001
    %2416 = vmatpush1.bf16.msra.mxu0 %v2000
    %2417 = vmatprep.mubr.bf16.mxu0 %v683
    %2418 = vmatmul.mubr.bf16.gmra.mrb[0].mxu0 %v682
    %v2419 = vpop.f32.mrb[0].mxu0
    %v2420 = vadd.f32 %v2379, %v2419
    %v2421 = vpop.f32.mrb[0].mxu0
    %v2422 = vadd.f32 %v2381, %v2421
    %v2423 = vpop.f32.mrb[0].mxu0
    %v2424 = vpop.f32.mrb[0].mxu0
    %2425 = vdwg.mxu0
    %2426 = vmatprep.subr.bf16.mxu0 %v1755
    %2427 = vmatpush1.bf16.msra.mxu0 %v1754
    %2428 = vmatprep.subr.bf16.mxu0 %v1763
    %2429 = vmatpush1.bf16.msra.mxu0 %v1762
    %2430 = vmatprep.subr.bf16.mxu0 %v1771
    %2431 = vmatpush1.bf16.msra.mxu0 %v1770
    %2432 = vmatprep.subr.bf16.mxu0 %v1779
    %2433 = vmatpush1.bf16.msra.mxu0 %v1778
    %2434 = vmatprep.subr.bf16.mxu0 %v1787
    %2435 = vmatpush1.bf16.msra.mxu0 %v1786
    %2436 = vmatprep.subr.bf16.mxu0 %v1795
    %2437 = vmatpush1.bf16.msra.mxu0 %v1794
    %2438 = vmatprep.subr.bf16.mxu0 %v1803
    %2439 = vmatpush1.bf16.msra.mxu0 %v1802
    %2440 = vmatprep.subr.bf16.mxu0 %v1811
    %2441 = vmatpush1.bf16.msra.mxu0 %v1810
    %2442 = vmatprep.subr.bf16.mxu0 %v1819
    %2443 = vmatpush1.bf16.msra.mxu0 %v1818
    %2444 = vmatprep.subr.bf16.mxu0 %v1827
    %2445 = vmatpush1.bf16.msra.mxu0 %v1826
    %2446 = vmatprep.subr.bf16.mxu0 %v1835
    %2447 = vmatpush1.bf16.msra.mxu0 %v1834
    %2448 = vmatprep.subr.bf16.mxu0 %v1843
    %2449 = vmatpush1.bf16.msra.mxu0 %v1842
    %2450 = vmatprep.subr.bf16.mxu0 %v1851
    %2451 = vmatpush1.bf16.msra.mxu0 %v1850
    %2452 = vmatprep.subr.bf16.mxu0 %v1859
    %2453 = vmatpush1.bf16.msra.mxu0 %v1858
    %2454 = vmatprep.subr.bf16.mxu0 %v1867
    %2455 = vmatpush1.bf16.msra.mxu0 %v1866
    %2456 = vmatprep.subr.bf16.mxu0 %v1875
    %2457 = vmatpush1.bf16.msra.mxu0 %v1874
    %2458 = vmatprep.mubr.bf16.mxu0 %v681
    %2459 = vmatmul.mubr.bf16.gmra.mrb[0].mxu0 %v680
    %v2460 = vpop.f32.mrb[0].mxu0
    %v2461 = vadd.f32 %v961, %v2460
    %v2462 = vpop.f32.mrb[0].mxu0
    %v2463 = vadd.f32 %v965, %v2462
    %v2464 = vpop.f32.mrb[0].mxu0
    %v2465 = vpop.f32.mrb[0].mxu0
    %2466 = vdwg.mxu0
    %2467 = vmatprep.subr.bf16.mxu0 %v1883
    %2468 = vmatpush1.bf16.msra.mxu0 %v1882
    %2469 = vmatprep.subr.bf16.mxu0 %v1891
    %2470 = vmatpush1.bf16.msra.mxu0 %v1890
    %2471 = vmatprep.subr.bf16.mxu0 %v1899
    %2472 = vmatpush1.bf16.msra.mxu0 %v1898
    %2473 = vmatprep.subr.bf16.mxu0 %v1907
    %2474 = vmatpush1.bf16.msra.mxu0 %v1906
    %2475 = vmatprep.subr.bf16.mxu0 %v1915
    %2476 = vmatpush1.bf16.msra.mxu0 %v1914
    %2477 = vmatprep.subr.bf16.mxu0 %v1923
    %2478 = vmatpush1.bf16.msra.mxu0 %v1922
    %2479 = vmatprep.subr.bf16.mxu0 %v1931
    %2480 = vmatpush1.bf16.msra.mxu0 %v1930
    %2481 = vmatprep.subr.bf16.mxu0 %v1939
    %2482 = vmatpush1.bf16.msra.mxu0 %v1938
    %2483 = vmatprep.subr.bf16.mxu0 %v1947
    %2484 = vmatpush1.bf16.msra.mxu0 %v1946
    %2485 = vmatprep.subr.bf16.mxu0 %v1955
    %2486 = vmatpush1.bf16.msra.mxu0 %v1954
    %2487 = vmatprep.subr.bf16.mxu0 %v1963
    %2488 = vmatpush1.bf16.msra.mxu0 %v1962
    %2489 = vmatprep.subr.bf16.mxu0 %v1971
    %2490 = vmatpush1.bf16.msra.mxu0 %v1970
    %2491 = vmatprep.subr.bf16.mxu0 %v1979
    %2492 = vmatpush1.bf16.msra.mxu0 %v1978
    %2493 = vmatprep.subr.bf16.mxu0 %v1987
    %2494 = vmatpush1.bf16.msra.mxu0 %v1986
    %2495 = vmatprep.subr.bf16.mxu0 %v1995
    %2496 = vmatpush1.bf16.msra.mxu0 %v1994
    %2497 = vmatprep.subr.bf16.mxu0 %v2003
    %2498 = vmatpush1.bf16.msra.mxu0 %v2002
    %2499 = vmatprep.mubr.bf16.mxu0 %v683
    %2500 = vmatmul.mubr.bf16.gmra.mrb[0].mxu0 %v682
    %v2501 = vpop.f32.mrb[0].mxu0
    %v2502 = vadd.f32 %v2461, %v2501
    %v2503 = vpop.f32.mrb[0].mxu0
    %v2504 = vadd.f32 %v2463, %v2503
    %v2505 = vpop.f32.mrb[0].mxu0
    %v2506 = vpop.f32.mrb[0].mxu0
    %2507 = vdwg.mxu0
    %2508 = vmatprep.subr.bf16.mxu0 %v1757
    %2509 = vmatpush1.bf16.msra.mxu0 %v1756
    %2510 = vmatprep.subr.bf16.mxu0 %v1765
    %2511 = vmatpush1.bf16.msra.mxu0 %v1764
    %2512 = vmatprep.subr.bf16.mxu0 %v1773
    %2513 = vmatpush1.bf16.msra.mxu0 %v1772
    %2514 = vmatprep.subr.bf16.mxu0 %v1781
    %2515 = vmatpush1.bf16.msra.mxu0 %v1780
    %2516 = vmatprep.subr.bf16.mxu0 %v1789
    %2517 = vmatpush1.bf16.msra.mxu0 %v1788
    %2518 = vmatprep.subr.bf16.mxu0 %v1797
    %2519 = vmatpush1.bf16.msra.mxu0 %v1796
    %2520 = vmatprep.subr.bf16.mxu0 %v1805
    %2521 = vmatpush1.bf16.msra.mxu0 %v1804
    %2522 = vmatprep.subr.bf16.mxu0 %v1813
    %2523 = vmatpush1.bf16.msra.mxu0 %v1812
    %2524 = vmatprep.subr.bf16.mxu0 %v1821
    %2525 = vmatpush1.bf16.msra.mxu0 %v1820
    %2526 = vmatprep.subr.bf16.mxu0 %v1829
    %2527 = vmatpush1.bf16.msra.mxu0 %v1828
    %2528 = vmatprep.subr.bf16.mxu0 %v1837
    %2529 = vmatpush1.bf16.msra.mxu0 %v1836
    %2530 = vmatprep.subr.bf16.mxu0 %v1845
    %2531 = vmatpush1.bf16.msra.mxu0 %v1844
    %2532 = vmatprep.subr.bf16.mxu0 %v1853
    %2533 = vmatpush1.bf16.msra.mxu0 %v1852
    %2534 = vmatprep.subr.bf16.mxu0 %v1861
    %2535 = vmatpush1.bf16.msra.mxu0 %v1860
    %2536 = vmatprep.subr.bf16.mxu0 %v1869
    %2537 = vmatpush1.bf16.msra.mxu0 %v1868
    %2538 = vmatprep.subr.bf16.mxu0 %v1877
    %2539 = vmatpush1.bf16.msra.mxu0 %v1876
    %2540 = vmatprep.mubr.bf16.mxu0 %v681
    %2541 = vmatmul.mubr.bf16.gmra.mrb[0].mxu0 %v680
    %v2542 = vpop.f32.mrb[0].mxu0
    %v2543 = vadd.f32 %v969, %v2542
    %v2544 = vpop.f32.mrb[0].mxu0
    %v2545 = vadd.f32 %v973, %v2544
    %v2546 = vpop.f32.mrb[0].mxu0
    %v2547 = vpop.f32.mrb[0].mxu0
    %2548 = vdwg.mxu0
    %2549 = vmatprep.subr.bf16.mxu0 %v1885
    %2550 = vmatpush1.bf16.msra.mxu0 %v1884
    %2551 = vmatprep.subr.bf16.mxu0 %v1893
    %2552 = vmatpush1.bf16.msra.mxu0 %v1892
    %2553 = vmatprep.subr.bf16.mxu0 %v1901
    %2554 = vmatpush1.bf16.msra.mxu0 %v1900
    %2555 = vmatprep.subr.bf16.mxu0 %v1909
    %2556 = vmatpush1.bf16.msra.mxu0 %v1908
    %2557 = vmatprep.subr.bf16.mxu0 %v1917
    %2558 = vmatpush1.bf16.msra.mxu0 %v1916
    %2559 = vmatprep.subr.bf16.mxu0 %v1925
    %2560 = vmatpush1.bf16.msra.mxu0 %v1924
    %2561 = vmatprep.subr.bf16.mxu0 %v1933
    %2562 = vmatpush1.bf16.msra.mxu0 %v1932
    %2563 = vmatprep.subr.bf16.mxu0 %v1941
    %2564 = vmatpush1.bf16.msra.mxu0 %v1940
    %2565 = vmatprep.subr.bf16.mxu0 %v1949
    %2566 = vmatpush1.bf16.msra.mxu0 %v1948
    %2567 = vmatprep.subr.bf16.mxu0 %v1957
    %2568 = vmatpush1.bf16.msra.mxu0 %v1956
    %2569 = vmatprep.subr.bf16.mxu0 %v1965
    %2570 = vmatpush1.bf16.msra.mxu0 %v1964
    %2571 = vmatprep.subr.bf16.mxu0 %v1973
    %2572 = vmatpush1.bf16.msra.mxu0 %v1972
    %2573 = vmatprep.subr.bf16.mxu0 %v1981
    %2574 = vmatpush1.bf16.msra.mxu0 %v1980
    %2575 = vmatprep.subr.bf16.mxu0 %v1989
    %2576 = vmatpush1.bf16.msra.mxu0 %v1988
    %2577 = vmatprep.subr.bf16.mxu0 %v1997
    %2578 = vmatpush1.bf16.msra.mxu0 %v1996
    %2579 = vmatprep.subr.bf16.mxu0 %v2005
    %2580 = vmatpush1.bf16.msra.mxu0 %v2004
    %2581 = vmatprep.mubr.bf16.mxu0 %v683
    %2582 = vmatmul.mubr.bf16.gmra.mrb[0].mxu0 %v682
    %v2583 = vpop.f32.mrb[0].mxu0
    %v2584 = vadd.f32 %v2543, %v2583
    %v2585 = vpop.f32.mrb[0].mxu0
    %v2586 = vadd.f32 %v2545, %v2585
    %v2587 = vpop.f32.mrb[0].mxu0
    %v2588 = vpop.f32.mrb[0].mxu0
    %2589 = vdwg.mxu0
    %v2590 = vmax.f32 %v2338, 0.0
    %v2591 = vmax.f32 %v2340, 0.0
    %v2592 = vmax.f32 %v2420, 0.0
    %v2593 = vmax.f32 %v2422, 0.0
    %v2594 = vmax.f32 %v2502, 0.0
    %v2595 = vmax.f32 %v2504, 0.0
    %v2596 = vmax.f32 %v2584, 0.0
    %v2597 = vmax.f32 %v2586, 0.0
    %v2598 = vpack.c.bf16 %v2590, %v2590
    %v2599 = vpack.c.bf16 %v2591, %v2591
    %v2600 = vpack.c.bf16 %v2592, %v2592
    %v2601 = vpack.c.bf16 %v2593, %v2593
    %v2602 = vpack.c.bf16 %v2594, %v2594
    %v2603 = vpack.c.bf16 %v2595, %v2595
    %v2604 = vpack.c.bf16 %v2596, %v2596
    %v2605 = vpack.c.bf16 %v2597, %v2597
    %v2606 = vld [vmem:[%s7] sm:$0xff]
    %v2607 = vld [vmem:[%s7 + $0x8] sm:$0xff]
    %v2608 = vld [vmem:[%s7 + $0x10] sm:$0xff]
    %v2609 = vld [vmem:[%s7 + $0x18] sm:$0xf]
    %v2610 = vld [vmem:[%s7 + $0x1c] sm:$0xff]
    %v2611 = vld [vmem:[%s7 + $0x24] sm:$0xff]
    %v2612 = vld [vmem:[%s7 + $0x2c] sm:$0xff]
    %v2613 = vld [vmem:[%s7 + $0x34] sm:$0xf]
    %v2614 = vld [vmem:[%s7 + $0x38] sm:$0xff]
    %v2615 = vld [vmem:[%s7 + $0x40] sm:$0xff]
    %v2616 = vld [vmem:[%s7 + $0x48] sm:$0xff]
    %v2617 = vld [vmem:[%s7 + $0x50] sm:$0xf]
    %v2618 = vld [vmem:[%s7 + $0x54] sm:$0xff]
    %v2619 = vld [vmem:[%s7 + $0x5c] sm:$0xff]
    %v2620 = vld [vmem:[%s7 + $0x64] sm:$0xff]
    %v2621 = vld [vmem:[%s7 + $0x6c] sm:$0xf]
    %v2622 = vld [vmem:[%s7 + $0x70] sm:$0xff]
    %v2623 = vld [vmem:[%s7 + $0x78] sm:$0xff]
    %v2624 = vld [vmem:[%s7 + $0x80] sm:$0xff]
    %v2625 = vld [vmem:[%s7 + $0x88] sm:$0xf]
    %v2626 = vld [vmem:[%s7 + $0x8c] sm:$0xff]
    %v2627 = vld [vmem:[%s7 + $0x94] sm:$0xff]
    %v2628 = vld [vmem:[%s7 + $0x9c] sm:$0xff]
    %v2629 = vld [vmem:[%s7 + $0xa4] sm:$0xf]
    %v2630 = vld [vmem:[%s7 + $0xa8] sm:$0xff]
    %v2631 = vld [vmem:[%s7 + $0xb0] sm:$0xff]
    %v2632 = vld [vmem:[%s7 + $0xb8] sm:$0xff]
    %v2633 = vld [vmem:[%s7 + $0xc0] sm:$0xf]
    %v2634 = vld [vmem:[%s7 + $0xc4] sm:$0xff]
    %v2635 = vld [vmem:[%s7 + $0xcc] sm:$0xff]
    %v2636 = vld [vmem:[%s7 + $0xd4] sm:$0xff]
    %v2637 = vld [vmem:[%s7 + $0xdc] sm:$0xf]
    %v2638 = vld [vmem:[%s7 + $0xe0] sm:$0xff]
    %v2639 = vld [vmem:[%s7 + $0xe8] sm:$0xff]
    %v2640 = vld [vmem:[%s7 + $0xf0] sm:$0xff]
    %v2641 = vld [vmem:[%s7 + $0xf8] sm:$0xf]
    %v2642 = vld [vmem:[%s7 + $0xfc] sm:$0xff]
    %v2643 = vld [vmem:[%s7 + $0x104] sm:$0xff]
    %v2644 = vld [vmem:[%s7 + $0x10c] sm:$0xff]
    %v2645 = vld [vmem:[%s7 + $0x114] sm:$0xf]
    %v2646 = vld [vmem:[%s7 + $0x118] sm:$0xff]
    %v2647 = vld [vmem:[%s7 + $0x120] sm:$0xff]
    %v2648 = vld [vmem:[%s7 + $0x128] sm:$0xff]
    %v2649 = vld [vmem:[%s7 + $0x130] sm:$0xf]
    %v2650 = vld [vmem:[%s7 + $0x134] sm:$0xff]
    %v2651 = vld [vmem:[%s7 + $0x13c] sm:$0xff]
    %v2652 = vld [vmem:[%s7 + $0x144] sm:$0xff]
    %v2653 = vld [vmem:[%s7 + $0x14c] sm:$0xf]
    %v2654 = vld [vmem:[%s7 + $0x150] sm:$0xff]
    %v2655 = vld [vmem:[%s7 + $0x158] sm:$0xff]
    %v2656 = vld [vmem:[%s7 + $0x160] sm:$0xff]
    %v2657 = vld [vmem:[%s7 + $0x168] sm:$0xf]
    %v2658 = vld [vmem:[%s7 + $0x16c] sm:$0xff]
    %v2659 = vld [vmem:[%s7 + $0x174] sm:$0xff]
    %v2660 = vld [vmem:[%s7 + $0x17c] sm:$0xff]
    %v2661 = vld [vmem:[%s7 + $0x184] sm:$0xf]
    %v2662 = vld [vmem:[%s7 + $0x188] sm:$0xff]
    %v2663 = vld [vmem:[%s7 + $0x190] sm:$0xff]
    %v2664 = vld [vmem:[%s7 + $0x198] sm:$0xff]
    %v2665 = vld [vmem:[%s7 + $0x1a0] sm:$0xf]
    %v2666 = vld [vmem:[%s7 + $0x1a4] sm:$0xff]
    %v2667 = vld [vmem:[%s7 + $0x1ac] sm:$0xff]
    %v2668 = vld [vmem:[%s7 + $0x1b4] sm:$0xff]
    %v2669 = vld [vmem:[%s7 + $0x1bc] sm:$0xf]
    %v2670 = vld [vmem:[%s7 + $0x1c0] sm:$0xff]
    %v2671 = vld [vmem:[%s7 + $0x1c8] sm:$0xff]
    %v2672 = vld [vmem:[%s7 + $0x1d0] sm:$0xff]
    %v2673 = vld [vmem:[%s7 + $0x1d8] sm:$0xf]
    %v2674 = vld [vmem:[%s7 + $0x1dc] sm:$0xff]
    %v2675 = vld [vmem:[%s7 + $0x1e4] sm:$0xff]
    %v2676 = vld [vmem:[%s7 + $0x1ec] sm:$0xff]
    %v2677 = vld [vmem:[%s7 + $0x1f4] sm:$0xf]
    %v2678 = vld [vmem:[%s7 + $0x1f8] sm:$0xff]
    %v2679 = vld [vmem:[%s7 + $0x200] sm:$0xff]
    %v2680 = vld [vmem:[%s7 + $0x208] sm:$0xff]
    %v2681 = vld [vmem:[%s7 + $0x210] sm:$0xf]
    %v2682 = vld [vmem:[%s7 + $0x214] sm:$0xff]
    %v2683 = vld [vmem:[%s7 + $0x21c] sm:$0xff]
    %v2684 = vld [vmem:[%s7 + $0x224] sm:$0xff]
    %v2685 = vld [vmem:[%s7 + $0x22c] sm:$0xf]
    %v2686 = vld [vmem:[%s7 + $0x230] sm:$0xff]
    %v2687 = vld [vmem:[%s7 + $0x238] sm:$0xff]
    %v2688 = vld [vmem:[%s7 + $0x240] sm:$0xff]
    %v2689 = vld [vmem:[%s7 + $0x248] sm:$0xf]
    %v2690 = vld [vmem:[%s7 + $0x24c] sm:$0xff]
    %v2691 = vld [vmem:[%s7 + $0x254] sm:$0xff]
    %v2692 = vld [vmem:[%s7 + $0x25c] sm:$0xff]
    %v2693 = vld [vmem:[%s7 + $0x264] sm:$0xf]
    %v2694 = vld [vmem:[%s7 + $0x268] sm:$0xff]
    %v2695 = vld [vmem:[%s7 + $0x270] sm:$0xff]
    %v2696 = vld [vmem:[%s7 + $0x278] sm:$0xff]
    %v2697 = vld [vmem:[%s7 + $0x280] sm:$0xf]
    %v2698 = vld [vmem:[%s7 + $0x284] sm:$0xff]
    %v2699 = vld [vmem:[%s7 + $0x28c] sm:$0xff]
    %v2700 = vld [vmem:[%s7 + $0x294] sm:$0xff]
    %v2701 = vld [vmem:[%s7 + $0x29c] sm:$0xf]
    %v2702 = vld [vmem:[%s7 + $0x2a0] sm:$0xff]
    %v2703 = vld [vmem:[%s7 + $0x2a8] sm:$0xff]
    %v2704 = vld [vmem:[%s7 + $0x2b0] sm:$0xff]
    %v2705 = vld [vmem:[%s7 + $0x2b8] sm:$0xf]
    %v2706 = vld [vmem:[%s7 + $0x2bc] sm:$0xff]
    %v2707 = vld [vmem:[%s7 + $0x2c4] sm:$0xff]
    %v2708 = vld [vmem:[%s7 + $0x2cc] sm:$0xff]
    %v2709 = vld [vmem:[%s7 + $0x2d4] sm:$0xf]
    %v2710 = vld [vmem:[%s7 + $0x2d8] sm:$0xff]
    %v2711 = vld [vmem:[%s7 + $0x2e0] sm:$0xff]
    %v2712 = vld [vmem:[%s7 + $0x2e8] sm:$0xff]
    %v2713 = vld [vmem:[%s7 + $0x2f0] sm:$0xf]
    %v2714 = vld [vmem:[%s7 + $0x2f4] sm:$0xff]
    %v2715 = vld [vmem:[%s7 + $0x2fc] sm:$0xff]
    %v2716 = vld [vmem:[%s7 + $0x304] sm:$0xff]
    %v2717 = vld [vmem:[%s7 + $0x30c] sm:$0xf]
    %v2718 = vld [vmem:[%s7 + $0x310] sm:$0xff]
    %v2719 = vld [vmem:[%s7 + $0x318] sm:$0xff]
    %v2720 = vld [vmem:[%s7 + $0x320] sm:$0xff]
    %v2721 = vld [vmem:[%s7 + $0x328] sm:$0xf]
    %v2722 = vld [vmem:[%s7 + $0x32c] sm:$0xff]
    %v2723 = vld [vmem:[%s7 + $0x334] sm:$0xff]
    %v2724 = vld [vmem:[%s7 + $0x33c] sm:$0xff]
    %v2725 = vld [vmem:[%s7 + $0x344] sm:$0xf]
    %v2726 = vld [vmem:[%s7 + $0x348] sm:$0xff]
    %v2727 = vld [vmem:[%s7 + $0x350] sm:$0xff]
    %v2728 = vld [vmem:[%s7 + $0x358] sm:$0xff]
    %v2729 = vld [vmem:[%s7 + $0x360] sm:$0xf]
    %v2730 = vld [vmem:[%s7 + $0x364] sm:$0xff]
    %v2731 = vld [vmem:[%s7 + $0x36c] sm:$0xff]
    %v2732 = vld [vmem:[%s7 + $0x374] sm:$0xff]
    %v2733 = vld [vmem:[%s7 + $0x37c] sm:$0xf]
    %v2734 = vld [vmem:[%s7 + $0x380] sm:$0xff]
    %v2735 = vld [vmem:[%s7 + $0x388] sm:$0xff]
    %v2736 = vld [vmem:[%s7 + $0x390] sm:$0xff]
    %v2737 = vld [vmem:[%s7 + $0x398] sm:$0xf]
    %v2738 = vld [vmem:[%s7 + $0x39c] sm:$0xff]
    %v2739 = vld [vmem:[%s7 + $0x3a4] sm:$0xff]
    %v2740 = vld [vmem:[%s7 + $0x3ac] sm:$0xff]
    %v2741 = vld [vmem:[%s7 + $0x3b4] sm:$0xf]
    %v2742 = vld [vmem:[%s7 + $0x3b8] sm:$0xff]
    %v2743 = vld [vmem:[%s7 + $0x3c0] sm:$0xff]
    %v2744 = vld [vmem:[%s7 + $0x3c8] sm:$0xff]
    %v2745 = vld [vmem:[%s7 + $0x3d0] sm:$0xf]
    %v2746 = vld [vmem:[%s7 + $0x3d4] sm:$0xff]
    %v2747 = vld [vmem:[%s7 + $0x3dc] sm:$0xff]
    %v2748 = vld [vmem:[%s7 + $0x3e4] sm:$0xff]
    %v2749 = vld [vmem:[%s7 + $0x3ec] sm:$0xf]
    %v2750 = vld [vmem:[%s7 + $0x3f0] sm:$0xff]
    %v2751 = vld [vmem:[%s7 + $0x3f8] sm:$0xff]
    %v2752 = vld [vmem:[%s7 + $0x400] sm:$0xff]
    %v2753 = vld [vmem:[%s7 + $0x408] sm:$0xf]
    %v2754 = vld [vmem:[%s7 + $0x40c] sm:$0xff]
    %v2755 = vld [vmem:[%s7 + $0x414] sm:$0xff]
    %v2756 = vld [vmem:[%s7 + $0x41c] sm:$0xff]
    %v2757 = vld [vmem:[%s7 + $0x424] sm:$0xf]
    %v2758 = vld [vmem:[%s7 + $0x428] sm:$0xff]
    %v2759 = vld [vmem:[%s7 + $0x430] sm:$0xff]
    %v2760 = vld [vmem:[%s7 + $0x438] sm:$0xff]
    %v2761 = vld [vmem:[%s7 + $0x440] sm:$0xf]
    %v2762 = vld [vmem:[%s7 + $0x444] sm:$0xff]
    %v2763 = vld [vmem:[%s7 + $0x44c] sm:$0xff]
    %v2764 = vld [vmem:[%s7 + $0x454] sm:$0xff]
    %v2765 = vld [vmem:[%s7 + $0x45c] sm:$0xf]
    %v2766 = vld [vmem:[%s7 + $0x460] sm:$0xff]
    %v2767 = vld [vmem:[%s7 + $0x468] sm:$0xff]
    %v2768 = vld [vmem:[%s7 + $0x470] sm:$0xff]
    %v2769 = vld [vmem:[%s7 + $0x478] sm:$0xf]
    %v2770 = vld [vmem:[%s7 + $0x47c] sm:$0xff]
    %v2771 = vld [vmem:[%s7 + $0x484] sm:$0xff]
    %v2772 = vld [vmem:[%s7 + $0x48c] sm:$0xff]
    %v2773 = vld [vmem:[%s7 + $0x494] sm:$0xf]
    %v2774 = vld [vmem:[%s7 + $0x498] sm:$0xff]
    %v2775 = vld [vmem:[%s7 + $0x4a0] sm:$0xff]
    %v2776 = vld [vmem:[%s7 + $0x4a8] sm:$0xff]
    %v2777 = vld [vmem:[%s7 + $0x4b0] sm:$0xf]
    %v2778 = vld [vmem:[%s7 + $0x4b4] sm:$0xff]
    %v2779 = vld [vmem:[%s7 + $0x4bc] sm:$0xff]
    %v2780 = vld [vmem:[%s7 + $0x4c4] sm:$0xff]
    %v2781 = vld [vmem:[%s7 + $0x4cc] sm:$0xf]
    %v2782 = vld [vmem:[%s7 + $0x4d0] sm:$0xff]
    %v2783 = vld [vmem:[%s7 + $0x4d8] sm:$0xff]
    %v2784 = vld [vmem:[%s7 + $0x4e0] sm:$0xff]
    %v2785 = vld [vmem:[%s7 + $0x4e8] sm:$0xf]
    %v2786 = vld [vmem:[%s7 + $0x4ec] sm:$0xff]
    %v2787 = vld [vmem:[%s7 + $0x4f4] sm:$0xff]
    %v2788 = vld [vmem:[%s7 + $0x4fc] sm:$0xff]
    %v2789 = vld [vmem:[%s7 + $0x504] sm:$0xf]
    %v2790 = vld [vmem:[%s7 + $0x508] sm:$0xff]
    %v2791 = vld [vmem:[%s7 + $0x510] sm:$0xff]
    %v2792 = vld [vmem:[%s7 + $0x518] sm:$0xff]
    %v2793 = vld [vmem:[%s7 + $0x520] sm:$0xf]
    %v2794 = vld [vmem:[%s7 + $0x524] sm:$0xff]
    %v2795 = vld [vmem:[%s7 + $0x52c] sm:$0xff]
    %v2796 = vld [vmem:[%s7 + $0x534] sm:$0xff]
    %v2797 = vld [vmem:[%s7 + $0x53c] sm:$0xf]
    %v2798 = vld [vmem:[%s7 + $0x540] sm:$0xff]
    %v2799 = vld [vmem:[%s7 + $0x548] sm:$0xff]
    %v2800 = vld [vmem:[%s7 + $0x550] sm:$0xff]
    %v2801 = vld [vmem:[%s7 + $0x558] sm:$0xf]
    %v2802 = vld [vmem:[%s7 + $0x55c] sm:$0xff]
    %v2803 = vld [vmem:[%s7 + $0x564] sm:$0xff]
    %v2804 = vld [vmem:[%s7 + $0x56c] sm:$0xff]
    %v2805 = vld [vmem:[%s7 + $0x574] sm:$0xf]
    %v2806 = vld [vmem:[%s7 + $0x578] sm:$0xff]
    %v2807 = vld [vmem:[%s7 + $0x580] sm:$0xff]
    %v2808 = vld [vmem:[%s7 + $0x588] sm:$0xff]
    %v2809 = vld [vmem:[%s7 + $0x590] sm:$0xf]
    %v2810 = vld [vmem:[%s7 + $0x594] sm:$0xff]
    %v2811 = vld [vmem:[%s7 + $0x59c] sm:$0xff]
    %v2812 = vld [vmem:[%s7 + $0x5a4] sm:$0xff]
    %v2813 = vld [vmem:[%s7 + $0x5ac] sm:$0xf]
    %v2814 = vld [vmem:[%s7 + $0x5b0] sm:$0xff]
    %v2815 = vld [vmem:[%s7 + $0x5b8] sm:$0xff]
    %v2816 = vld [vmem:[%s7 + $0x5c0] sm:$0xff]
    %v2817 = vld [vmem:[%s7 + $0x5c8] sm:$0xf]
    %v2818 = vld [vmem:[%s7 + $0x5cc] sm:$0xff]
    %v2819 = vld [vmem:[%s7 + $0x5d4] sm:$0xff]
    %v2820 = vld [vmem:[%s7 + $0x5dc] sm:$0xff]
    %v2821 = vld [vmem:[%s7 + $0x5e4] sm:$0xf]
    %v2822 = vld [vmem:[%s7 + $0x5e8] sm:$0xff]
    %v2823 = vld [vmem:[%s7 + $0x5f0] sm:$0xff]
    %v2824 = vld [vmem:[%s7 + $0x5f8] sm:$0xff]
    %v2825 = vld [vmem:[%s7 + $0x600] sm:$0xf]
    %v2826 = vld [vmem:[%s7 + $0x604] sm:$0xff]
    %v2827 = vld [vmem:[%s7 + $0x60c] sm:$0xff]
    %v2828 = vld [vmem:[%s7 + $0x614] sm:$0xff]
    %v2829 = vld [vmem:[%s7 + $0x61c] sm:$0xf]
    %v2830 = vld [vmem:[%s7 + $0x620] sm:$0xff]
    %v2831 = vld [vmem:[%s7 + $0x628] sm:$0xff]
    %v2832 = vld [vmem:[%s7 + $0x630] sm:$0xff]
    %v2833 = vld [vmem:[%s7 + $0x638] sm:$0xf]
    %v2834 = vld [vmem:[%s7 + $0x63c] sm:$0xff]
    %v2835 = vld [vmem:[%s7 + $0x644] sm:$0xff]
    %v2836 = vld [vmem:[%s7 + $0x64c] sm:$0xff]
    %v2837 = vld [vmem:[%s7 + $0x654] sm:$0xf]
    %v2838 = vld [vmem:[%s7 + $0x658] sm:$0xff]
    %v2839 = vld [vmem:[%s7 + $0x660] sm:$0xff]
    %v2840 = vld [vmem:[%s7 + $0x668] sm:$0xff]
    %v2841 = vld [vmem:[%s7 + $0x670] sm:$0xf]
    %v2842 = vld [vmem:[%s7 + $0x674] sm:$0xff]
    %v2843 = vld [vmem:[%s7 + $0x67c] sm:$0xff]
    %v2844 = vld [vmem:[%s7 + $0x684] sm:$0xff]
    %v2845 = vld [vmem:[%s7 + $0x68c] sm:$0xf]
    %v2846 = vld [vmem:[%s7 + $0x690] sm:$0xff]
    %v2847 = vld [vmem:[%s7 + $0x698] sm:$0xff]
    %v2848 = vld [vmem:[%s7 + $0x6a0] sm:$0xff]
    %v2849 = vld [vmem:[%s7 + $0x6a8] sm:$0xf]
    %v2850 = vld [vmem:[%s7 + $0x6ac] sm:$0xff]
    %v2851 = vld [vmem:[%s7 + $0x6b4] sm:$0xff]
    %v2852 = vld [vmem:[%s7 + $0x6bc] sm:$0xff]
    %v2853 = vld [vmem:[%s7 + $0x6c4] sm:$0xf]
    %v2854 = vld [vmem:[%s7 + $0x6c8] sm:$0xff]
    %v2855 = vld [vmem:[%s7 + $0x6d0] sm:$0xff]
    %v2856 = vld [vmem:[%s7 + $0x6d8] sm:$0xff]
    %v2857 = vld [vmem:[%s7 + $0x6e0] sm:$0xf]
    %v2858 = vld [vmem:[%s7 + $0x6e4] sm:$0xff]
    %v2859 = vld [vmem:[%s7 + $0x6ec] sm:$0xff]
    %v2860 = vld [vmem:[%s7 + $0x6f4] sm:$0xff]
    %v2861 = vld [vmem:[%s7 + $0x6fc] sm:$0xf]
    %v2862 = vld [vmem:[%s7 + $0x700] sm:$0xff]
    %v2863 = vld [vmem:[%s7 + $0x708] sm:$0xff]
    %v2864 = vld [vmem:[%s7 + $0x710] sm:$0xff]
    %v2865 = vld [vmem:[%s7 + $0x718] sm:$0xf]
    %v2866 = vld [vmem:[%s7 + $0x71c] sm:$0xff]
    %v2867 = vld [vmem:[%s7 + $0x724] sm:$0xff]
    %v2868 = vld [vmem:[%s7 + $0x72c] sm:$0xff]
    %v2869 = vld [vmem:[%s7 + $0x734] sm:$0xf]
    %v2870 = vld [vmem:[%s7 + $0x738] sm:$0xff]
    %v2871 = vld [vmem:[%s7 + $0x740] sm:$0xff]
    %v2872 = vld [vmem:[%s7 + $0x748] sm:$0xff]
    %v2873 = vld [vmem:[%s7 + $0x750] sm:$0xf]
    %v2874 = vld [vmem:[%s7 + $0x754] sm:$0xff]
    %v2875 = vld [vmem:[%s7 + $0x75c] sm:$0xff]
    %v2876 = vld [vmem:[%s7 + $0x764] sm:$0xff]
    %v2877 = vld [vmem:[%s7 + $0x76c] sm:$0xf]
    %v2878 = vld [vmem:[%s7 + $0x770] sm:$0xff]
    %v2879 = vld [vmem:[%s7 + $0x778] sm:$0xff]
    %v2880 = vld [vmem:[%s7 + $0x780] sm:$0xff]
    %v2881 = vld [vmem:[%s7 + $0x788] sm:$0xf]
    %v2882 = vld [vmem:[%s7 + $0x78c] sm:$0xff]
    %v2883 = vld [vmem:[%s7 + $0x794] sm:$0xff]
    %v2884 = vld [vmem:[%s7 + $0x79c] sm:$0xff]
    %v2885 = vld [vmem:[%s7 + $0x7a4] sm:$0xf]
    %v2886 = vld [vmem:[%s7 + $0x7a8] sm:$0xff]
    %v2887 = vld [vmem:[%s7 + $0x7b0] sm:$0xff]
    %v2888 = vld [vmem:[%s7 + $0x7b8] sm:$0xff]
    %v2889 = vld [vmem:[%s7 + $0x7c0] sm:$0xf]
    %v2890 = vld [vmem:[%s7 + $0x7c4] sm:$0xff]
    %v2891 = vld [vmem:[%s7 + $0x7cc] sm:$0xff]
    %v2892 = vld [vmem:[%s7 + $0x7d4] sm:$0xff]
    %v2893 = vld [vmem:[%s7 + $0x7dc] sm:$0xf]
    %v2894 = vld [vmem:[%s7 + $0x7e0] sm:$0xff]
    %v2895 = vld [vmem:[%s7 + $0x7e8] sm:$0xff]
    %v2896 = vld [vmem:[%s7 + $0x7f0] sm:$0xff]
    %v2897 = vld [vmem:[%s7 + $0x7f8] sm:$0xf]
    %v2898 = vld [vmem:[%s7 + $0x7fc] sm:$0xff]
    %v2899 = vld [vmem:[%s7 + $0x804] sm:$0xff]
    %v2900 = vld [vmem:[%s7 + $0x80c] sm:$0xff]
    %v2901 = vld [vmem:[%s7 + $0x814] sm:$0xf]
    %v2902 = vld [vmem:[%s7 + $0x818] sm:$0xff]
    %v2903 = vld [vmem:[%s7 + $0x820] sm:$0xff]
    %v2904 = vld [vmem:[%s7 + $0x828] sm:$0xff]
    %v2905 = vld [vmem:[%s7 + $0x830] sm:$0xf]
    %v2906 = vld [vmem:[%s7 + $0x834] sm:$0xff]
    %v2907 = vld [vmem:[%s7 + $0x83c] sm:$0xff]
    %v2908 = vld [vmem:[%s7 + $0x844] sm:$0xff]
    %v2909 = vld [vmem:[%s7 + $0x84c] sm:$0xf]
    %v2910 = vld [vmem:[%s7 + $0x850] sm:$0xff]
    %v2911 = vld [vmem:[%s7 + $0x858] sm:$0xff]
    %v2912 = vld [vmem:[%s7 + $0x860] sm:$0xff]
    %v2913 = vld [vmem:[%s7 + $0x868] sm:$0xf]
    %v2914 = vld [vmem:[%s7 + $0x86c] sm:$0xff]
    %v2915 = vld [vmem:[%s7 + $0x874] sm:$0xff]
    %v2916 = vld [vmem:[%s7 + $0x87c] sm:$0xff]
    %v2917 = vld [vmem:[%s7 + $0x884] sm:$0xf]
    %v2918 = vld [vmem:[%s7 + $0x888] sm:$0xff]
    %v2919 = vld [vmem:[%s7 + $0x890] sm:$0xff]
    %v2920 = vld [vmem:[%s7 + $0x898] sm:$0xff]
    %v2921 = vld [vmem:[%s7 + $0x8a0] sm:$0xf]
    %v2922 = vld [vmem:[%s7 + $0x8a4] sm:$0xff]
    %v2923 = vld [vmem:[%s7 + $0x8ac] sm:$0xff]
    %v2924 = vld [vmem:[%s7 + $0x8b4] sm:$0xff]
    %v2925 = vld [vmem:[%s7 + $0x8bc] sm:$0xf]
    %v2926 = vld [vmem:[%s7 + $0x8c0] sm:$0xff]
    %v2927 = vld [vmem:[%s7 + $0x8c8] sm:$0xff]
    %v2928 = vld [vmem:[%s7 + $0x8d0] sm:$0xff]
    %v2929 = vld [vmem:[%s7 + $0x8d8] sm:$0xf]
    %v2930 = vld [vmem:[%s7 + $0x8dc] sm:$0xff]
    %v2931 = vld [vmem:[%s7 + $0x8e4] sm:$0xff]
    %v2932 = vld [vmem:[%s7 + $0x8ec] sm:$0xff]
    %v2933 = vld [vmem:[%s7 + $0x8f4] sm:$0xf]
    %v2934 = vld [vmem:[%s7 + $0x8f8] sm:$0xff]
    %v2935 = vld [vmem:[%s7 + $0x900] sm:$0xff]
    %v2936 = vld [vmem:[%s7 + $0x908] sm:$0xff]
    %v2937 = vld [vmem:[%s7 + $0x910] sm:$0xf]
    %v2938 = vld [vmem:[%s7 + $0x914] sm:$0xff]
    %v2939 = vld [vmem:[%s7 + $0x91c] sm:$0xff]
    %v2940 = vld [vmem:[%s7 + $0x924] sm:$0xff]
    %v2941 = vld [vmem:[%s7 + $0x92c] sm:$0xf]
    %v2942 = vld [vmem:[%s7 + $0x930] sm:$0xff]
    %v2943 = vld [vmem:[%s7 + $0x938] sm:$0xff]
    %v2944 = vld [vmem:[%s7 + $0x940] sm:$0xff]
    %v2945 = vld [vmem:[%s7 + $0x948] sm:$0xf]
    %v2946 = vld [vmem:[%s7 + $0x94c] sm:$0xff]
    %v2947 = vld [vmem:[%s7 + $0x954] sm:$0xff]
    %v2948 = vld [vmem:[%s7 + $0x95c] sm:$0xff]
    %v2949 = vld [vmem:[%s7 + $0x964] sm:$0xf]
    %v2950 = vld [vmem:[%s7 + $0x968] sm:$0xff]
    %v2951 = vld [vmem:[%s7 + $0x970] sm:$0xff]
    %v2952 = vld [vmem:[%s7 + $0x978] sm:$0xff]
    %v2953 = vld [vmem:[%s7 + $0x980] sm:$0xf]
    %v2954 = vld [vmem:[%s7 + $0x984] sm:$0xff]
    %v2955 = vld [vmem:[%s7 + $0x98c] sm:$0xff]
    %v2956 = vld [vmem:[%s7 + $0x994] sm:$0xff]
    %v2957 = vld [vmem:[%s7 + $0x99c] sm:$0xf]
    %v2958 = vld [vmem:[%s7 + $0x9a0] sm:$0xff]
    %v2959 = vld [vmem:[%s7 + $0x9a8] sm:$0xff]
    %v2960 = vld [vmem:[%s7 + $0x9b0] sm:$0xff]
    %v2961 = vld [vmem:[%s7 + $0x9b8] sm:$0xf]
    %v2962 = vld [vmem:[%s7 + $0x9bc] sm:$0xff]
    %v2963 = vld [vmem:[%s7 + $0x9c4] sm:$0xff]
    %v2964 = vld [vmem:[%s7 + $0x9cc] sm:$0xff]
    %v2965 = vld [vmem:[%s7 + $0x9d4] sm:$0xf]
    %v2966 = vld [vmem:[%s7 + $0x9d8] sm:$0xff]
    %v2967 = vld [vmem:[%s7 + $0x9e0] sm:$0xff]
    %v2968 = vld [vmem:[%s7 + $0x9e8] sm:$0xff]
    %v2969 = vld [vmem:[%s7 + $0x9f0] sm:$0xf]
    %v2970 = vld [vmem:[%s7 + $0x9f4] sm:$0xff]
    %v2971 = vld [vmem:[%s7 + $0x9fc] sm:$0xff]
    %v2972 = vld [vmem:[%s7 + $0xa04] sm:$0xff]
    %v2973 = vld [vmem:[%s7 + $0xa0c] sm:$0xf]
    %v2974 = vld [vmem:[%s7 + $0xa10] sm:$0xff]
    %v2975 = vld [vmem:[%s7 + $0xa18] sm:$0xff]
    %v2976 = vld [vmem:[%s7 + $0xa20] sm:$0xff]
    %v2977 = vld [vmem:[%s7 + $0xa28] sm:$0xf]
    %v2978 = vld [vmem:[%s7 + $0xa2c] sm:$0xff]
    %v2979 = vld [vmem:[%s7 + $0xa34] sm:$0xff]
    %v2980 = vld [vmem:[%s7 + $0xa3c] sm:$0xff]
    %v2981 = vld [vmem:[%s7 + $0xa44] sm:$0xf]
    %v2982 = vld [vmem:[%s7 + $0xa48] sm:$0xff]
    %v2983 = vld [vmem:[%s7 + $0xa50] sm:$0xff]
    %v2984 = vld [vmem:[%s7 + $0xa58] sm:$0xff]
    %v2985 = vld [vmem:[%s7 + $0xa60] sm:$0xf]
    %v2986 = vld [vmem:[%s7 + $0xa64] sm:$0xff]
    %v2987 = vld [vmem:[%s7 + $0xa6c] sm:$0xff]
    %v2988 = vld [vmem:[%s7 + $0xa74] sm:$0xff]
    %v2989 = vld [vmem:[%s7 + $0xa7c] sm:$0xf]
    %v2990 = vld [vmem:[%s7 + $0xa80] sm:$0xff]
    %v2991 = vld [vmem:[%s7 + $0xa88] sm:$0xff]
    %v2992 = vld [vmem:[%s7 + $0xa90] sm:$0xff]
    %v2993 = vld [vmem:[%s7 + $0xa98] sm:$0xf]
    %v2994 = vld [vmem:[%s7 + $0xa9c] sm:$0xff]
    %v2995 = vld [vmem:[%s7 + $0xaa4] sm:$0xff]
    %v2996 = vld [vmem:[%s7 + $0xaac] sm:$0xff]
    %v2997 = vld [vmem:[%s7 + $0xab4] sm:$0xf]
    %v2998 = vld [vmem:[%s7 + $0xab8] sm:$0xff]
    %v2999 = vld [vmem:[%s7 + $0xac0] sm:$0xff]
    %v3000 = vld [vmem:[%s7 + $0xac8] sm:$0xff]
    %v3001 = vld [vmem:[%s7 + $0xad0] sm:$0xf]
    %v3002 = vld [vmem:[%s7 + $0xad4] sm:$0xff]
    %v3003 = vld [vmem:[%s7 + $0xadc] sm:$0xff]
    %v3004 = vld [vmem:[%s7 + $0xae4] sm:$0xff]
    %v3005 = vld [vmem:[%s7 + $0xaec] sm:$0xf]
    %v3006 = vld [vmem:[%s7 + $0xaf0] sm:$0xff]
    %v3007 = vld [vmem:[%s7 + $0xaf8] sm:$0xff]
    %v3008 = vld [vmem:[%s7 + $0xb00] sm:$0xff]
    %v3009 = vld [vmem:[%s7 + $0xb08] sm:$0xf]
    %v3010 = vld [vmem:[%s7 + $0xb0c] sm:$0xff]
    %v3011 = vld [vmem:[%s7 + $0xb14] sm:$0xff]
    %v3012 = vld [vmem:[%s7 + $0xb1c] sm:$0xff]
    %v3013 = vld [vmem:[%s7 + $0xb24] sm:$0xf]
    %v3014 = vld [vmem:[%s7 + $0xb28] sm:$0xff]
    %v3015 = vld [vmem:[%s7 + $0xb30] sm:$0xff]
    %v3016 = vld [vmem:[%s7 + $0xb38] sm:$0xff]
    %v3017 = vld [vmem:[%s7 + $0xb40] sm:$0xf]
    %v3018 = vld [vmem:[%s7 + $0xb44] sm:$0xff]
    %v3019 = vld [vmem:[%s7 + $0xb4c] sm:$0xff]
    %v3020 = vld [vmem:[%s7 + $0xb54] sm:$0xff]
    %v3021 = vld [vmem:[%s7 + $0xb5c] sm:$0xf]
    %v3022 = vld [vmem:[%s7 + $0xb60] sm:$0xff]
    %v3023 = vld [vmem:[%s7 + $0xb68] sm:$0xff]
    %v3024 = vld [vmem:[%s7 + $0xb70] sm:$0xff]
    %v3025 = vld [vmem:[%s7 + $0xb78] sm:$0xf]
    %v3026 = vld [vmem:[%s7 + $0xb7c] sm:$0xff]
    %v3027 = vld [vmem:[%s7 + $0xb84] sm:$0xff]
    %v3028 = vld [vmem:[%s7 + $0xb8c] sm:$0xff]
    %v3029 = vld [vmem:[%s7 + $0xb94] sm:$0xf]
    %v3030 = vld [vmem:[%s7 + $0xb98] sm:$0xff]
    %v3031 = vld [vmem:[%s7 + $0xba0] sm:$0xff]
    %v3032 = vld [vmem:[%s7 + $0xba8] sm:$0xff]
    %v3033 = vld [vmem:[%s7 + $0xbb0] sm:$0xf]
    %v3034 = vld [vmem:[%s7 + $0xbb4] sm:$0xff]
    %v3035 = vld [vmem:[%s7 + $0xbbc] sm:$0xff]
    %v3036 = vld [vmem:[%s7 + $0xbc4] sm:$0xff]
    %v3037 = vld [vmem:[%s7 + $0xbcc] sm:$0xf]
    %v3038 = vld [vmem:[%s7 + $0xbd0] sm:$0xff]
    %v3039 = vld [vmem:[%s7 + $0xbd8] sm:$0xff]
    %v3040 = vld [vmem:[%s7 + $0xbe0] sm:$0xff]
    %v3041 = vld [vmem:[%s7 + $0xbe8] sm:$0xf]
    %v3042 = vld [vmem:[%s7 + $0xbec] sm:$0xff]
    %v3043 = vld [vmem:[%s7 + $0xbf4] sm:$0xff]
    %v3044 = vld [vmem:[%s7 + $0xbfc] sm:$0xff]
    %v3045 = vld [vmem:[%s7 + $0xc04] sm:$0xf]
    %v3046 = vld [vmem:[%s7 + $0xc08] sm:$0xff]
    %v3047 = vld [vmem:[%s7 + $0xc10] sm:$0xff]
    %v3048 = vld [vmem:[%s7 + $0xc18] sm:$0xff]
    %v3049 = vld [vmem:[%s7 + $0xc20] sm:$0xf]
    %v3050 = vld [vmem:[%s7 + $0xc24] sm:$0xff]
    %v3051 = vld [vmem:[%s7 + $0xc2c] sm:$0xff]
    %v3052 = vld [vmem:[%s7 + $0xc34] sm:$0xff]
    %v3053 = vld [vmem:[%s7 + $0xc3c] sm:$0xf]
    %v3054 = vld [vmem:[%s7 + $0xc40] sm:$0xff]
    %v3055 = vld [vmem:[%s7 + $0xc48] sm:$0xff]
    %v3056 = vld [vmem:[%s7 + $0xc50] sm:$0xff]
    %v3057 = vld [vmem:[%s7 + $0xc58] sm:$0xf]
    %v3058 = vld [vmem:[%s7 + $0xc5c] sm:$0xff]
    %v3059 = vld [vmem:[%s7 + $0xc64] sm:$0xff]
    %v3060 = vld [vmem:[%s7 + $0xc6c] sm:$0xff]
    %v3061 = vld [vmem:[%s7 + $0xc74] sm:$0xf]
    %v3062 = vld [vmem:[%s7 + $0xc78] sm:$0xff]
    %v3063 = vld [vmem:[%s7 + $0xc80] sm:$0xff]
    %v3064 = vld [vmem:[%s7 + $0xc88] sm:$0xff]
    %v3065 = vld [vmem:[%s7 + $0xc90] sm:$0xf]
    %v3066 = vld [vmem:[%s7 + $0xc94] sm:$0xff]
    %v3067 = vld [vmem:[%s7 + $0xc9c] sm:$0xff]
    %v3068 = vld [vmem:[%s7 + $0xca4] sm:$0xff]
    %v3069 = vld [vmem:[%s7 + $0xcac] sm:$0xf]
    %v3070 = vld [vmem:[%s7 + $0xcb0] sm:$0xff]
    %v3071 = vld [vmem:[%s7 + $0xcb8] sm:$0xff]
    %v3072 = vld [vmem:[%s7 + $0xcc0] sm:$0xff]
    %v3073 = vld [vmem:[%s7 + $0xcc8] sm:$0xf]
    %v3074 = vld [vmem:[%s7 + $0xccc] sm:$0xff]
    %v3075 = vld [vmem:[%s7 + $0xcd4] sm:$0xff]
    %v3076 = vld [vmem:[%s7 + $0xcdc] sm:$0xff]
    %v3077 = vld [vmem:[%s7 + $0xce4] sm:$0xf]
    %v3078 = vld [vmem:[%s7 + $0xce8] sm:$0xff]
    %v3079 = vld [vmem:[%s7 + $0xcf0] sm:$0xff]
    %v3080 = vld [vmem:[%s7 + $0xcf8] sm:$0xff]
    %v3081 = vld [vmem:[%s7 + $0xd00] sm:$0xf]
    %v3082 = vld [vmem:[%s7 + $0xd04] sm:$0xff]
    %v3083 = vld [vmem:[%s7 + $0xd0c] sm:$0xff]
    %v3084 = vld [vmem:[%s7 + $0xd14] sm:$0xff]
    %v3085 = vld [vmem:[%s7 + $0xd1c] sm:$0xf]
    %v3086 = vld [vmem:[%s7 + $0xd20] sm:$0xff]
    %v3087 = vld [vmem:[%s7 + $0xd28] sm:$0xff]
    %v3088 = vld [vmem:[%s7 + $0xd30] sm:$0xff]
    %v3089 = vld [vmem:[%s7 + $0xd38] sm:$0xf]
    %v3090 = vld [vmem:[%s7 + $0xd3c] sm:$0xff]
    %v3091 = vld [vmem:[%s7 + $0xd44] sm:$0xff]
    %v3092 = vld [vmem:[%s7 + $0xd4c] sm:$0xff]
    %v3093 = vld [vmem:[%s7 + $0xd54] sm:$0xf]
    %v3094 = vld [vmem:[%s7 + $0xd58] sm:$0xff]
    %v3095 = vld [vmem:[%s7 + $0xd60] sm:$0xff]
    %v3096 = vld [vmem:[%s7 + $0xd68] sm:$0xff]
    %v3097 = vld [vmem:[%s7 + $0xd70] sm:$0xf]
    %v3098 = vld [vmem:[%s7 + $0xd74] sm:$0xff]
    %v3099 = vld [vmem:[%s7 + $0xd7c] sm:$0xff]
    %v3100 = vld [vmem:[%s7 + $0xd84] sm:$0xff]
    %v3101 = vld [vmem:[%s7 + $0xd8c] sm:$0xf]
    %v3102 = vld [vmem:[%s7 + $0xd90] sm:$0xff]
    %v3103 = vld [vmem:[%s7 + $0xd98] sm:$0xff]
    %v3104 = vld [vmem:[%s7 + $0xda0] sm:$0xff]
    %v3105 = vld [vmem:[%s7 + $0xda8] sm:$0xf]
    %v3106 = vld [vmem:[%s7 + $0xdac] sm:$0xff]
    %v3107 = vld [vmem:[%s7 + $0xdb4] sm:$0xff]
    %v3108 = vld [vmem:[%s7 + $0xdbc] sm:$0xff]
    %v3109 = vld [vmem:[%s7 + $0xdc4] sm:$0xf]
    %v3110 = vld [vmem:[%s7 + $0xdc8] sm:$0xff]
    %v3111 = vld [vmem:[%s7 + $0xdd0] sm:$0xff]
    %v3112 = vld [vmem:[%s7 + $0xdd8] sm:$0xff]
    %v3113 = vld [vmem:[%s7 + $0xde0] sm:$0xf]
    %v3114 = vld [vmem:[%s7 + $0xde4] sm:$0xff]
    %v3115 = vld [vmem:[%s7 + $0xdec] sm:$0xff]
    %v3116 = vld [vmem:[%s7 + $0xdf4] sm:$0xff]
    %v3117 = vld [vmem:[%s7 + $0xdfc] sm:$0xf]
    %v3118 = vld [vmem:[%s8] sm:$0x7f]
    %v3120 = vlaneseq
    %v3121 = vshrl.u32 %v3120, 7
    %v3122 = vsub.s32 0, %v3121
    %v3123 = vrot.slane %v3118, %v3122
    %v3124 = vlaneseq
    %v3125 = vshrl.u32 %v3124, 7
    %v3126 = vsub.s32 1, %v3125
    %v3127 = vrot.slane %v3118, %v3126
    %v3128 = vlaneseq
    %v3129 = vshrl.u32 %v3128, 7
    %v3130 = vsub.s32 2, %v3129
    %v3131 = vrot.slane %v3118, %v3130
    %v3132 = vlaneseq
    %v3133 = vshrl.u32 %v3132, 7
    %v3134 = vsub.s32 3, %v3133
    %v3135 = vrot.slane %v3118, %v3134
    %v3136 = vlaneseq
    %v3137 = vshrl.u32 %v3136, 7
    %v3138 = vsub.s32 4, %v3137
    %v3139 = vrot.slane %v3118, %v3138
    %v3140 = vlaneseq
    %v3141 = vshrl.u32 %v3140, 7
    %v3142 = vsub.s32 5, %v3141
    %v3143 = vrot.slane %v3118, %v3142
    %v3144 = vlaneseq
    %v3145 = vshrl.u32 %v3144, 7
    %v3146 = vsub.s32 6, %v3145
    %v3147 = vrot.slane %v3118, %v3146
    %v3667 = vunpack.c.l.b16 %v2606
    %v3668 = vunpack.c.h.b16 %v2606
    %v3669 = vunpack.c.l.b16 %v2607
    %v3670 = vunpack.c.h.b16 %v2607
    %v3671 = vunpack.c.l.b16 %v2608
    %v3672 = vunpack.c.h.b16 %v2608
    %v3673 = vunpack.c.l.b16 %v2609
    %v3674 = vunpack.c.l.b16 %v2610
    %v3675 = vunpack.c.h.b16 %v2610
    %v3676 = vunpack.c.l.b16 %v2611
    %v3677 = vunpack.c.h.b16 %v2611
    %v3678 = vunpack.c.l.b16 %v2612
    %v3679 = vunpack.c.h.b16 %v2612
    %v3680 = vunpack.c.l.b16 %v2613
    %v3681 = vunpack.c.l.b16 %v2614
    %v3682 = vunpack.c.h.b16 %v2614
    %v3683 = vunpack.c.l.b16 %v2615
    %v3684 = vunpack.c.h.b16 %v2615
    %v3685 = vunpack.c.l.b16 %v2616
    %v3686 = vunpack.c.h.b16 %v2616
    %v3687 = vunpack.c.l.b16 %v2617
    %v3688 = vunpack.c.l.b16 %v2618
    %v3689 = vunpack.c.h.b16 %v2618
    %v3690 = vunpack.c.l.b16 %v2619
    %v3691 = vunpack.c.h.b16 %v2619
    %v3692 = vunpack.c.l.b16 %v2620
    %v3693 = vunpack.c.h.b16 %v2620
    %v3694 = vunpack.c.l.b16 %v2621
    %v3695 = vunpack.c.l.b16 %v2622
    %v3696 = vunpack.c.h.b16 %v2622
    %v3697 = vunpack.c.l.b16 %v2623
    %v3698 = vunpack.c.h.b16 %v2623
    %v3699 = vunpack.c.l.b16 %v2624
    %v3700 = vunpack.c.h.b16 %v2624
    %v3701 = vunpack.c.l.b16 %v2625
    %v3702 = vunpack.c.l.b16 %v2626
    %v3703 = vunpack.c.h.b16 %v2626
    %v3704 = vunpack.c.l.b16 %v2627
    %v3705 = vunpack.c.h.b16 %v2627
    %v3706 = vunpack.c.l.b16 %v2628
    %v3707 = vunpack.c.h.b16 %v2628
    %v3708 = vunpack.c.l.b16 %v2629
    %v3709 = vunpack.c.l.b16 %v2630
    %v3710 = vunpack.c.h.b16 %v2630
    %v3711 = vunpack.c.l.b16 %v2631
    %v3712 = vunpack.c.h.b16 %v2631
    %v3713 = vunpack.c.l.b16 %v2632
    %v3714 = vunpack.c.h.b16 %v2632
    %v3715 = vunpack.c.l.b16 %v2633
    %v3716 = vunpack.c.l.b16 %v2634
    %v3717 = vunpack.c.h.b16 %v2634
    %v3718 = vunpack.c.l.b16 %v2635
    %v3719 = vunpack.c.h.b16 %v2635
    %v3720 = vunpack.c.l.b16 %v2636
    %v3721 = vunpack.c.h.b16 %v2636
    %v3722 = vunpack.c.l.b16 %v2637
    %v3723 = vunpack.c.l.b16 %v2638
    %v3724 = vunpack.c.h.b16 %v2638
    %v3725 = vunpack.c.l.b16 %v2639
    %v3726 = vunpack.c.h.b16 %v2639
    %v3727 = vunpack.c.l.b16 %v2640
    %v3728 = vunpack.c.h.b16 %v2640
    %v3729 = vunpack.c.l.b16 %v2641
    %v3730 = vunpack.c.l.b16 %v2642
    %v3731 = vunpack.c.h.b16 %v2642
    %v3732 = vunpack.c.l.b16 %v2643
    %v3733 = vunpack.c.h.b16 %v2643
    %v3734 = vunpack.c.l.b16 %v2644
    %v3735 = vunpack.c.h.b16 %v2644
    %v3736 = vunpack.c.l.b16 %v2645
    %v3737 = vunpack.c.l.b16 %v2646
    %v3738 = vunpack.c.h.b16 %v2646
    %v3739 = vunpack.c.l.b16 %v2647
    %v3740 = vunpack.c.h.b16 %v2647
    %v3741 = vunpack.c.l.b16 %v2648
    %v3742 = vunpack.c.h.b16 %v2648
    %v3743 = vunpack.c.l.b16 %v2649
    %v3744 = vunpack.c.l.b16 %v2650
    %v3745 = vunpack.c.h.b16 %v2650
    %v3746 = vunpack.c.l.b16 %v2651
    %v3747 = vunpack.c.h.b16 %v2651
    %v3748 = vunpack.c.l.b16 %v2652
    %v3749 = vunpack.c.h.b16 %v2652
    %v3750 = vunpack.c.l.b16 %v2653
    %v3751 = vunpack.c.l.b16 %v2654
    %v3752 = vunpack.c.h.b16 %v2654
    %v3753 = vunpack.c.l.b16 %v2655
    %v3754 = vunpack.c.h.b16 %v2655
    %v3755 = vunpack.c.l.b16 %v2656
    %v3756 = vunpack.c.h.b16 %v2656
    %v3757 = vunpack.c.l.b16 %v2657
    %v3758 = vunpack.c.l.b16 %v2658
    %v3759 = vunpack.c.h.b16 %v2658
    %v3760 = vunpack.c.l.b16 %v2659
    %v3761 = vunpack.c.h.b16 %v2659
    %v3762 = vunpack.c.l.b16 %v2660
    %v3763 = vunpack.c.h.b16 %v2660
    %v3764 = vunpack.c.l.b16 %v2661
    %v3765 = vunpack.c.l.b16 %v2662
    %v3766 = vunpack.c.h.b16 %v2662
    %v3767 = vunpack.c.l.b16 %v2663
    %v3768 = vunpack.c.h.b16 %v2663
    %v3769 = vunpack.c.l.b16 %v2664
    %v3770 = vunpack.c.h.b16 %v2664
    %v3771 = vunpack.c.l.b16 %v2665
    %v3772 = vunpack.c.l.b16 %v2666
    %v3773 = vunpack.c.h.b16 %v2666
    %v3774 = vunpack.c.l.b16 %v2667
    %v3775 = vunpack.c.h.b16 %v2667
    %v3776 = vunpack.c.l.b16 %v2668
    %v3777 = vunpack.c.h.b16 %v2668
    %v3778 = vunpack.c.l.b16 %v2669
    %v3779 = vunpack.c.l.b16 %v2670
    %v3780 = vunpack.c.h.b16 %v2670
    %v3781 = vunpack.c.l.b16 %v2671
    %v3782 = vunpack.c.h.b16 %v2671
    %v3783 = vunpack.c.l.b16 %v2672
    %v3784 = vunpack.c.h.b16 %v2672
    %v3785 = vunpack.c.l.b16 %v2673
    %v3786 = vunpack.c.l.b16 %v2674
    %v3787 = vunpack.c.h.b16 %v2674
    %v3788 = vunpack.c.l.b16 %v2675
    %v3789 = vunpack.c.h.b16 %v2675
    %v3790 = vunpack.c.l.b16 %v2676
    %v3791 = vunpack.c.h.b16 %v2676
    %v3792 = vunpack.c.l.b16 %v2677
    %v3793 = vunpack.c.l.b16 %v2678
    %v3794 = vunpack.c.h.b16 %v2678
    %v3795 = vunpack.c.l.b16 %v2679
    %v3796 = vunpack.c.h.b16 %v2679
    %v3797 = vunpack.c.l.b16 %v2680
    %v3798 = vunpack.c.h.b16 %v2680
    %v3799 = vunpack.c.l.b16 %v2681
    %v3800 = vunpack.c.l.b16 %v2682
    %v3801 = vunpack.c.h.b16 %v2682
    %v3802 = vunpack.c.l.b16 %v2683
    %v3803 = vunpack.c.h.b16 %v2683
    %v3804 = vunpack.c.l.b16 %v2684
    %v3805 = vunpack.c.h.b16 %v2684
    %v3806 = vunpack.c.l.b16 %v2685
    %v3807 = vunpack.c.l.b16 %v2686
    %v3808 = vunpack.c.h.b16 %v2686
    %v3809 = vunpack.c.l.b16 %v2687
    %v3810 = vunpack.c.h.b16 %v2687
    %v3811 = vunpack.c.l.b16 %v2688
    %v3812 = vunpack.c.h.b16 %v2688
    %v3813 = vunpack.c.l.b16 %v2689
    %v3814 = vunpack.c.l.b16 %v2690
    %v3815 = vunpack.c.h.b16 %v2690
    %v3816 = vunpack.c.l.b16 %v2691
    %v3817 = vunpack.c.h.b16 %v2691
    %v3818 = vunpack.c.l.b16 %v2692
    %v3819 = vunpack.c.h.b16 %v2692
    %v3820 = vunpack.c.l.b16 %v2693
    %v3821 = vunpack.c.l.b16 %v2694
    %v3822 = vunpack.c.h.b16 %v2694
    %v3823 = vunpack.c.l.b16 %v2695
    %v3824 = vunpack.c.h.b16 %v2695
    %v3825 = vunpack.c.l.b16 %v2696
    %v3826 = vunpack.c.h.b16 %v2696
    %v3827 = vunpack.c.l.b16 %v2697
    %v3828 = vunpack.c.l.b16 %v2698
    %v3829 = vunpack.c.h.b16 %v2698
    %v3830 = vunpack.c.l.b16 %v2699
    %v3831 = vunpack.c.h.b16 %v2699
    %v3832 = vunpack.c.l.b16 %v2700
    %v3833 = vunpack.c.h.b16 %v2700
    %v3834 = vunpack.c.l.b16 %v2701
    %v3835 = vunpack.c.l.b16 %v2702
    %v3836 = vunpack.c.h.b16 %v2702
    %v3837 = vunpack.c.l.b16 %v2703
    %v3838 = vunpack.c.h.b16 %v2703
    %v3839 = vunpack.c.l.b16 %v2704
    %v3840 = vunpack.c.h.b16 %v2704
    %v3841 = vunpack.c.l.b16 %v2705
    %v3842 = vunpack.c.l.b16 %v2706
    %v3843 = vunpack.c.h.b16 %v2706
    %v3844 = vunpack.c.l.b16 %v2707
    %v3845 = vunpack.c.h.b16 %v2707
    %v3846 = vunpack.c.l.b16 %v2708
    %v3847 = vunpack.c.h.b16 %v2708
    %v3848 = vunpack.c.l.b16 %v2709
    %v3849 = vunpack.c.l.b16 %v2710
    %v3850 = vunpack.c.h.b16 %v2710
    %v3851 = vunpack.c.l.b16 %v2711
    %v3852 = vunpack.c.h.b16 %v2711
    %v3853 = vunpack.c.l.b16 %v2712
    %v3854 = vunpack.c.h.b16 %v2712
    %v3855 = vunpack.c.l.b16 %v2713
    %v3856 = vunpack.c.l.b16 %v2714
    %v3857 = vunpack.c.h.b16 %v2714
    %v3858 = vunpack.c.l.b16 %v2715
    %v3859 = vunpack.c.h.b16 %v2715
    %v3860 = vunpack.c.l.b16 %v2716
    %v3861 = vunpack.c.h.b16 %v2716
    %v3862 = vunpack.c.l.b16 %v2717
    %v3863 = vunpack.c.l.b16 %v2718
    %v3864 = vunpack.c.h.b16 %v2718
    %v3865 = vunpack.c.l.b16 %v2719
    %v3866 = vunpack.c.h.b16 %v2719
    %v3867 = vunpack.c.l.b16 %v2720
    %v3868 = vunpack.c.h.b16 %v2720
    %v3869 = vunpack.c.l.b16 %v2721
    %v3870 = vunpack.c.l.b16 %v2722
    %v3871 = vunpack.c.h.b16 %v2722
    %v3872 = vunpack.c.l.b16 %v2723
    %v3873 = vunpack.c.h.b16 %v2723
    %v3874 = vunpack.c.l.b16 %v2724
    %v3875 = vunpack.c.h.b16 %v2724
    %v3876 = vunpack.c.l.b16 %v2725
    %v3877 = vunpack.c.l.b16 %v2726
    %v3878 = vunpack.c.h.b16 %v2726
    %v3879 = vunpack.c.l.b16 %v2727
    %v3880 = vunpack.c.h.b16 %v2727
    %v3881 = vunpack.c.l.b16 %v2728
    %v3882 = vunpack.c.h.b16 %v2728
    %v3883 = vunpack.c.l.b16 %v2729
    %v3884 = vunpack.c.l.b16 %v2730
    %v3885 = vunpack.c.h.b16 %v2730
    %v3886 = vunpack.c.l.b16 %v2731
    %v3887 = vunpack.c.h.b16 %v2731
    %v3888 = vunpack.c.l.b16 %v2732
    %v3889 = vunpack.c.h.b16 %v2732
    %v3890 = vunpack.c.l.b16 %v2733
    %v3891 = vunpack.c.l.b16 %v2734
    %v3892 = vunpack.c.h.b16 %v2734
    %v3893 = vunpack.c.l.b16 %v2735
    %v3894 = vunpack.c.h.b16 %v2735
    %v3895 = vunpack.c.l.b16 %v2736
    %v3896 = vunpack.c.h.b16 %v2736
    %v3897 = vunpack.c.l.b16 %v2737
    %v3898 = vunpack.c.l.b16 %v2738
    %v3899 = vunpack.c.h.b16 %v2738
    %v3900 = vunpack.c.l.b16 %v2739
    %v3901 = vunpack.c.h.b16 %v2739
    %v3902 = vunpack.c.l.b16 %v2740
    %v3903 = vunpack.c.h.b16 %v2740
    %v3904 = vunpack.c.l.b16 %v2741
    %v3905 = vunpack.c.l.b16 %v2742
    %v3906 = vunpack.c.h.b16 %v2742
    %v3907 = vunpack.c.l.b16 %v2743
    %v3908 = vunpack.c.h.b16 %v2743
    %v3909 = vunpack.c.l.b16 %v2744
    %v3910 = vunpack.c.h.b16 %v2744
    %v3911 = vunpack.c.l.b16 %v2745
    %v3912 = vunpack.c.l.b16 %v2746
    %v3913 = vunpack.c.h.b16 %v2746
    %v3914 = vunpack.c.l.b16 %v2747
    %v3915 = vunpack.c.h.b16 %v2747
    %v3916 = vunpack.c.l.b16 %v2748
    %v3917 = vunpack.c.h.b16 %v2748
    %v3918 = vunpack.c.l.b16 %v2749
    %v3919 = vunpack.c.l.b16 %v2750
    %v3920 = vunpack.c.h.b16 %v2750
    %v3921 = vunpack.c.l.b16 %v2751
    %v3922 = vunpack.c.h.b16 %v2751
    %v3923 = vunpack.c.l.b16 %v2752
    %v3924 = vunpack.c.h.b16 %v2752
    %v3925 = vunpack.c.l.b16 %v2753
    %v3926 = vunpack.c.l.b16 %v2754
    %v3927 = vunpack.c.h.b16 %v2754
    %v3928 = vunpack.c.l.b16 %v2755
    %v3929 = vunpack.c.h.b16 %v2755
    %v3930 = vunpack.c.l.b16 %v2756
    %v3931 = vunpack.c.h.b16 %v2756
    %v3932 = vunpack.c.l.b16 %v2757
    %v3933 = vunpack.c.l.b16 %v2758
    %v3934 = vunpack.c.h.b16 %v2758
    %v3935 = vunpack.c.l.b16 %v2759
    %v3936 = vunpack.c.h.b16 %v2759
    %v3937 = vunpack.c.l.b16 %v2760
    %v3938 = vunpack.c.h.b16 %v2760
    %v3939 = vunpack.c.l.b16 %v2761
    %v3940 = vunpack.c.l.b16 %v2762
    %v3941 = vunpack.c.h.b16 %v2762
    %v3942 = vunpack.c.l.b16 %v2763
    %v3943 = vunpack.c.h.b16 %v2763
    %v3944 = vunpack.c.l.b16 %v2764
    %v3945 = vunpack.c.h.b16 %v2764
    %v3946 = vunpack.c.l.b16 %v2765
    %v3947 = vunpack.c.l.b16 %v2766
    %v3948 = vunpack.c.h.b16 %v2766
    %v3949 = vunpack.c.l.b16 %v2767
    %v3950 = vunpack.c.h.b16 %v2767
    %v3951 = vunpack.c.l.b16 %v2768
    %v3952 = vunpack.c.h.b16 %v2768
    %v3953 = vunpack.c.l.b16 %v2769
    %v3954 = vunpack.c.l.b16 %v2770
    %v3955 = vunpack.c.h.b16 %v2770
    %v3956 = vunpack.c.l.b16 %v2771
    %v3957 = vunpack.c.h.b16 %v2771
    %v3958 = vunpack.c.l.b16 %v2772
    %v3959 = vunpack.c.h.b16 %v2772
    %v3960 = vunpack.c.l.b16 %v2773
    %v3961 = vunpack.c.l.b16 %v2774
    %v3962 = vunpack.c.h.b16 %v2774
    %v3963 = vunpack.c.l.b16 %v2775
    %v3964 = vunpack.c.h.b16 %v2775
    %v3965 = vunpack.c.l.b16 %v2776
    %v3966 = vunpack.c.h.b16 %v2776
    %v3967 = vunpack.c.l.b16 %v2777
    %v3968 = vunpack.c.l.b16 %v2778
    %v3969 = vunpack.c.h.b16 %v2778
    %v3970 = vunpack.c.l.b16 %v2779
    %v3971 = vunpack.c.h.b16 %v2779
    %v3972 = vunpack.c.l.b16 %v2780
    %v3973 = vunpack.c.h.b16 %v2780
    %v3974 = vunpack.c.l.b16 %v2781
    %v3975 = vunpack.c.l.b16 %v2782
    %v3976 = vunpack.c.h.b16 %v2782
    %v3977 = vunpack.c.l.b16 %v2783
    %v3978 = vunpack.c.h.b16 %v2783
    %v3979 = vunpack.c.l.b16 %v2784
    %v3980 = vunpack.c.h.b16 %v2784
    %v3981 = vunpack.c.l.b16 %v2785
    %v3982 = vunpack.c.l.b16 %v2786
    %v3983 = vunpack.c.h.b16 %v2786
    %v3984 = vunpack.c.l.b16 %v2787
    %v3985 = vunpack.c.h.b16 %v2787
    %v3986 = vunpack.c.l.b16 %v2788
    %v3987 = vunpack.c.h.b16 %v2788
    %v3988 = vunpack.c.l.b16 %v2789
    %v3989 = vunpack.c.l.b16 %v2790
    %v3990 = vunpack.c.h.b16 %v2790
    %v3991 = vunpack.c.l.b16 %v2791
    %v3992 = vunpack.c.h.b16 %v2791
    %v3993 = vunpack.c.l.b16 %v2792
    %v3994 = vunpack.c.h.b16 %v2792
    %v3995 = vunpack.c.l.b16 %v2793
    %v3996 = vunpack.c.l.b16 %v2794
    %v3997 = vunpack.c.h.b16 %v2794
    %v3998 = vunpack.c.l.b16 %v2795
    %v3999 = vunpack.c.h.b16 %v2795
    %v4000 = vunpack.c.l.b16 %v2796
    %v4001 = vunpack.c.h.b16 %v2796
    %v4002 = vunpack.c.l.b16 %v2797
    %v4003 = vunpack.c.l.b16 %v2798
    %v4004 = vunpack.c.h.b16 %v2798
    %v4005 = vunpack.c.l.b16 %v2799
    %v4006 = vunpack.c.h.b16 %v2799
    %v4007 = vunpack.c.l.b16 %v2800
    %v4008 = vunpack.c.h.b16 %v2800
    %v4009 = vunpack.c.l.b16 %v2801
    %v4010 = vunpack.c.l.b16 %v2802
    %v4011 = vunpack.c.h.b16 %v2802
    %v4012 = vunpack.c.l.b16 %v2803
    %v4013 = vunpack.c.h.b16 %v2803
    %v4014 = vunpack.c.l.b16 %v2804
    %v4015 = vunpack.c.h.b16 %v2804
    %v4016 = vunpack.c.l.b16 %v2805
    %v4017 = vunpack.c.l.b16 %v2806
    %v4018 = vunpack.c.h.b16 %v2806
    %v4019 = vunpack.c.l.b16 %v2807
    %v4020 = vunpack.c.h.b16 %v2807
    %v4021 = vunpack.c.l.b16 %v2808
    %v4022 = vunpack.c.h.b16 %v2808
    %v4023 = vunpack.c.l.b16 %v2809
    %v4024 = vunpack.c.l.b16 %v2810
    %v4025 = vunpack.c.h.b16 %v2810
    %v4026 = vunpack.c.l.b16 %v2811
    %v4027 = vunpack.c.h.b16 %v2811
    %v4028 = vunpack.c.l.b16 %v2812
    %v4029 = vunpack.c.h.b16 %v2812
    %v4030 = vunpack.c.l.b16 %v2813
    %v4031 = vunpack.c.l.b16 %v2814
    %v4032 = vunpack.c.h.b16 %v2814
    %v4033 = vunpack.c.l.b16 %v2815
    %v4034 = vunpack.c.h.b16 %v2815
    %v4035 = vunpack.c.l.b16 %v2816
    %v4036 = vunpack.c.h.b16 %v2816
    %v4037 = vunpack.c.l.b16 %v2817
    %v4038 = vunpack.c.l.b16 %v2818
    %v4039 = vunpack.c.h.b16 %v2818
    %v4040 = vunpack.c.l.b16 %v2819
    %v4041 = vunpack.c.h.b16 %v2819
    %v4042 = vunpack.c.l.b16 %v2820
    %v4043 = vunpack.c.h.b16 %v2820
    %v4044 = vunpack.c.l.b16 %v2821
    %v4045 = vunpack.c.l.b16 %v2822
    %v4046 = vunpack.c.h.b16 %v2822
    %v4047 = vunpack.c.l.b16 %v2823
    %v4048 = vunpack.c.h.b16 %v2823
    %v4049 = vunpack.c.l.b16 %v2824
    %v4050 = vunpack.c.h.b16 %v2824
    %v4051 = vunpack.c.l.b16 %v2825
    %v4052 = vunpack.c.l.b16 %v2826
    %v4053 = vunpack.c.h.b16 %v2826
    %v4054 = vunpack.c.l.b16 %v2827
    %v4055 = vunpack.c.h.b16 %v2827
    %v4056 = vunpack.c.l.b16 %v2828
    %v4057 = vunpack.c.h.b16 %v2828
    %v4058 = vunpack.c.l.b16 %v2829
    %v4059 = vunpack.c.l.b16 %v2830
    %v4060 = vunpack.c.h.b16 %v2830
    %v4061 = vunpack.c.l.b16 %v2831
    %v4062 = vunpack.c.h.b16 %v2831
    %v4063 = vunpack.c.l.b16 %v2832
    %v4064 = vunpack.c.h.b16 %v2832
    %v4065 = vunpack.c.l.b16 %v2833
    %v4066 = vunpack.c.l.b16 %v2834
    %v4067 = vunpack.c.h.b16 %v2834
    %v4068 = vunpack.c.l.b16 %v2835
    %v4069 = vunpack.c.h.b16 %v2835
    %v4070 = vunpack.c.l.b16 %v2836
    %v4071 = vunpack.c.h.b16 %v2836
    %v4072 = vunpack.c.l.b16 %v2837
    %v4073 = vunpack.c.l.b16 %v2838
    %v4074 = vunpack.c.h.b16 %v2838
    %v4075 = vunpack.c.l.b16 %v2839
    %v4076 = vunpack.c.h.b16 %v2839
    %v4077 = vunpack.c.l.b16 %v2840
    %v4078 = vunpack.c.h.b16 %v2840
    %v4079 = vunpack.c.l.b16 %v2841
    %v4080 = vunpack.c.l.b16 %v2842
    %v4081 = vunpack.c.h.b16 %v2842
    %v4082 = vunpack.c.l.b16 %v2843
    %v4083 = vunpack.c.h.b16 %v2843
    %v4084 = vunpack.c.l.b16 %v2844
    %v4085 = vunpack.c.h.b16 %v2844
    %v4086 = vunpack.c.l.b16 %v2845
    %v4087 = vunpack.c.l.b16 %v2846
    %v4088 = vunpack.c.h.b16 %v2846
    %v4089 = vunpack.c.l.b16 %v2847
    %v4090 = vunpack.c.h.b16 %v2847
    %v4091 = vunpack.c.l.b16 %v2848
    %v4092 = vunpack.c.h.b16 %v2848
    %v4093 = vunpack.c.l.b16 %v2849
    %v4094 = vunpack.c.l.b16 %v2850
    %v4095 = vunpack.c.h.b16 %v2850
    %v4096 = vunpack.c.l.b16 %v2851
    %v4097 = vunpack.c.h.b16 %v2851
    %v4098 = vunpack.c.l.b16 %v2852
    %v4099 = vunpack.c.h.b16 %v2852
    %v4100 = vunpack.c.l.b16 %v2853
    %v4101 = vunpack.c.l.b16 %v2854
    %v4102 = vunpack.c.h.b16 %v2854
    %v4103 = vunpack.c.l.b16 %v2855
    %v4104 = vunpack.c.h.b16 %v2855
    %v4105 = vunpack.c.l.b16 %v2856
    %v4106 = vunpack.c.h.b16 %v2856
    %v4107 = vunpack.c.l.b16 %v2857
    %v4108 = vunpack.c.l.b16 %v2858
    %v4109 = vunpack.c.h.b16 %v2858
    %v4110 = vunpack.c.l.b16 %v2859
    %v4111 = vunpack.c.h.b16 %v2859
    %v4112 = vunpack.c.l.b16 %v2860
    %v4113 = vunpack.c.h.b16 %v2860
    %v4114 = vunpack.c.l.b16 %v2861
    %v4115 = vunpack.c.l.b16 %v2862
    %v4116 = vunpack.c.h.b16 %v2862
    %v4117 = vunpack.c.l.b16 %v2863
    %v4118 = vunpack.c.h.b16 %v2863
    %v4119 = vunpack.c.l.b16 %v2864
    %v4120 = vunpack.c.h.b16 %v2864
    %v4121 = vunpack.c.l.b16 %v2865
    %v4122 = vunpack.c.l.b16 %v2866
    %v4123 = vunpack.c.h.b16 %v2866
    %v4124 = vunpack.c.l.b16 %v2867
    %v4125 = vunpack.c.h.b16 %v2867
    %v4126 = vunpack.c.l.b16 %v2868
    %v4127 = vunpack.c.h.b16 %v2868
    %v4128 = vunpack.c.l.b16 %v2869
    %v4129 = vunpack.c.l.b16 %v2870
    %v4130 = vunpack.c.h.b16 %v2870
    %v4131 = vunpack.c.l.b16 %v2871
    %v4132 = vunpack.c.h.b16 %v2871
    %v4133 = vunpack.c.l.b16 %v2872
    %v4134 = vunpack.c.h.b16 %v2872
    %v4135 = vunpack.c.l.b16 %v2873
    %v4136 = vunpack.c.l.b16 %v2874
    %v4137 = vunpack.c.h.b16 %v2874
    %v4138 = vunpack.c.l.b16 %v2875
    %v4139 = vunpack.c.h.b16 %v2875
    %v4140 = vunpack.c.l.b16 %v2876
    %v4141 = vunpack.c.h.b16 %v2876
    %v4142 = vunpack.c.l.b16 %v2877
    %v4143 = vunpack.c.l.b16 %v2878
    %v4144 = vunpack.c.h.b16 %v2878
    %v4145 = vunpack.c.l.b16 %v2879
    %v4146 = vunpack.c.h.b16 %v2879
    %v4147 = vunpack.c.l.b16 %v2880
    %v4148 = vunpack.c.h.b16 %v2880
    %v4149 = vunpack.c.l.b16 %v2881
    %v4150 = vunpack.c.l.b16 %v2882
    %v4151 = vunpack.c.h.b16 %v2882
    %v4152 = vunpack.c.l.b16 %v2883
    %v4153 = vunpack.c.h.b16 %v2883
    %v4154 = vunpack.c.l.b16 %v2884
    %v4155 = vunpack.c.h.b16 %v2884
    %v4156 = vunpack.c.l.b16 %v2885
    %v4157 = vunpack.c.l.b16 %v2886
    %v4158 = vunpack.c.h.b16 %v2886
    %v4159 = vunpack.c.l.b16 %v2887
    %v4160 = vunpack.c.h.b16 %v2887
    %v4161 = vunpack.c.l.b16 %v2888
    %v4162 = vunpack.c.h.b16 %v2888
    %v4163 = vunpack.c.l.b16 %v2889
    %v4164 = vunpack.c.l.b16 %v2890
    %v4165 = vunpack.c.h.b16 %v2890
    %v4166 = vunpack.c.l.b16 %v2891
    %v4167 = vunpack.c.h.b16 %v2891
    %v4168 = vunpack.c.l.b16 %v2892
    %v4169 = vunpack.c.h.b16 %v2892
    %v4170 = vunpack.c.l.b16 %v2893
    %v4171 = vunpack.c.l.b16 %v2894
    %v4172 = vunpack.c.h.b16 %v2894
    %v4173 = vunpack.c.l.b16 %v2895
    %v4174 = vunpack.c.h.b16 %v2895
    %v4175 = vunpack.c.l.b16 %v2896
    %v4176 = vunpack.c.h.b16 %v2896
    %v4177 = vunpack.c.l.b16 %v2897
    %v4178 = vunpack.c.l.b16 %v2898
    %v4179 = vunpack.c.h.b16 %v2898
    %v4180 = vunpack.c.l.b16 %v2899
    %v4181 = vunpack.c.h.b16 %v2899
    %v4182 = vunpack.c.l.b16 %v2900
    %v4183 = vunpack.c.h.b16 %v2900
    %v4184 = vunpack.c.l.b16 %v2901
    %v4185 = vunpack.c.l.b16 %v2902
    %v4186 = vunpack.c.h.b16 %v2902
    %v4187 = vunpack.c.l.b16 %v2903
    %v4188 = vunpack.c.h.b16 %v2903
    %v4189 = vunpack.c.l.b16 %v2904
    %v4190 = vunpack.c.h.b16 %v2904
    %v4191 = vunpack.c.l.b16 %v2905
    %v4192 = vunpack.c.l.b16 %v2906
    %v4193 = vunpack.c.h.b16 %v2906
    %v4194 = vunpack.c.l.b16 %v2907
    %v4195 = vunpack.c.h.b16 %v2907
    %v4196 = vunpack.c.l.b16 %v2908
    %v4197 = vunpack.c.h.b16 %v2908
    %v4198 = vunpack.c.l.b16 %v2909
    %v4199 = vunpack.c.l.b16 %v2910
    %v4200 = vunpack.c.h.b16 %v2910
    %v4201 = vunpack.c.l.b16 %v2911
    %v4202 = vunpack.c.h.b16 %v2911
    %v4203 = vunpack.c.l.b16 %v2912
    %v4204 = vunpack.c.h.b16 %v2912
    %v4205 = vunpack.c.l.b16 %v2913
    %v4206 = vunpack.c.l.b16 %v2914
    %v4207 = vunpack.c.h.b16 %v2914
    %v4208 = vunpack.c.l.b16 %v2915
    %v4209 = vunpack.c.h.b16 %v2915
    %v4210 = vunpack.c.l.b16 %v2916
    %v4211 = vunpack.c.h.b16 %v2916
    %v4212 = vunpack.c.l.b16 %v2917
    %v4213 = vunpack.c.l.b16 %v2918
    %v4214 = vunpack.c.h.b16 %v2918
    %v4215 = vunpack.c.l.b16 %v2919
    %v4216 = vunpack.c.h.b16 %v2919
    %v4217 = vunpack.c.l.b16 %v2920
    %v4218 = vunpack.c.h.b16 %v2920
    %v4219 = vunpack.c.l.b16 %v2921
    %v4220 = vunpack.c.l.b16 %v2922
    %v4221 = vunpack.c.h.b16 %v2922
    %v4222 = vunpack.c.l.b16 %v2923
    %v4223 = vunpack.c.h.b16 %v2923
    %v4224 = vunpack.c.l.b16 %v2924
    %v4225 = vunpack.c.h.b16 %v2924
    %v4226 = vunpack.c.l.b16 %v2925
    %v4227 = vunpack.c.l.b16 %v2926
    %v4228 = vunpack.c.h.b16 %v2926
    %v4229 = vunpack.c.l.b16 %v2927
    %v4230 = vunpack.c.h.b16 %v2927
    %v4231 = vunpack.c.l.b16 %v2928
    %v4232 = vunpack.c.h.b16 %v2928
    %v4233 = vunpack.c.l.b16 %v2929
    %v4234 = vunpack.c.l.b16 %v2930
    %v4235 = vunpack.c.h.b16 %v2930
    %v4236 = vunpack.c.l.b16 %v2931
    %v4237 = vunpack.c.h.b16 %v2931
    %v4238 = vunpack.c.l.b16 %v2932
    %v4239 = vunpack.c.h.b16 %v2932
    %v4240 = vunpack.c.l.b16 %v2933
    %v4241 = vunpack.c.l.b16 %v2934
    %v4242 = vunpack.c.h.b16 %v2934
    %v4243 = vunpack.c.l.b16 %v2935
    %v4244 = vunpack.c.h.b16 %v2935
    %v4245 = vunpack.c.l.b16 %v2936
    %v4246 = vunpack.c.h.b16 %v2936
    %v4247 = vunpack.c.l.b16 %v2937
    %v4248 = vunpack.c.l.b16 %v2938
    %v4249 = vunpack.c.h.b16 %v2938
    %v4250 = vunpack.c.l.b16 %v2939
    %v4251 = vunpack.c.h.b16 %v2939
    %v4252 = vunpack.c.l.b16 %v2940
    %v4253 = vunpack.c.h.b16 %v2940
    %v4254 = vunpack.c.l.b16 %v2941
    %v4255 = vunpack.c.l.b16 %v2942
    %v4256 = vunpack.c.h.b16 %v2942
    %v4257 = vunpack.c.l.b16 %v2943
    %v4258 = vunpack.c.h.b16 %v2943
    %v4259 = vunpack.c.l.b16 %v2944
    %v4260 = vunpack.c.h.b16 %v2944
    %v4261 = vunpack.c.l.b16 %v2945
    %v4262 = vunpack.c.l.b16 %v2946
    %v4263 = vunpack.c.h.b16 %v2946
    %v4264 = vunpack.c.l.b16 %v2947
    %v4265 = vunpack.c.h.b16 %v2947
    %v4266 = vunpack.c.l.b16 %v2948
    %v4267 = vunpack.c.h.b16 %v2948
    %v4268 = vunpack.c.l.b16 %v2949
    %v4269 = vunpack.c.l.b16 %v2950
    %v4270 = vunpack.c.h.b16 %v2950
    %v4271 = vunpack.c.l.b16 %v2951
    %v4272 = vunpack.c.h.b16 %v2951
    %v4273 = vunpack.c.l.b16 %v2952
    %v4274 = vunpack.c.h.b16 %v2952
    %v4275 = vunpack.c.l.b16 %v2953
    %v4276 = vunpack.c.l.b16 %v2954
    %v4277 = vunpack.c.h.b16 %v2954
    %v4278 = vunpack.c.l.b16 %v2955
    %v4279 = vunpack.c.h.b16 %v2955
    %v4280 = vunpack.c.l.b16 %v2956
    %v4281 = vunpack.c.h.b16 %v2956
    %v4282 = vunpack.c.l.b16 %v2957
    %v4283 = vunpack.c.l.b16 %v2958
    %v4284 = vunpack.c.h.b16 %v2958
    %v4285 = vunpack.c.l.b16 %v2959
    %v4286 = vunpack.c.h.b16 %v2959
    %v4287 = vunpack.c.l.b16 %v2960
    %v4288 = vunpack.c.h.b16 %v2960
    %v4289 = vunpack.c.l.b16 %v2961
    %v4290 = vunpack.c.l.b16 %v2962
    %v4291 = vunpack.c.h.b16 %v2962
    %v4292 = vunpack.c.l.b16 %v2963
    %v4293 = vunpack.c.h.b16 %v2963
    %v4294 = vunpack.c.l.b16 %v2964
    %v4295 = vunpack.c.h.b16 %v2964
    %v4296 = vunpack.c.l.b16 %v2965
    %v4297 = vunpack.c.l.b16 %v2966
    %v4298 = vunpack.c.h.b16 %v2966
    %v4299 = vunpack.c.l.b16 %v2967
    %v4300 = vunpack.c.h.b16 %v2967
    %v4301 = vunpack.c.l.b16 %v2968
    %v4302 = vunpack.c.h.b16 %v2968
    %v4303 = vunpack.c.l.b16 %v2969
    %v4304 = vunpack.c.l.b16 %v2970
    %v4305 = vunpack.c.h.b16 %v2970
    %v4306 = vunpack.c.l.b16 %v2971
    %v4307 = vunpack.c.h.b16 %v2971
    %v4308 = vunpack.c.l.b16 %v2972
    %v4309 = vunpack.c.h.b16 %v2972
    %v4310 = vunpack.c.l.b16 %v2973
    %v4311 = vunpack.c.l.b16 %v2974
    %v4312 = vunpack.c.h.b16 %v2974
    %v4313 = vunpack.c.l.b16 %v2975
    %v4314 = vunpack.c.h.b16 %v2975
    %v4315 = vunpack.c.l.b16 %v2976
    %v4316 = vunpack.c.h.b16 %v2976
    %v4317 = vunpack.c.l.b16 %v2977
    %v4318 = vunpack.c.l.b16 %v2978
    %v4319 = vunpack.c.h.b16 %v2978
    %v4320 = vunpack.c.l.b16 %v2979
    %v4321 = vunpack.c.h.b16 %v2979
    %v4322 = vunpack.c.l.b16 %v2980
    %v4323 = vunpack.c.h.b16 %v2980
    %v4324 = vunpack.c.l.b16 %v2981
    %v4325 = vunpack.c.l.b16 %v2982
    %v4326 = vunpack.c.h.b16 %v2982
    %v4327 = vunpack.c.l.b16 %v2983
    %v4328 = vunpack.c.h.b16 %v2983
    %v4329 = vunpack.c.l.b16 %v2984
    %v4330 = vunpack.c.h.b16 %v2984
    %v4331 = vunpack.c.l.b16 %v2985
    %v4332 = vunpack.c.l.b16 %v2986
    %v4333 = vunpack.c.h.b16 %v2986
    %v4334 = vunpack.c.l.b16 %v2987
    %v4335 = vunpack.c.h.b16 %v2987
    %v4336 = vunpack.c.l.b16 %v2988
    %v4337 = vunpack.c.h.b16 %v2988
    %v4338 = vunpack.c.l.b16 %v2989
    %v4339 = vunpack.c.l.b16 %v2990
    %v4340 = vunpack.c.h.b16 %v2990
    %v4341 = vunpack.c.l.b16 %v2991
    %v4342 = vunpack.c.h.b16 %v2991
    %v4343 = vunpack.c.l.b16 %v2992
    %v4344 = vunpack.c.h.b16 %v2992
    %v4345 = vunpack.c.l.b16 %v2993
    %v4346 = vunpack.c.l.b16 %v2994
    %v4347 = vunpack.c.h.b16 %v2994
    %v4348 = vunpack.c.l.b16 %v2995
    %v4349 = vunpack.c.h.b16 %v2995
    %v4350 = vunpack.c.l.b16 %v2996
    %v4351 = vunpack.c.h.b16 %v2996
    %v4352 = vunpack.c.l.b16 %v2997
    %v4353 = vunpack.c.l.b16 %v2998
    %v4354 = vunpack.c.h.b16 %v2998
    %v4355 = vunpack.c.l.b16 %v2999
    %v4356 = vunpack.c.h.b16 %v2999
    %v4357 = vunpack.c.l.b16 %v3000
    %v4358 = vunpack.c.h.b16 %v3000
    %v4359 = vunpack.c.l.b16 %v3001
    %v4360 = vunpack.c.l.b16 %v3002
    %v4361 = vunpack.c.h.b16 %v3002
    %v4362 = vunpack.c.l.b16 %v3003
    %v4363 = vunpack.c.h.b16 %v3003
    %v4364 = vunpack.c.l.b16 %v3004
    %v4365 = vunpack.c.h.b16 %v3004
    %v4366 = vunpack.c.l.b16 %v3005
    %v4367 = vunpack.c.l.b16 %v3006
    %v4368 = vunpack.c.h.b16 %v3006
    %v4369 = vunpack.c.l.b16 %v3007
    %v4370 = vunpack.c.h.b16 %v3007
    %v4371 = vunpack.c.l.b16 %v3008
    %v4372 = vunpack.c.h.b16 %v3008
    %v4373 = vunpack.c.l.b16 %v3009
    %v4374 = vunpack.c.l.b16 %v3010
    %v4375 = vunpack.c.h.b16 %v3010
    %v4376 = vunpack.c.l.b16 %v3011
    %v4377 = vunpack.c.h.b16 %v3011
    %v4378 = vunpack.c.l.b16 %v3012
    %v4379 = vunpack.c.h.b16 %v3012
    %v4380 = vunpack.c.l.b16 %v3013
    %v4381 = vunpack.c.l.b16 %v3014
    %v4382 = vunpack.c.h.b16 %v3014
    %v4383 = vunpack.c.l.b16 %v3015
    %v4384 = vunpack.c.h.b16 %v3015
    %v4385 = vunpack.c.l.b16 %v3016
    %v4386 = vunpack.c.h.b16 %v3016
    %v4387 = vunpack.c.l.b16 %v3017
    %v4388 = vunpack.c.l.b16 %v3018
    %v4389 = vunpack.c.h.b16 %v3018
    %v4390 = vunpack.c.l.b16 %v3019
    %v4391 = vunpack.c.h.b16 %v3019
    %v4392 = vunpack.c.l.b16 %v3020
    %v4393 = vunpack.c.h.b16 %v3020
    %v4394 = vunpack.c.l.b16 %v3021
    %v4395 = vunpack.c.l.b16 %v3022
    %v4396 = vunpack.c.h.b16 %v3022
    %v4397 = vunpack.c.l.b16 %v3023
    %v4398 = vunpack.c.h.b16 %v3023
    %v4399 = vunpack.c.l.b16 %v3024
    %v4400 = vunpack.c.h.b16 %v3024
    %v4401 = vunpack.c.l.b16 %v3025
    %v4402 = vunpack.c.l.b16 %v3026
    %v4403 = vunpack.c.h.b16 %v3026
    %v4404 = vunpack.c.l.b16 %v3027
    %v4405 = vunpack.c.h.b16 %v3027
    %v4406 = vunpack.c.l.b16 %v3028
    %v4407 = vunpack.c.h.b16 %v3028
    %v4408 = vunpack.c.l.b16 %v3029
    %v4409 = vunpack.c.l.b16 %v3030
    %v4410 = vunpack.c.h.b16 %v3030
    %v4411 = vunpack.c.l.b16 %v3031
    %v4412 = vunpack.c.h.b16 %v3031
    %v4413 = vunpack.c.l.b16 %v3032
    %v4414 = vunpack.c.h.b16 %v3032
    %v4415 = vunpack.c.l.b16 %v3033
    %v4416 = vunpack.c.l.b16 %v3034
    %v4417 = vunpack.c.h.b16 %v3034
    %v4418 = vunpack.c.l.b16 %v3035
    %v4419 = vunpack.c.h.b16 %v3035
    %v4420 = vunpack.c.l.b16 %v3036
    %v4421 = vunpack.c.h.b16 %v3036
    %v4422 = vunpack.c.l.b16 %v3037
    %v4423 = vunpack.c.l.b16 %v3038
    %v4424 = vunpack.c.h.b16 %v3038
    %v4425 = vunpack.c.l.b16 %v3039
    %v4426 = vunpack.c.h.b16 %v3039
    %v4427 = vunpack.c.l.b16 %v3040
    %v4428 = vunpack.c.h.b16 %v3040
    %v4429 = vunpack.c.l.b16 %v3041
    %v4430 = vunpack.c.l.b16 %v3042
    %v4431 = vunpack.c.h.b16 %v3042
    %v4432 = vunpack.c.l.b16 %v3043
    %v4433 = vunpack.c.h.b16 %v3043
    %v4434 = vunpack.c.l.b16 %v3044
    %v4435 = vunpack.c.h.b16 %v3044
    %v4436 = vunpack.c.l.b16 %v3045
    %v4437 = vunpack.c.l.b16 %v3046
    %v4438 = vunpack.c.h.b16 %v3046
    %v4439 = vunpack.c.l.b16 %v3047
    %v4440 = vunpack.c.h.b16 %v3047
    %v4441 = vunpack.c.l.b16 %v3048
    %v4442 = vunpack.c.h.b16 %v3048
    %v4443 = vunpack.c.l.b16 %v3049
    %v4444 = vunpack.c.l.b16 %v3050
    %v4445 = vunpack.c.h.b16 %v3050
    %v4446 = vunpack.c.l.b16 %v3051
    %v4447 = vunpack.c.h.b16 %v3051
    %v4448 = vunpack.c.l.b16 %v3052
    %v4449 = vunpack.c.h.b16 %v3052
    %v4450 = vunpack.c.l.b16 %v3053
    %v4451 = vunpack.c.l.b16 %v3054
    %v4452 = vunpack.c.h.b16 %v3054
    %v4453 = vunpack.c.l.b16 %v3055
    %v4454 = vunpack.c.h.b16 %v3055
    %v4455 = vunpack.c.l.b16 %v3056
    %v4456 = vunpack.c.h.b16 %v3056
    %v4457 = vunpack.c.l.b16 %v3057
    %v4458 = vunpack.c.l.b16 %v3058
    %v4459 = vunpack.c.h.b16 %v3058
    %v4460 = vunpack.c.l.b16 %v3059
    %v4461 = vunpack.c.h.b16 %v3059
    %v4462 = vunpack.c.l.b16 %v3060
    %v4463 = vunpack.c.h.b16 %v3060
    %v4464 = vunpack.c.l.b16 %v3061
    %v4465 = vunpack.c.l.b16 %v3062
    %v4466 = vunpack.c.h.b16 %v3062
    %v4467 = vunpack.c.l.b16 %v3063
    %v4468 = vunpack.c.h.b16 %v3063
    %v4469 = vunpack.c.l.b16 %v3064
    %v4470 = vunpack.c.h.b16 %v3064
    %v4471 = vunpack.c.l.b16 %v3065
    %v4472 = vunpack.c.l.b16 %v3066
    %v4473 = vunpack.c.h.b16 %v3066
    %v4474 = vunpack.c.l.b16 %v3067
    %v4475 = vunpack.c.h.b16 %v3067
    %v4476 = vunpack.c.l.b16 %v3068
    %v4477 = vunpack.c.h.b16 %v3068
    %v4478 = vunpack.c.l.b16 %v3069
    %v4479 = vunpack.c.l.b16 %v3070
    %v4480 = vunpack.c.h.b16 %v3070
    %v4481 = vunpack.c.l.b16 %v3071
    %v4482 = vunpack.c.h.b16 %v3071
    %v4483 = vunpack.c.l.b16 %v3072
    %v4484 = vunpack.c.h.b16 %v3072
    %v4485 = vunpack.c.l.b16 %v3073
    %v4486 = vunpack.c.l.b16 %v3074
    %v4487 = vunpack.c.h.b16 %v3074
    %v4488 = vunpack.c.l.b16 %v3075
    %v4489 = vunpack.c.h.b16 %v3075
    %v4490 = vunpack.c.l.b16 %v3076
    %v4491 = vunpack.c.h.b16 %v3076
    %v4492 = vunpack.c.l.b16 %v3077
    %v4493 = vunpack.c.l.b16 %v3078
    %v4494 = vunpack.c.h.b16 %v3078
    %v4495 = vunpack.c.l.b16 %v3079
    %v4496 = vunpack.c.h.b16 %v3079
    %v4497 = vunpack.c.l.b16 %v3080
    %v4498 = vunpack.c.h.b16 %v3080
    %v4499 = vunpack.c.l.b16 %v3081
    %v4500 = vunpack.c.l.b16 %v3082
    %v4501 = vunpack.c.h.b16 %v3082
    %v4502 = vunpack.c.l.b16 %v3083
    %v4503 = vunpack.c.h.b16 %v3083
    %v4504 = vunpack.c.l.b16 %v3084
    %v4505 = vunpack.c.h.b16 %v3084
    %v4506 = vunpack.c.l.b16 %v3085
    %v4507 = vunpack.c.l.b16 %v3086
    %v4508 = vunpack.c.h.b16 %v3086
    %v4509 = vunpack.c.l.b16 %v3087
    %v4510 = vunpack.c.h.b16 %v3087
    %v4511 = vunpack.c.l.b16 %v3088
    %v4512 = vunpack.c.h.b16 %v3088
    %v4513 = vunpack.c.l.b16 %v3089
    %v4514 = vunpack.c.l.b16 %v3090
    %v4515 = vunpack.c.h.b16 %v3090
    %v4516 = vunpack.c.l.b16 %v3091
    %v4517 = vunpack.c.h.b16 %v3091
    %v4518 = vunpack.c.l.b16 %v3092
    %v4519 = vunpack.c.h.b16 %v3092
    %v4520 = vunpack.c.l.b16 %v3093
    %v4521 = vunpack.c.l.b16 %v3094
    %v4522 = vunpack.c.h.b16 %v3094
    %v4523 = vunpack.c.l.b16 %v3095
    %v4524 = vunpack.c.h.b16 %v3095
    %v4525 = vunpack.c.l.b16 %v3096
    %v4526 = vunpack.c.h.b16 %v3096
    %v4527 = vunpack.c.l.b16 %v3097
    %v4528 = vunpack.c.l.b16 %v3098
    %v4529 = vunpack.c.h.b16 %v3098
    %v4530 = vunpack.c.l.b16 %v3099
    %v4531 = vunpack.c.h.b16 %v3099
    %v4532 = vunpack.c.l.b16 %v3100
    %v4533 = vunpack.c.h.b16 %v3100
    %v4534 = vunpack.c.l.b16 %v3101
    %v4535 = vunpack.c.l.b16 %v3102
    %v4536 = vunpack.c.h.b16 %v3102
    %v4537 = vunpack.c.l.b16 %v3103
    %v4538 = vunpack.c.h.b16 %v3103
    %v4539 = vunpack.c.l.b16 %v3104
    %v4540 = vunpack.c.h.b16 %v3104
    %v4541 = vunpack.c.l.b16 %v3105
    %v4542 = vunpack.c.l.b16 %v3106
    %v4543 = vunpack.c.h.b16 %v3106
    %v4544 = vunpack.c.l.b16 %v3107
    %v4545 = vunpack.c.h.b16 %v3107
    %v4546 = vunpack.c.l.b16 %v3108
    %v4547 = vunpack.c.h.b16 %v3108
    %v4548 = vunpack.c.l.b16 %v3109
    %v4549 = vunpack.c.l.b16 %v3110
    %v4550 = vunpack.c.h.b16 %v3110
    %v4551 = vunpack.c.l.b16 %v3111
    %v4552 = vunpack.c.h.b16 %v3111
    %v4553 = vunpack.c.l.b16 %v3112
    %v4554 = vunpack.c.h.b16 %v3112
    %v4555 = vunpack.c.l.b16 %v3113
    %v4556 = vunpack.c.l.b16 %v3114
    %v4557 = vunpack.c.h.b16 %v3114
    %v4558 = vunpack.c.l.b16 %v3115
    %v4559 = vunpack.c.h.b16 %v3115
    %v4560 = vunpack.c.l.b16 %v3116
    %v4561 = vunpack.c.h.b16 %v3116
    %v4562 = vunpack.c.l.b16 %v3117
    %v4563 = vpack.c.b16 %v3674, %v3667
    %v4564 = vpack.c.b16 %v3675, %v3668
    %v4565 = vpack.c.b16 %v3676, %v3669
    %v4566 = vpack.c.b16 %v3677, %v3670
    %v4567 = vpack.c.b16 %v3678, %v3671
    %v4568 = vpack.c.b16 %v3679, %v3672
    %v4569 = vpack.c.b16 %v3680, %v3673
    %v4570 = vpack.c.b16 %v3688, %v3681
    %v4571 = vpack.c.b16 %v3689, %v3682
    %v4572 = vpack.c.b16 %v3690, %v3683
    %v4573 = vpack.c.b16 %v3691, %v3684
    %v4574 = vpack.c.b16 %v3692, %v3685
    %v4575 = vpack.c.b16 %v3693, %v3686
    %v4576 = vpack.c.b16 %v3694, %v3687
    %v4577 = vpack.c.b16 %v3702, %v3695
    %v4578 = vpack.c.b16 %v3703, %v3696
    %v4579 = vpack.c.b16 %v3704, %v3697
    %v4580 = vpack.c.b16 %v3705, %v3698
    %v4581 = vpack.c.b16 %v3706, %v3699
    %v4582 = vpack.c.b16 %v3707, %v3700
    %v4583 = vpack.c.b16 %v3708, %v3701
    %v4584 = vpack.c.b16 %v3716, %v3709
    %v4585 = vpack.c.b16 %v3717, %v3710
    %v4586 = vpack.c.b16 %v3718, %v3711
    %v4587 = vpack.c.b16 %v3719, %v3712
    %v4588 = vpack.c.b16 %v3720, %v3713
    %v4589 = vpack.c.b16 %v3721, %v3714
    %v4590 = vpack.c.b16 %v3722, %v3715
    %v4591 = vpack.c.b16 %v3730, %v3723
    %v4592 = vpack.c.b16 %v3731, %v3724
    %v4593 = vpack.c.b16 %v3732, %v3725
    %v4594 = vpack.c.b16 %v3733, %v3726
    %v4595 = vpack.c.b16 %v3734, %v3727
    %v4596 = vpack.c.b16 %v3735, %v3728
    %v4597 = vpack.c.b16 %v3736, %v3729
    %v4598 = vpack.c.b16 %v3744, %v3737
    %v4599 = vpack.c.b16 %v3745, %v3738
    %v4600 = vpack.c.b16 %v3746, %v3739
    %v4601 = vpack.c.b16 %v3747, %v3740
    %v4602 = vpack.c.b16 %v3748, %v3741
    %v4603 = vpack.c.b16 %v3749, %v3742
    %v4604 = vpack.c.b16 %v3750, %v3743
    %v4605 = vpack.c.b16 %v3758, %v3751
    %v4606 = vpack.c.b16 %v3759, %v3752
    %v4607 = vpack.c.b16 %v3760, %v3753
    %v4608 = vpack.c.b16 %v3761, %v3754
    %v4609 = vpack.c.b16 %v3762, %v3755
    %v4610 = vpack.c.b16 %v3763, %v3756
    %v4611 = vpack.c.b16 %v3764, %v3757
    %v4612 = vpack.c.b16 %v3772, %v3765
    %v4613 = vpack.c.b16 %v3773, %v3766
    %v4614 = vpack.c.b16 %v3774, %v3767
    %v4615 = vpack.c.b16 %v3775, %v3768
    %v4616 = vpack.c.b16 %v3776, %v3769
    %v4617 = vpack.c.b16 %v3777, %v3770
    %v4618 = vpack.c.b16 %v3778, %v3771
    %v4619 = vpack.c.b16 %v3786, %v3779
    %v4620 = vpack.c.b16 %v3787, %v3780
    %v4621 = vpack.c.b16 %v3788, %v3781
    %v4622 = vpack.c.b16 %v3789, %v3782
    %v4623 = vpack.c.b16 %v3790, %v3783
    %v4624 = vpack.c.b16 %v3791, %v3784
    %v4625 = vpack.c.b16 %v3792, %v3785
    %v4626 = vpack.c.b16 %v3800, %v3793
    %v4627 = vpack.c.b16 %v3801, %v3794
    %v4628 = vpack.c.b16 %v3802, %v3795
    %v4629 = vpack.c.b16 %v3803, %v3796
    %v4630 = vpack.c.b16 %v3804, %v3797
    %v4631 = vpack.c.b16 %v3805, %v3798
    %v4632 = vpack.c.b16 %v3806, %v3799
    %v4633 = vpack.c.b16 %v3814, %v3807
    %v4634 = vpack.c.b16 %v3815, %v3808
    %v4635 = vpack.c.b16 %v3816, %v3809
    %v4636 = vpack.c.b16 %v3817, %v3810
    %v4637 = vpack.c.b16 %v3818, %v3811
    %v4638 = vpack.c.b16 %v3819, %v3812
    %v4639 = vpack.c.b16 %v3820, %v3813
    %v4640 = vpack.c.b16 %v3828, %v3821
    %v4641 = vpack.c.b16 %v3829, %v3822
    %v4642 = vpack.c.b16 %v3830, %v3823
    %v4643 = vpack.c.b16 %v3831, %v3824
    %v4644 = vpack.c.b16 %v3832, %v3825
    %v4645 = vpack.c.b16 %v3833, %v3826
    %v4646 = vpack.c.b16 %v3834, %v3827
    %v4647 = vpack.c.b16 %v3842, %v3835
    %v4648 = vpack.c.b16 %v3843, %v3836
    %v4649 = vpack.c.b16 %v3844, %v3837
    %v4650 = vpack.c.b16 %v3845, %v3838
    %v4651 = vpack.c.b16 %v3846, %v3839
    %v4652 = vpack.c.b16 %v3847, %v3840
    %v4653 = vpack.c.b16 %v3848, %v3841
    %v4654 = vpack.c.b16 %v3856, %v3849
    %v4655 = vpack.c.b16 %v3857, %v3850
    %v4656 = vpack.c.b16 %v3858, %v3851
    %v4657 = vpack.c.b16 %v3859, %v3852
    %v4658 = vpack.c.b16 %v3860, %v3853
    %v4659 = vpack.c.b16 %v3861, %v3854
    %v4660 = vpack.c.b16 %v3862, %v3855
    %v4661 = vpack.c.b16 %v3870, %v3863
    %v4662 = vpack.c.b16 %v3871, %v3864
    %v4663 = vpack.c.b16 %v3872, %v3865
    %v4664 = vpack.c.b16 %v3873, %v3866
    %v4665 = vpack.c.b16 %v3874, %v3867
    %v4666 = vpack.c.b16 %v3875, %v3868
    %v4667 = vpack.c.b16 %v3876, %v3869
    %v4668 = vpack.c.b16 %v3884, %v3877
    %v4669 = vpack.c.b16 %v3885, %v3878
    %v4670 = vpack.c.b16 %v3886, %v3879
    %v4671 = vpack.c.b16 %v3887, %v3880
    %v4672 = vpack.c.b16 %v3888, %v3881
    %v4673 = vpack.c.b16 %v3889, %v3882
    %v4674 = vpack.c.b16 %v3890, %v3883
    %v4675 = vpack.c.b16 %v3898, %v3891
    %v4676 = vpack.c.b16 %v3899, %v3892
    %v4677 = vpack.c.b16 %v3900, %v3893
    %v4678 = vpack.c.b16 %v3901, %v3894
    %v4679 = vpack.c.b16 %v3902, %v3895
    %v4680 = vpack.c.b16 %v3903, %v3896
    %v4681 = vpack.c.b16 %v3904, %v3897
    %v4682 = vpack.c.b16 %v3912, %v3905
    %v4683 = vpack.c.b16 %v3913, %v3906
    %v4684 = vpack.c.b16 %v3914, %v3907
    %v4685 = vpack.c.b16 %v3915, %v3908
    %v4686 = vpack.c.b16 %v3916, %v3909
    %v4687 = vpack.c.b16 %v3917, %v3910
    %v4688 = vpack.c.b16 %v3918, %v3911
    %v4689 = vpack.c.b16 %v3926, %v3919
    %v4690 = vpack.c.b16 %v3927, %v3920
    %v4691 = vpack.c.b16 %v3928, %v3921
    %v4692 = vpack.c.b16 %v3929, %v3922
    %v4693 = vpack.c.b16 %v3930, %v3923
    %v4694 = vpack.c.b16 %v3931, %v3924
    %v4695 = vpack.c.b16 %v3932, %v3925
    %v4696 = vpack.c.b16 %v3940, %v3933
    %v4697 = vpack.c.b16 %v3941, %v3934
    %v4698 = vpack.c.b16 %v3942, %v3935
    %v4699 = vpack.c.b16 %v3943, %v3936
    %v4700 = vpack.c.b16 %v3944, %v3937
    %v4701 = vpack.c.b16 %v3945, %v3938
    %v4702 = vpack.c.b16 %v3946, %v3939
    %v4703 = vpack.c.b16 %v3954, %v3947
    %v4704 = vpack.c.b16 %v3955, %v3948
    %v4705 = vpack.c.b16 %v3956, %v3949
    %v4706 = vpack.c.b16 %v3957, %v3950
    %v4707 = vpack.c.b16 %v3958, %v3951
    %v4708 = vpack.c.b16 %v3959, %v3952
    %v4709 = vpack.c.b16 %v3960, %v3953
    %v4710 = vpack.c.b16 %v3968, %v3961
    %v4711 = vpack.c.b16 %v3969, %v3962
    %v4712 = vpack.c.b16 %v3970, %v3963
    %v4713 = vpack.c.b16 %v3971, %v3964
    %v4714 = vpack.c.b16 %v3972, %v3965
    %v4715 = vpack.c.b16 %v3973, %v3966
    %v4716 = vpack.c.b16 %v3974, %v3967
    %v4717 = vpack.c.b16 %v3982, %v3975
    %v4718 = vpack.c.b16 %v3983, %v3976
    %v4719 = vpack.c.b16 %v3984, %v3977
    %v4720 = vpack.c.b16 %v3985, %v3978
    %v4721 = vpack.c.b16 %v3986, %v3979
    %v4722 = vpack.c.b16 %v3987, %v3980
    %v4723 = vpack.c.b16 %v3988, %v3981
    %v4724 = vpack.c.b16 %v3996, %v3989
    %v4725 = vpack.c.b16 %v3997, %v3990
    %v4726 = vpack.c.b16 %v3998, %v3991
    %v4727 = vpack.c.b16 %v3999, %v3992
    %v4728 = vpack.c.b16 %v4000, %v3993
    %v4729 = vpack.c.b16 %v4001, %v3994
    %v4730 = vpack.c.b16 %v4002, %v3995
    %v4731 = vpack.c.b16 %v4010, %v4003
    %v4732 = vpack.c.b16 %v4011, %v4004
    %v4733 = vpack.c.b16 %v4012, %v4005
    %v4734 = vpack.c.b16 %v4013, %v4006
    %v4735 = vpack.c.b16 %v4014, %v4007
    %v4736 = vpack.c.b16 %v4015, %v4008
    %v4737 = vpack.c.b16 %v4016, %v4009
    %v4738 = vpack.c.b16 %v4024, %v4017
    %v4739 = vpack.c.b16 %v4025, %v4018
    %v4740 = vpack.c.b16 %v4026, %v4019
    %v4741 = vpack.c.b16 %v4027, %v4020
    %v4742 = vpack.c.b16 %v4028, %v4021
    %v4743 = vpack.c.b16 %v4029, %v4022
    %v4744 = vpack.c.b16 %v4030, %v4023
    %v4745 = vpack.c.b16 %v4038, %v4031
    %v4746 = vpack.c.b16 %v4039, %v4032
    %v4747 = vpack.c.b16 %v4040, %v4033
    %v4748 = vpack.c.b16 %v4041, %v4034
    %v4749 = vpack.c.b16 %v4042, %v4035
    %v4750 = vpack.c.b16 %v4043, %v4036
    %v4751 = vpack.c.b16 %v4044, %v4037
    %v4752 = vpack.c.b16 %v4052, %v4045
    %v4753 = vpack.c.b16 %v4053, %v4046
    %v4754 = vpack.c.b16 %v4054, %v4047
    %v4755 = vpack.c.b16 %v4055, %v4048
    %v4756 = vpack.c.b16 %v4056, %v4049
    %v4757 = vpack.c.b16 %v4057, %v4050
    %v4758 = vpack.c.b16 %v4058, %v4051
    %v4759 = vpack.c.b16 %v4066, %v4059
    %v4760 = vpack.c.b16 %v4067, %v4060
    %v4761 = vpack.c.b16 %v4068, %v4061
    %v4762 = vpack.c.b16 %v4069, %v4062
    %v4763 = vpack.c.b16 %v4070, %v4063
    %v4764 = vpack.c.b16 %v4071, %v4064
    %v4765 = vpack.c.b16 %v4072, %v4065
    %v4766 = vpack.c.b16 %v4080, %v4073
    %v4767 = vpack.c.b16 %v4081, %v4074
    %v4768 = vpack.c.b16 %v4082, %v4075
    %v4769 = vpack.c.b16 %v4083, %v4076
    %v4770 = vpack.c.b16 %v4084, %v4077
    %v4771 = vpack.c.b16 %v4085, %v4078
    %v4772 = vpack.c.b16 %v4086, %v4079
    %v4773 = vpack.c.b16 %v4094, %v4087
    %v4774 = vpack.c.b16 %v4095, %v4088
    %v4775 = vpack.c.b16 %v4096, %v4089
    %v4776 = vpack.c.b16 %v4097, %v4090
    %v4777 = vpack.c.b16 %v4098, %v4091
    %v4778 = vpack.c.b16 %v4099, %v4092
    %v4779 = vpack.c.b16 %v4100, %v4093
    %v4780 = vpack.c.b16 %v4108, %v4101
    %v4781 = vpack.c.b16 %v4109, %v4102
    %v4782 = vpack.c.b16 %v4110, %v4103
    %v4783 = vpack.c.b16 %v4111, %v4104
    %v4784 = vpack.c.b16 %v4112, %v4105
    %v4785 = vpack.c.b16 %v4113, %v4106
    %v4786 = vpack.c.b16 %v4114, %v4107
    %v4787 = vpack.c.b16 %v4122, %v4115
    %v4788 = vpack.c.b16 %v4123, %v4116
    %v4789 = vpack.c.b16 %v4124, %v4117
    %v4790 = vpack.c.b16 %v4125, %v4118
    %v4791 = vpack.c.b16 %v4126, %v4119
    %v4792 = vpack.c.b16 %v4127, %v4120
    %v4793 = vpack.c.b16 %v4128, %v4121
    %v4794 = vpack.c.b16 %v4136, %v4129
    %v4795 = vpack.c.b16 %v4137, %v4130
    %v4796 = vpack.c.b16 %v4138, %v4131
    %v4797 = vpack.c.b16 %v4139, %v4132
    %v4798 = vpack.c.b16 %v4140, %v4133
    %v4799 = vpack.c.b16 %v4141, %v4134
    %v4800 = vpack.c.b16 %v4142, %v4135
    %v4801 = vpack.c.b16 %v4150, %v4143
    %v4802 = vpack.c.b16 %v4151, %v4144
    %v4803 = vpack.c.b16 %v4152, %v4145
    %v4804 = vpack.c.b16 %v4153, %v4146
    %v4805 = vpack.c.b16 %v4154, %v4147
    %v4806 = vpack.c.b16 %v4155, %v4148
    %v4807 = vpack.c.b16 %v4156, %v4149
    %v4808 = vpack.c.b16 %v4164, %v4157
    %v4809 = vpack.c.b16 %v4165, %v4158
    %v4810 = vpack.c.b16 %v4166, %v4159
    %v4811 = vpack.c.b16 %v4167, %v4160
    %v4812 = vpack.c.b16 %v4168, %v4161
    %v4813 = vpack.c.b16 %v4169, %v4162
    %v4814 = vpack.c.b16 %v4170, %v4163
    %v4815 = vpack.c.b16 %v4178, %v4171
    %v4816 = vpack.c.b16 %v4179, %v4172
    %v4817 = vpack.c.b16 %v4180, %v4173
    %v4818 = vpack.c.b16 %v4181, %v4174
    %v4819 = vpack.c.b16 %v4182, %v4175
    %v4820 = vpack.c.b16 %v4183, %v4176
    %v4821 = vpack.c.b16 %v4184, %v4177
    %v4822 = vpack.c.b16 %v4192, %v4185
    %v4823 = vpack.c.b16 %v4193, %v4186
    %v4824 = vpack.c.b16 %v4194, %v4187
    %v4825 = vpack.c.b16 %v4195, %v4188
    %v4826 = vpack.c.b16 %v4196, %v4189
    %v4827 = vpack.c.b16 %v4197, %v4190
    %v4828 = vpack.c.b16 %v4198, %v4191
    %v4829 = vpack.c.b16 %v4206, %v4199
    %v4830 = vpack.c.b16 %v4207, %v4200
    %v4831 = vpack.c.b16 %v4208, %v4201
    %v4832 = vpack.c.b16 %v4209, %v4202
    %v4833 = vpack.c.b16 %v4210, %v4203
    %v4834 = vpack.c.b16 %v4211, %v4204
    %v4835 = vpack.c.b16 %v4212, %v4205
    %v4836 = vpack.c.b16 %v4220, %v4213
    %v4837 = vpack.c.b16 %v4221, %v4214
    %v4838 = vpack.c.b16 %v4222, %v4215
    %v4839 = vpack.c.b16 %v4223, %v4216
    %v4840 = vpack.c.b16 %v4224, %v4217
    %v4841 = vpack.c.b16 %v4225, %v4218
    %v4842 = vpack.c.b16 %v4226, %v4219
    %v4843 = vpack.c.b16 %v4234, %v4227
    %v4844 = vpack.c.b16 %v4235, %v4228
    %v4845 = vpack.c.b16 %v4236, %v4229
    %v4846 = vpack.c.b16 %v4237, %v4230
    %v4847 = vpack.c.b16 %v4238, %v4231
    %v4848 = vpack.c.b16 %v4239, %v4232
    %v4849 = vpack.c.b16 %v4240, %v4233
    %v4850 = vpack.c.b16 %v4248, %v4241
    %v4851 = vpack.c.b16 %v4249, %v4242
    %v4852 = vpack.c.b16 %v4250, %v4243
    %v4853 = vpack.c.b16 %v4251, %v4244
    %v4854 = vpack.c.b16 %v4252, %v4245
    %v4855 = vpack.c.b16 %v4253, %v4246
    %v4856 = vpack.c.b16 %v4254, %v4247
    %v4857 = vpack.c.b16 %v4262, %v4255
    %v4858 = vpack.c.b16 %v4263, %v4256
    %v4859 = vpack.c.b16 %v4264, %v4257
    %v4860 = vpack.c.b16 %v4265, %v4258
    %v4861 = vpack.c.b16 %v4266, %v4259
    %v4862 = vpack.c.b16 %v4267, %v4260
    %v4863 = vpack.c.b16 %v4268, %v4261
    %v4864 = vpack.c.b16 %v4276, %v4269
    %v4865 = vpack.c.b16 %v4277, %v4270
    %v4866 = vpack.c.b16 %v4278, %v4271
    %v4867 = vpack.c.b16 %v4279, %v4272
    %v4868 = vpack.c.b16 %v4280, %v4273
    %v4869 = vpack.c.b16 %v4281, %v4274
    %v4870 = vpack.c.b16 %v4282, %v4275
    %v4871 = vpack.c.b16 %v4290, %v4283
    %v4872 = vpack.c.b16 %v4291, %v4284
    %v4873 = vpack.c.b16 %v4292, %v4285
    %v4874 = vpack.c.b16 %v4293, %v4286
    %v4875 = vpack.c.b16 %v4294, %v4287
    %v4876 = vpack.c.b16 %v4295, %v4288
    %v4877 = vpack.c.b16 %v4296, %v4289
    %v4878 = vpack.c.b16 %v4304, %v4297
    %v4879 = vpack.c.b16 %v4305, %v4298
    %v4880 = vpack.c.b16 %v4306, %v4299
    %v4881 = vpack.c.b16 %v4307, %v4300
    %v4882 = vpack.c.b16 %v4308, %v4301
    %v4883 = vpack.c.b16 %v4309, %v4302
    %v4884 = vpack.c.b16 %v4310, %v4303
    %v4885 = vpack.c.b16 %v4318, %v4311
    %v4886 = vpack.c.b16 %v4319, %v4312
    %v4887 = vpack.c.b16 %v4320, %v4313
    %v4888 = vpack.c.b16 %v4321, %v4314
    %v4889 = vpack.c.b16 %v4322, %v4315
    %v4890 = vpack.c.b16 %v4323, %v4316
    %v4891 = vpack.c.b16 %v4324, %v4317
    %v4892 = vpack.c.b16 %v4332, %v4325
    %v4893 = vpack.c.b16 %v4333, %v4326
    %v4894 = vpack.c.b16 %v4334, %v4327
    %v4895 = vpack.c.b16 %v4335, %v4328
    %v4896 = vpack.c.b16 %v4336, %v4329
    %v4897 = vpack.c.b16 %v4337, %v4330
    %v4898 = vpack.c.b16 %v4338, %v4331
    %v4899 = vpack.c.b16 %v4346, %v4339
    %v4900 = vpack.c.b16 %v4347, %v4340
    %v4901 = vpack.c.b16 %v4348, %v4341
    %v4902 = vpack.c.b16 %v4349, %v4342
    %v4903 = vpack.c.b16 %v4350, %v4343
    %v4904 = vpack.c.b16 %v4351, %v4344
    %v4905 = vpack.c.b16 %v4352, %v4345
    %v4906 = vpack.c.b16 %v4360, %v4353
    %v4907 = vpack.c.b16 %v4361, %v4354
    %v4908 = vpack.c.b16 %v4362, %v4355
    %v4909 = vpack.c.b16 %v4363, %v4356
    %v4910 = vpack.c.b16 %v4364, %v4357
    %v4911 = vpack.c.b16 %v4365, %v4358
    %v4912 = vpack.c.b16 %v4366, %v4359
    %v4913 = vpack.c.b16 %v4374, %v4367
    %v4914 = vpack.c.b16 %v4375, %v4368
    %v4915 = vpack.c.b16 %v4376, %v4369
    %v4916 = vpack.c.b16 %v4377, %v4370
    %v4917 = vpack.c.b16 %v4378, %v4371
    %v4918 = vpack.c.b16 %v4379, %v4372
    %v4919 = vpack.c.b16 %v4380, %v4373
    %v4920 = vpack.c.b16 %v4388, %v4381
    %v4921 = vpack.c.b16 %v4389, %v4382
    %v4922 = vpack.c.b16 %v4390, %v4383
    %v4923 = vpack.c.b16 %v4391, %v4384
    %v4924 = vpack.c.b16 %v4392, %v4385
    %v4925 = vpack.c.b16 %v4393, %v4386
    %v4926 = vpack.c.b16 %v4394, %v4387
    %v4927 = vpack.c.b16 %v4402, %v4395
    %v4928 = vpack.c.b16 %v4403, %v4396
    %v4929 = vpack.c.b16 %v4404, %v4397
    %v4930 = vpack.c.b16 %v4405, %v4398
    %v4931 = vpack.c.b16 %v4406, %v4399
    %v4932 = vpack.c.b16 %v4407, %v4400
    %v4933 = vpack.c.b16 %v4408, %v4401
    %v4934 = vpack.c.b16 %v4416, %v4409
    %v4935 = vpack.c.b16 %v4417, %v4410
    %v4936 = vpack.c.b16 %v4418, %v4411
    %v4937 = vpack.c.b16 %v4419, %v4412
    %v4938 = vpack.c.b16 %v4420, %v4413
    %v4939 = vpack.c.b16 %v4421, %v4414
    %v4940 = vpack.c.b16 %v4422, %v4415
    %v4941 = vpack.c.b16 %v4430, %v4423
    %v4942 = vpack.c.b16 %v4431, %v4424
    %v4943 = vpack.c.b16 %v4432, %v4425
    %v4944 = vpack.c.b16 %v4433, %v4426
    %v4945 = vpack.c.b16 %v4434, %v4427
    %v4946 = vpack.c.b16 %v4435, %v4428
    %v4947 = vpack.c.b16 %v4436, %v4429
    %v4948 = vpack.c.b16 %v4444, %v4437
    %v4949 = vpack.c.b16 %v4445, %v4438
    %v4950 = vpack.c.b16 %v4446, %v4439
    %v4951 = vpack.c.b16 %v4447, %v4440
    %v4952 = vpack.c.b16 %v4448, %v4441
    %v4953 = vpack.c.b16 %v4449, %v4442
    %v4954 = vpack.c.b16 %v4450, %v4443
    %v4955 = vpack.c.b16 %v4458, %v4451
    %v4956 = vpack.c.b16 %v4459, %v4452
    %v4957 = vpack.c.b16 %v4460, %v4453
    %v4958 = vpack.c.b16 %v4461, %v4454
    %v4959 = vpack.c.b16 %v4462, %v4455
    %v4960 = vpack.c.b16 %v4463, %v4456
    %v4961 = vpack.c.b16 %v4464, %v4457
    %v4962 = vpack.c.b16 %v4472, %v4465
    %v4963 = vpack.c.b16 %v4473, %v4466
    %v4964 = vpack.c.b16 %v4474, %v4467
    %v4965 = vpack.c.b16 %v4475, %v4468
    %v4966 = vpack.c.b16 %v4476, %v4469
    %v4967 = vpack.c.b16 %v4477, %v4470
    %v4968 = vpack.c.b16 %v4478, %v4471
    %v4969 = vpack.c.b16 %v4486, %v4479
    %v4970 = vpack.c.b16 %v4487, %v4480
    %v4971 = vpack.c.b16 %v4488, %v4481
    %v4972 = vpack.c.b16 %v4489, %v4482
    %v4973 = vpack.c.b16 %v4490, %v4483
    %v4974 = vpack.c.b16 %v4491, %v4484
    %v4975 = vpack.c.b16 %v4492, %v4485
    %v4976 = vpack.c.b16 %v4500, %v4493
    %v4977 = vpack.c.b16 %v4501, %v4494
    %v4978 = vpack.c.b16 %v4502, %v4495
    %v4979 = vpack.c.b16 %v4503, %v4496
    %v4980 = vpack.c.b16 %v4504, %v4497
    %v4981 = vpack.c.b16 %v4505, %v4498
    %v4982 = vpack.c.b16 %v4506, %v4499
    %v4983 = vpack.c.b16 %v4514, %v4507
    %v4984 = vpack.c.b16 %v4515, %v4508
    %v4985 = vpack.c.b16 %v4516, %v4509
    %v4986 = vpack.c.b16 %v4517, %v4510
    %v4987 = vpack.c.b16 %v4518, %v4511
    %v4988 = vpack.c.b16 %v4519, %v4512
    %v4989 = vpack.c.b16 %v4520, %v4513
    %v4990 = vpack.c.b16 %v4528, %v4521
    %v4991 = vpack.c.b16 %v4529, %v4522
    %v4992 = vpack.c.b16 %v4530, %v4523
    %v4993 = vpack.c.b16 %v4531, %v4524
    %v4994 = vpack.c.b16 %v4532, %v4525
    %v4995 = vpack.c.b16 %v4533, %v4526
    %v4996 = vpack.c.b16 %v4534, %v4527
    %v4997 = vpack.c.b16 %v4542, %v4535
    %v4998 = vpack.c.b16 %v4543, %v4536
    %v4999 = vpack.c.b16 %v4544, %v4537
    %v5000 = vpack.c.b16 %v4545, %v4538
    %v5001 = vpack.c.b16 %v4546, %v4539
    %v5002 = vpack.c.b16 %v4547, %v4540
    %v5003 = vpack.c.b16 %v4548, %v4541
    %v5004 = vpack.c.b16 %v4556, %v4549
    %v5005 = vpack.c.b16 %v4557, %v4550
    %v5006 = vpack.c.b16 %v4558, %v4551
    %v5007 = vpack.c.b16 %v4559, %v4552
    %v5008 = vpack.c.b16 %v4560, %v4553
    %v5009 = vpack.c.b16 %v4561, %v4554
    %v5010 = vpack.c.b16 %v4562, %v4555
    %5459 = vmatprep.subr.bf16.mxu0 %v4564
    %5460 = vmatpush1.bf16.msra.mxu0 %v4563
    %5461 = vmatprep.subr.bf16.mxu0 %v4571
    %5462 = vmatpush1.bf16.msra.mxu0 %v4570
    %5463 = vmatprep.subr.bf16.mxu0 %v4578
    %5464 = vmatpush1.bf16.msra.mxu0 %v4577
    %5465 = vmatprep.subr.bf16.mxu0 %v4585
    %5466 = vmatpush1.bf16.msra.mxu0 %v4584
    %5467 = vmatprep.subr.bf16.mxu0 %v4592
    %5468 = vmatpush1.bf16.msra.mxu0 %v4591
    %5469 = vmatprep.subr.bf16.mxu0 %v4599
    %5470 = vmatpush1.bf16.msra.mxu0 %v4598
    %5471 = vmatprep.subr.bf16.mxu0 %v4606
    %5472 = vmatpush1.bf16.msra.mxu0 %v4605
    %5473 = vmatprep.subr.bf16.mxu0 %v4613
    %5474 = vmatpush1.bf16.msra.mxu0 %v4612
    %5475 = vmatprep.subr.bf16.mxu0 %v4620
    %5476 = vmatpush1.bf16.msra.mxu0 %v4619
    %5477 = vmatprep.subr.bf16.mxu0 %v4627
    %5478 = vmatpush1.bf16.msra.mxu0 %v4626
    %5479 = vmatprep.subr.bf16.mxu0 %v4634
    %5480 = vmatpush1.bf16.msra.mxu0 %v4633
    %5481 = vmatprep.subr.bf16.mxu0 %v4641
    %5482 = vmatpush1.bf16.msra.mxu0 %v4640
    %5483 = vmatprep.subr.bf16.mxu0 %v4648
    %5484 = vmatpush1.bf16.msra.mxu0 %v4647
    %5485 = vmatprep.subr.bf16.mxu0 %v4655
    %5486 = vmatpush1.bf16.msra.mxu0 %v4654
    %5487 = vmatprep.subr.bf16.mxu0 %v4662
    %5488 = vmatpush1.bf16.msra.mxu0 %v4661
    %5489 = vmatprep.subr.bf16.mxu0 %v4669
    %5490 = vmatpush1.bf16.msra.mxu0 %v4668
    %5491 = vmatprep.mubr.bf16.mxu0 %v2599
    %5492 = vmatmul.mubr.bf16.gmra.mrb[0].mxu0 %v2598
    %v5493 = vpop.f32.mrb[0].mxu0
    %v5494 = vadd.f32 %v3123, %v5493
    %v5495 = vpop.f32.mrb[0].mxu0
    %v5496 = vadd.f32 %v3127, %v5495
    %v5497 = vpop.f32.mrb[0].mxu0
    %v5498 = vpop.f32.mrb[0].mxu0
    %5499 = vdwg.mxu0
    %5500 = vmatprep.subr.bf16.mxu0 %v4676
    %5501 = vmatpush1.bf16.msra.mxu0 %v4675
    %5502 = vmatprep.subr.bf16.mxu0 %v4683
    %5503 = vmatpush1.bf16.msra.mxu0 %v4682
    %5504 = vmatprep.subr.bf16.mxu0 %v4690
    %5505 = vmatpush1.bf16.msra.mxu0 %v4689
    %5506 = vmatprep.subr.bf16.mxu0 %v4697
    %5507 = vmatpush1.bf16.msra.mxu0 %v4696
    %5508 = vmatprep.subr.bf16.mxu0 %v4704
    %5509 = vmatpush1.bf16.msra.mxu0 %v4703
    %5510 = vmatprep.subr.bf16.mxu0 %v4711
    %5511 = vmatpush1.bf16.msra.mxu0 %v4710
    %5512 = vmatprep.subr.bf16.mxu0 %v4718
    %5513 = vmatpush1.bf16.msra.mxu0 %v4717
    %5514 = vmatprep.subr.bf16.mxu0 %v4725
    %5515 = vmatpush1.bf16.msra.mxu0 %v4724
    %5516 = vmatprep.subr.bf16.mxu0 %v4732
    %5517 = vmatpush1.bf16.msra.mxu0 %v4731
    %5518 = vmatprep.subr.bf16.mxu0 %v4739
    %5519 = vmatpush1.bf16.msra.mxu0 %v4738
    %5520 = vmatprep.subr.bf16.mxu0 %v4746
    %5521 = vmatpush1.bf16.msra.mxu0 %v4745
    %5522 = vmatprep.subr.bf16.mxu0 %v4753
    %5523 = vmatpush1.bf16.msra.mxu0 %v4752
    %5524 = vmatprep.subr.bf16.mxu0 %v4760
    %5525 = vmatpush1.bf16.msra.mxu0 %v4759
    %5526 = vmatprep.subr.bf16.mxu0 %v4767
    %5527 = vmatpush1.bf16.msra.mxu0 %v4766
    %5528 = vmatprep.subr.bf16.mxu0 %v4774
    %5529 = vmatpush1.bf16.msra.mxu0 %v4773
    %5530 = vmatprep.subr.bf16.mxu0 %v4781
    %5531 = vmatpush1.bf16.msra.mxu0 %v4780
    %5532 = vmatprep.mubr.bf16.mxu0 %v2601
    %5533 = vmatmul.mubr.bf16.gmra.mrb[0].mxu0 %v2600
    %v5534 = vpop.f32.mrb[0].mxu0
    %v5535 = vadd.f32 %v5494, %v5534
    %v5536 = vpop.f32.mrb[0].mxu0
    %v5537 = vadd.f32 %v5496, %v5536
    %v5538 = vpop.f32.mrb[0].mxu0
    %v5539 = vpop.f32.mrb[0].mxu0
    %5540 = vdwg.mxu0
    %5541 = vmatprep.subr.bf16.mxu0 %v4788
    %5542 = vmatpush1.bf16.msra.mxu0 %v4787
    %5543 = vmatprep.subr.bf16.mxu0 %v4795
    %5544 = vmatpush1.bf16.msra.mxu0 %v4794
    %5545 = vmatprep.subr.bf16.mxu0 %v4802
    %5546 = vmatpush1.bf16.msra.mxu0 %v4801
    %5547 = vmatprep.subr.bf16.mxu0 %v4809
    %5548 = vmatpush1.bf16.msra.mxu0 %v4808
    %5549 = vmatprep.subr.bf16.mxu0 %v4816
    %5550 = vmatpush1.bf16.msra.mxu0 %v4815
    %5551 = vmatprep.subr.bf16.mxu0 %v4823
    %5552 = vmatpush1.bf16.msra.mxu0 %v4822
    %5553 = vmatprep.subr.bf16.mxu0 %v4830
    %5554 = vmatpush1.bf16.msra.mxu0 %v4829
    %5555 = vmatprep.subr.bf16.mxu0 %v4837
    %5556 = vmatpush1.bf16.msra.mxu0 %v4836
    %5557 = vmatprep.subr.bf16.mxu0 %v4844
    %5558 = vmatpush1.bf16.msra.mxu0 %v4843
    %5559 = vmatprep.subr.bf16.mxu0 %v4851
    %5560 = vmatpush1.bf16.msra.mxu0 %v4850
    %5561 = vmatprep.subr.bf16.mxu0 %v4858
    %5562 = vmatpush1.bf16.msra.mxu0 %v4857
    %5563 = vmatprep.subr.bf16.mxu0 %v4865
    %5564 = vmatpush1.bf16.msra.mxu0 %v4864
    %5565 = vmatprep.subr.bf16.mxu0 %v4872
    %5566 = vmatpush1.bf16.msra.mxu0 %v4871
    %5567 = vmatprep.subr.bf16.mxu0 %v4879
    %5568 = vmatpush1.bf16.msra.mxu0 %v4878
    %5569 = vmatprep.subr.bf16.mxu0 %v4886
    %5570 = vmatpush1.bf16.msra.mxu0 %v4885
    %5571 = vmatprep.subr.bf16.mxu0 %v4893
    %5572 = vmatpush1.bf16.msra.mxu0 %v4892
    %5573 = vmatprep.mubr.bf16.mxu0 %v2603
    %5574 = vmatmul.mubr.bf16.gmra.mrb[0].mxu0 %v2602
    %v5575 = vpop.f32.mrb[0].mxu0
    %v5576 = vadd.f32 %v5535, %v5575
    %v5577 = vpop.f32.mrb[0].mxu0
    %v5578 = vadd.f32 %v5537, %v5577
    %v5579 = vpop.f32.mrb[0].mxu0
    %v5580 = vpop.f32.mrb[0].mxu0
    %5581 = vdwg.mxu0
    %5582 = vmatprep.subr.bf16.mxu0 %v4900
    %5583 = vmatpush1.bf16.msra.mxu0 %v4899
    %5584 = vmatprep.subr.bf16.mxu0 %v4907
    %5585 = vmatpush1.bf16.msra.mxu0 %v4906
    %5586 = vmatprep.subr.bf16.mxu0 %v4914
    %5587 = vmatpush1.bf16.msra.mxu0 %v4913
    %5588 = vmatprep.subr.bf16.mxu0 %v4921
    %5589 = vmatpush1.bf16.msra.mxu0 %v4920
    %5590 = vmatprep.subr.bf16.mxu0 %v4928
    %5591 = vmatpush1.bf16.msra.mxu0 %v4927
    %5592 = vmatprep.subr.bf16.mxu0 %v4935
    %5593 = vmatpush1.bf16.msra.mxu0 %v4934
    %5594 = vmatprep.subr.bf16.mxu0 %v4942
    %5595 = vmatpush1.bf16.msra.mxu0 %v4941
    %5596 = vmatprep.subr.bf16.mxu0 %v4949
    %5597 = vmatpush1.bf16.msra.mxu0 %v4948
    %5598 = vmatprep.subr.bf16.mxu0 %v4956
    %5599 = vmatpush1.bf16.msra.mxu0 %v4955
    %5600 = vmatprep.subr.bf16.mxu0 %v4963
    %5601 = vmatpush1.bf16.msra.mxu0 %v4962
    %5602 = vmatprep.subr.bf16.mxu0 %v4970
    %5603 = vmatpush1.bf16.msra.mxu0 %v4969
    %5604 = vmatprep.subr.bf16.mxu0 %v4977
    %5605 = vmatpush1.bf16.msra.mxu0 %v4976
    %5606 = vmatprep.subr.bf16.mxu0 %v4984
    %5607 = vmatpush1.bf16.msra.mxu0 %v4983
    %5608 = vmatprep.subr.bf16.mxu0 %v4991
    %5609 = vmatpush1.bf16.msra.mxu0 %v4990
    %5610 = vmatprep.subr.bf16.mxu0 %v4998
    %5611 = vmatpush1.bf16.msra.mxu0 %v4997
    %5612 = vmatprep.subr.bf16.mxu0 %v5005
    %5613 = vmatpush1.bf16.msra.mxu0 %v5004
    %5614 = vmatprep.mubr.bf16.mxu0 %v2605
    %5615 = vmatmul.mubr.bf16.gmra.mrb[0].mxu0 %v2604
    %v5616 = vpop.f32.mrb[0].mxu0
    %v5617 = vadd.f32 %v5576, %v5616
    %v5618 = vpop.f32.mrb[0].mxu0
    %v5619 = vadd.f32 %v5578, %v5618
    %v5620 = vpop.f32.mrb[0].mxu0
    %v5621 = vpop.f32.mrb[0].mxu0
    %5622 = vdwg.mxu0
    %5623 = vmatprep.subr.bf16.mxu0 %v4566
    %5624 = vmatpush1.bf16.msra.mxu0 %v4565
    %5625 = vmatprep.subr.bf16.mxu0 %v4573
    %5626 = vmatpush1.bf16.msra.mxu0 %v4572
    %5627 = vmatprep.subr.bf16.mxu0 %v4580
    %5628 = vmatpush1.bf16.msra.mxu0 %v4579
    %5629 = vmatprep.subr.bf16.mxu0 %v4587
    %5630 = vmatpush1.bf16.msra.mxu0 %v4586
    %5631 = vmatprep.subr.bf16.mxu0 %v4594
    %5632 = vmatpush1.bf16.msra.mxu0 %v4593
    %5633 = vmatprep.subr.bf16.mxu0 %v4601
    %5634 = vmatpush1.bf16.msra.mxu0 %v4600
    %5635 = vmatprep.subr.bf16.mxu0 %v4608
    %5636 = vmatpush1.bf16.msra.mxu0 %v4607
    %5637 = vmatprep.subr.bf16.mxu0 %v4615
    %5638 = vmatpush1.bf16.msra.mxu0 %v4614
    %5639 = vmatprep.subr.bf16.mxu0 %v4622
    %5640 = vmatpush1.bf16.msra.mxu0 %v4621
    %5641 = vmatprep.subr.bf16.mxu0 %v4629
    %5642 = vmatpush1.bf16.msra.mxu0 %v4628
    %5643 = vmatprep.subr.bf16.mxu0 %v4636
    %5644 = vmatpush1.bf16.msra.mxu0 %v4635
    %5645 = vmatprep.subr.bf16.mxu0 %v4643
    %5646 = vmatpush1.bf16.msra.mxu0 %v4642
    %5647 = vmatprep.subr.bf16.mxu0 %v4650
    %5648 = vmatpush1.bf16.msra.mxu0 %v4649
    %5649 = vmatprep.subr.bf16.mxu0 %v4657
    %5650 = vmatpush1.bf16.msra.mxu0 %v4656
    %5651 = vmatprep.subr.bf16.mxu0 %v4664
    %5652 = vmatpush1.bf16.msra.mxu0 %v4663
    %5653 = vmatprep.subr.bf16.mxu0 %v4671
    %5654 = vmatpush1.bf16.msra.mxu0 %v4670
    %5655 = vmatprep.mubr.bf16.mxu0 %v2599
    %5656 = vmatmul.mubr.bf16.gmra.mrb[0].mxu0 %v2598
    %v5657 = vpop.f32.mrb[0].mxu0
    %v5658 = vadd.f32 %v3131, %v5657
    %v5659 = vpop.f32.mrb[0].mxu0
    %v5660 = vadd.f32 %v3135, %v5659
    %v5661 = vpop.f32.mrb[0].mxu0
    %v5662 = vpop.f32.mrb[0].mxu0
    %5663 = vdwg.mxu0
    %5664 = vmatprep.subr.bf16.mxu0 %v4678
    %5665 = vmatpush1.bf16.msra.mxu0 %v4677
    %5666 = vmatprep.subr.bf16.mxu0 %v4685
    %5667 = vmatpush1.bf16.msra.mxu0 %v4684
    %5668 = vmatprep.subr.bf16.mxu0 %v4692
    %5669 = vmatpush1.bf16.msra.mxu0 %v4691
    %5670 = vmatprep.subr.bf16.mxu0 %v4699
    %5671 = vmatpush1.bf16.msra.mxu0 %v4698
    %5672 = vmatprep.subr.bf16.mxu0 %v4706
    %5673 = vmatpush1.bf16.msra.mxu0 %v4705
    %5674 = vmatprep.subr.bf16.mxu0 %v4713
    %5675 = vmatpush1.bf16.msra.mxu0 %v4712
    %5676 = vmatprep.subr.bf16.mxu0 %v4720
    %5677 = vmatpush1.bf16.msra.mxu0 %v4719
    %5678 = vmatprep.subr.bf16.mxu0 %v4727
    %5679 = vmatpush1.bf16.msra.mxu0 %v4726
    %5680 = vmatprep.subr.bf16.mxu0 %v4734
    %5681 = vmatpush1.bf16.msra.mxu0 %v4733
    %5682 = vmatprep.subr.bf16.mxu0 %v4741
    %5683 = vmatpush1.bf16.msra.mxu0 %v4740
    %5684 = vmatprep.subr.bf16.mxu0 %v4748
    %5685 = vmatpush1.bf16.msra.mxu0 %v4747
    %5686 = vmatprep.subr.bf16.mxu0 %v4755
    %5687 = vmatpush1.bf16.msra.mxu0 %v4754
    %5688 = vmatprep.subr.bf16.mxu0 %v4762
    %5689 = vmatpush1.bf16.msra.mxu0 %v4761
    %5690 = vmatprep.subr.bf16.mxu0 %v4769
    %5691 = vmatpush1.bf16.msra.mxu0 %v4768
    %5692 = vmatprep.subr.bf16.mxu0 %v4776
    %5693 = vmatpush1.bf16.msra.mxu0 %v4775
    %5694 = vmatprep.subr.bf16.mxu0 %v4783
    %5695 = vmatpush1.bf16.msra.mxu0 %v4782
    %5696 = vmatprep.mubr.bf16.mxu0 %v2601
    %5697 = vmatmul.mubr.bf16.gmra.mrb[0].mxu0 %v2600
    %v5698 = vpop.f32.mrb[0].mxu0
    %v5699 = vadd.f32 %v5658, %v5698
    %v5700 = vpop.f32.mrb[0].mxu0
    %v5701 = vadd.f32 %v5660, %v5700
    %v5702 = vpop.f32.mrb[0].mxu0
    %v5703 = vpop.f32.mrb[0].mxu0
    %5704 = vdwg.mxu0
    %5705 = vmatprep.subr.bf16.mxu0 %v4790
    %5706 = vmatpush1.bf16.msra.mxu0 %v4789
    %5707 = vmatprep.subr.bf16.mxu0 %v4797
    %5708 = vmatpush1.bf16.msra.mxu0 %v4796
    %5709 = vmatprep.subr.bf16.mxu0 %v4804
    %5710 = vmatpush1.bf16.msra.mxu0 %v4803
    %5711 = vmatprep.subr.bf16.mxu0 %v4811
    %5712 = vmatpush1.bf16.msra.mxu0 %v4810
    %5713 = vmatprep.subr.bf16.mxu0 %v4818
    %5714 = vmatpush1.bf16.msra.mxu0 %v4817
    %5715 = vmatprep.subr.bf16.mxu0 %v4825
    %5716 = vmatpush1.bf16.msra.mxu0 %v4824
    %5717 = vmatprep.subr.bf16.mxu0 %v4832
    %5718 = vmatpush1.bf16.msra.mxu0 %v4831
    %5719 = vmatprep.subr.bf16.mxu0 %v4839
    %5720 = vmatpush1.bf16.msra.mxu0 %v4838
    %5721 = vmatprep.subr.bf16.mxu0 %v4846
    %5722 = vmatpush1.bf16.msra.mxu0 %v4845
    %5723 = vmatprep.subr.bf16.mxu0 %v4853
    %5724 = vmatpush1.bf16.msra.mxu0 %v4852
    %5725 = vmatprep.subr.bf16.mxu0 %v4860
    %5726 = vmatpush1.bf16.msra.mxu0 %v4859
    %5727 = vmatprep.subr.bf16.mxu0 %v4867
    %5728 = vmatpush1.bf16.msra.mxu0 %v4866
    %5729 = vmatprep.subr.bf16.mxu0 %v4874
    %5730 = vmatpush1.bf16.msra.mxu0 %v4873
    %5731 = vmatprep.subr.bf16.mxu0 %v4881
    %5732 = vmatpush1.bf16.msra.mxu0 %v4880
    %5733 = vmatprep.subr.bf16.mxu0 %v4888
    %5734 = vmatpush1.bf16.msra.mxu0 %v4887
    %5735 = vmatprep.subr.bf16.mxu0 %v4895
    %5736 = vmatpush1.bf16.msra.mxu0 %v4894
    %5737 = vmatprep.mubr.bf16.mxu0 %v2603
    %5738 = vmatmul.mubr.bf16.gmra.mrb[0].mxu0 %v2602
    %v5739 = vpop.f32.mrb[0].mxu0
    %v5740 = vadd.f32 %v5699, %v5739
    %v5741 = vpop.f32.mrb[0].mxu0
    %v5742 = vadd.f32 %v5701, %v5741
    %v5743 = vpop.f32.mrb[0].mxu0
    %v5744 = vpop.f32.mrb[0].mxu0
    %5745 = vdwg.mxu0
    %5746 = vmatprep.subr.bf16.mxu0 %v4902
    %5747 = vmatpush1.bf16.msra.mxu0 %v4901
    %5748 = vmatprep.subr.bf16.mxu0 %v4909
    %5749 = vmatpush1.bf16.msra.mxu0 %v4908
    %5750 = vmatprep.subr.bf16.mxu0 %v4916
    %5751 = vmatpush1.bf16.msra.mxu0 %v4915
    %5752 = vmatprep.subr.bf16.mxu0 %v4923
    %5753 = vmatpush1.bf16.msra.mxu0 %v4922
    %5754 = vmatprep.subr.bf16.mxu0 %v4930
    %5755 = vmatpush1.bf16.msra.mxu0 %v4929
    %5756 = vmatprep.subr.bf16.mxu0 %v4937
    %5757 = vmatpush1.bf16.msra.mxu0 %v4936
    %5758 = vmatprep.subr.bf16.mxu0 %v4944
    %5759 = vmatpush1.bf16.msra.mxu0 %v4943
    %5760 = vmatprep.subr.bf16.mxu0 %v4951
    %5761 = vmatpush1.bf16.msra.mxu0 %v4950
    %5762 = vmatprep.subr.bf16.mxu0 %v4958
    %5763 = vmatpush1.bf16.msra.mxu0 %v4957
    %5764 = vmatprep.subr.bf16.mxu0 %v4965
    %5765 = vmatpush1.bf16.msra.mxu0 %v4964
    %5766 = vmatprep.subr.bf16.mxu0 %v4972
    %5767 = vmatpush1.bf16.msra.mxu0 %v4971
    %5768 = vmatprep.subr.bf16.mxu0 %v4979
    %5769 = vmatpush1.bf16.msra.mxu0 %v4978
    %5770 = vmatprep.subr.bf16.mxu0 %v4986
    %5771 = vmatpush1.bf16.msra.mxu0 %v4985
    %5772 = vmatprep.subr.bf16.mxu0 %v4993
    %5773 = vmatpush1.bf16.msra.mxu0 %v4992
    %5774 = vmatprep.subr.bf16.mxu0 %v5000
    %5775 = vmatpush1.bf16.msra.mxu0 %v4999
    %5776 = vmatprep.subr.bf16.mxu0 %v5007
    %5777 = vmatpush1.bf16.msra.mxu0 %v5006
    %5778 = vmatprep.mubr.bf16.mxu0 %v2605
    %5779 = vmatmul.mubr.bf16.gmra.mrb[0].mxu0 %v2604
    %v5780 = vpop.f32.mrb[0].mxu0
    %v5781 = vadd.f32 %v5740, %v5780
    %v5782 = vpop.f32.mrb[0].mxu0
    %v5783 = vadd.f32 %v5742, %v5782
    %v5784 = vpop.f32.mrb[0].mxu0
    %v5785 = vpop.f32.mrb[0].mxu0
    %5786 = vdwg.mxu0
    %5787 = vmatprep.subr.bf16.mxu0 %v4568
    %5788 = vmatpush1.bf16.msra.mxu0 %v4567
    %5789 = vmatprep.subr.bf16.mxu0 %v4575
    %5790 = vmatpush1.bf16.msra.mxu0 %v4574
    %5791 = vmatprep.subr.bf16.mxu0 %v4582
    %5792 = vmatpush1.bf16.msra.mxu0 %v4581
    %5793 = vmatprep.subr.bf16.mxu0 %v4589
    %5794 = vmatpush1.bf16.msra.mxu0 %v4588
    %5795 = vmatprep.subr.bf16.mxu0 %v4596
    %5796 = vmatpush1.bf16.msra.mxu0 %v4595
    %5797 = vmatprep.subr.bf16.mxu0 %v4603
    %5798 = vmatpush1.bf16.msra.mxu0 %v4602
    %5799 = vmatprep.subr.bf16.mxu0 %v4610
    %5800 = vmatpush1.bf16.msra.mxu0 %v4609
    %5801 = vmatprep.subr.bf16.mxu0 %v4617
    %5802 = vmatpush1.bf16.msra.mxu0 %v4616
    %5803 = vmatprep.subr.bf16.mxu0 %v4624
    %5804 = vmatpush1.bf16.msra.mxu0 %v4623
    %5805 = vmatprep.subr.bf16.mxu0 %v4631
    %5806 = vmatpush1.bf16.msra.mxu0 %v4630
    %5807 = vmatprep.subr.bf16.mxu0 %v4638
    %5808 = vmatpush1.bf16.msra.mxu0 %v4637
    %5809 = vmatprep.subr.bf16.mxu0 %v4645
    %5810 = vmatpush1.bf16.msra.mxu0 %v4644
    %5811 = vmatprep.subr.bf16.mxu0 %v4652
    %5812 = vmatpush1.bf16.msra.mxu0 %v4651
    %5813 = vmatprep.subr.bf16.mxu0 %v4659
    %5814 = vmatpush1.bf16.msra.mxu0 %v4658
    %5815 = vmatprep.subr.bf16.mxu0 %v4666
    %5816 = vmatpush1.bf16.msra.mxu0 %v4665
    %5817 = vmatprep.subr.bf16.mxu0 %v4673
    %5818 = vmatpush1.bf16.msra.mxu0 %v4672
    %5819 = vmatprep.mubr.bf16.mxu0 %v2599
    %5820 = vmatmul.mubr.bf16.gmra.mrb[0].mxu0 %v2598
    %v5821 = vpop.f32.mrb[0].mxu0
    %v5822 = vadd.f32 %v3139, %v5821
    %v5823 = vpop.f32.mrb[0].mxu0
    %v5824 = vadd.f32 %v3143, %v5823
    %v5825 = vpop.f32.mrb[0].mxu0
    %v5826 = vpop.f32.mrb[0].mxu0
    %5827 = vdwg.mxu0
    %5828 = vmatprep.subr.bf16.mxu0 %v4680
    %5829 = vmatpush1.bf16.msra.mxu0 %v4679
    %5830 = vmatprep.subr.bf16.mxu0 %v4687
    %5831 = vmatpush1.bf16.msra.mxu0 %v4686
    %5832 = vmatprep.subr.bf16.mxu0 %v4694
    %5833 = vmatpush1.bf16.msra.mxu0 %v4693
    %5834 = vmatprep.subr.bf16.mxu0 %v4701
    %5835 = vmatpush1.bf16.msra.mxu0 %v4700
    %5836 = vmatprep.subr.bf16.mxu0 %v4708
    %5837 = vmatpush1.bf16.msra.mxu0 %v4707
    %5838 = vmatprep.subr.bf16.mxu0 %v4715
    %5839 = vmatpush1.bf16.msra.mxu0 %v4714
    %5840 = vmatprep.subr.bf16.mxu0 %v4722
    %5841 = vmatpush1.bf16.msra.mxu0 %v4721
    %5842 = vmatprep.subr.bf16.mxu0 %v4729
    %5843 = vmatpush1.bf16.msra.mxu0 %v4728
    %5844 = vmatprep.subr.bf16.mxu0 %v4736
    %5845 = vmatpush1.bf16.msra.mxu0 %v4735
    %5846 = vmatprep.subr.bf16.mxu0 %v4743
    %5847 = vmatpush1.bf16.msra.mxu0 %v4742
    %5848 = vmatprep.subr.bf16.mxu0 %v4750
    %5849 = vmatpush1.bf16.msra.mxu0 %v4749
    %5850 = vmatprep.subr.bf16.mxu0 %v4757
    %5851 = vmatpush1.bf16.msra.mxu0 %v4756
    %5852 = vmatprep.subr.bf16.mxu0 %v4764
    %5853 = vmatpush1.bf16.msra.mxu0 %v4763
    %5854 = vmatprep.subr.bf16.mxu0 %v4771
    %5855 = vmatpush1.bf16.msra.mxu0 %v4770
    %5856 = vmatprep.subr.bf16.mxu0 %v4778
    %5857 = vmatpush1.bf16.msra.mxu0 %v4777
    %5858 = vmatprep.subr.bf16.mxu0 %v4785
    %5859 = vmatpush1.bf16.msra.mxu0 %v4784
    %5860 = vmatprep.mubr.bf16.mxu0 %v2601
    %5861 = vmatmul.mubr.bf16.gmra.mrb[0].mxu0 %v2600
    %v5862 = vpop.f32.mrb[0].mxu0
    %v5863 = vadd.f32 %v5822, %v5862
    %v5864 = vpop.f32.mrb[0].mxu0
    %v5865 = vadd.f32 %v5824, %v5864
    %v5866 = vpop.f32.mrb[0].mxu0
    %v5867 = vpop.f32.mrb[0].mxu0
    %5868 = vdwg.mxu0
    %5869 = vmatprep.subr.bf16.mxu0 %v4792
    %5870 = vmatpush1.bf16.msra.mxu0 %v4791
    %5871 = vmatprep.subr.bf16.mxu0 %v4799
    %5872 = vmatpush1.bf16.msra.mxu0 %v4798
    %5873 = vmatprep.subr.bf16.mxu0 %v4806
    %5874 = vmatpush1.bf16.msra.mxu0 %v4805
    %5875 = vmatprep.subr.bf16.mxu0 %v4813
    %5876 = vmatpush1.bf16.msra.mxu0 %v4812
    %5877 = vmatprep.subr.bf16.mxu0 %v4820
    %5878 = vmatpush1.bf16.msra.mxu0 %v4819
    %5879 = vmatprep.subr.bf16.mxu0 %v4827
    %5880 = vmatpush1.bf16.msra.mxu0 %v4826
    %5881 = vmatprep.subr.bf16.mxu0 %v4834
    %5882 = vmatpush1.bf16.msra.mxu0 %v4833
    %5883 = vmatprep.subr.bf16.mxu0 %v4841
    %5884 = vmatpush1.bf16.msra.mxu0 %v4840
    %5885 = vmatprep.subr.bf16.mxu0 %v4848
    %5886 = vmatpush1.bf16.msra.mxu0 %v4847
    %5887 = vmatprep.subr.bf16.mxu0 %v4855
    %5888 = vmatpush1.bf16.msra.mxu0 %v4854
    %5889 = vmatprep.subr.bf16.mxu0 %v4862
    %5890 = vmatpush1.bf16.msra.mxu0 %v4861
    %5891 = vmatprep.subr.bf16.mxu0 %v4869
    %5892 = vmatpush1.bf16.msra.mxu0 %v4868
    %5893 = vmatprep.subr.bf16.mxu0 %v4876
    %5894 = vmatpush1.bf16.msra.mxu0 %v4875
    %5895 = vmatprep.subr.bf16.mxu0 %v4883
    %5896 = vmatpush1.bf16.msra.mxu0 %v4882
    %5897 = vmatprep.subr.bf16.mxu0 %v4890
    %5898 = vmatpush1.bf16.msra.mxu0 %v4889
    %5899 = vmatprep.subr.bf16.mxu0 %v4897
    %5900 = vmatpush1.bf16.msra.mxu0 %v4896
    %5901 = vmatprep.mubr.bf16.mxu0 %v2603
    %5902 = vmatmul.mubr.bf16.gmra.mrb[0].mxu0 %v2602
    %v5903 = vpop.f32.mrb[0].mxu0
    %v5904 = vadd.f32 %v5863, %v5903
    %v5905 = vpop.f32.mrb[0].mxu0
    %v5906 = vadd.f32 %v5865, %v5905
    %v5907 = vpop.f32.mrb[0].mxu0
    %v5908 = vpop.f32.mrb[0].mxu0
    %5909 = vdwg.mxu0
    %5910 = vmatprep.subr.bf16.mxu0 %v4904
    %5911 = vmatpush1.bf16.msra.mxu0 %v4903
    %5912 = vmatprep.subr.bf16.mxu0 %v4911
    %5913 = vmatpush1.bf16.msra.mxu0 %v4910
    %5914 = vmatprep.subr.bf16.mxu0 %v4918
    %5915 = vmatpush1.bf16.msra.mxu0 %v4917
    %5916 = vmatprep.subr.bf16.mxu0 %v4925
    %5917 = vmatpush1.bf16.msra.mxu0 %v4924
    %5918 = vmatprep.subr.bf16.mxu0 %v4932
    %5919 = vmatpush1.bf16.msra.mxu0 %v4931
    %5920 = vmatprep.subr.bf16.mxu0 %v4939
    %5921 = vmatpush1.bf16.msra.mxu0 %v4938
    %5922 = vmatprep.subr.bf16.mxu0 %v4946
    %5923 = vmatpush1.bf16.msra.mxu0 %v4945
    %5924 = vmatprep.subr.bf16.mxu0 %v4953
    %5925 = vmatpush1.bf16.msra.mxu0 %v4952
    %5926 = vmatprep.subr.bf16.mxu0 %v4960
    %5927 = vmatpush1.bf16.msra.mxu0 %v4959
    %5928 = vmatprep.subr.bf16.mxu0 %v4967
    %5929 = vmatpush1.bf16.msra.mxu0 %v4966
    %5930 = vmatprep.subr.bf16.mxu0 %v4974
    %5931 = vmatpush1.bf16.msra.mxu0 %v4973
    %5932 = vmatprep.subr.bf16.mxu0 %v4981
    %5933 = vmatpush1.bf16.msra.mxu0 %v4980
    %5934 = vmatprep.subr.bf16.mxu0 %v4988
    %5935 = vmatpush1.bf16.msra.mxu0 %v4987
    %5936 = vmatprep.subr.bf16.mxu0 %v4995
    %5937 = vmatpush1.bf16.msra.mxu0 %v4994
    %5938 = vmatprep.subr.bf16.mxu0 %v5002
    %5939 = vmatpush1.bf16.msra.mxu0 %v5001
    %5940 = vmatprep.subr.bf16.mxu0 %v5009
    %5941 = vmatpush1.bf16.msra.mxu0 %v5008
    %5942 = vmatprep.mubr.bf16.mxu0 %v2605
    %5943 = vmatmul.mubr.bf16.gmra.mrb[0].mxu0 %v2604
    %v5944 = vpop.f32.mrb[0].mxu0
    %v5945 = vadd.f32 %v5904, %v5944
    %v5946 = vpop.f32.mrb[0].mxu0
    %v5947 = vadd.f32 %v5906, %v5946
    %v5948 = vpop.f32.mrb[0].mxu0
    %v5949 = vpop.f32.mrb[0].mxu0
    %5950 = vdwg.mxu0
    %5951 = vmatprep.subr.bf16.mxu0 0
    %5952 = vmatpush1.bf16.msra.mxu0 %v4569
    %5953 = vmatprep.subr.bf16.mxu0 0
    %5954 = vmatpush1.bf16.msra.mxu0 %v4576
    %5955 = vmatprep.subr.bf16.mxu0 0
    %5956 = vmatpush1.bf16.msra.mxu0 %v4583
    %5957 = vmatprep.subr.bf16.mxu0 0
    %5958 = vmatpush1.bf16.msra.mxu0 %v4590
    %5959 = vmatprep.subr.bf16.mxu0 0
    %5960 = vmatpush1.bf16.msra.mxu0 %v4597
    %5961 = vmatprep.subr.bf16.mxu0 0
    %5962 = vmatpush1.bf16.msra.mxu0 %v4604
    %5963 = vmatprep.subr.bf16.mxu0 0
    %5964 = vmatpush1.bf16.msra.mxu0 %v4611
    %5965 = vmatprep.subr.bf16.mxu0 0
    %5966 = vmatpush1.bf16.msra.mxu0 %v4618
    %5967 = vmatprep.subr.bf16.mxu0 0
    %5968 = vmatpush1.bf16.msra.mxu0 %v4625
    %5969 = vmatprep.subr.bf16.mxu0 0
    %5970 = vmatpush1.bf16.msra.mxu0 %v4632
    %5971 = vmatprep.subr.bf16.mxu0 0
    %5972 = vmatpush1.bf16.msra.mxu0 %v4639
    %5973 = vmatprep.subr.bf16.mxu0 0
    %5974 = vmatpush1.bf16.msra.mxu0 %v4646
    %5975 = vmatprep.subr.bf16.mxu0 0
    %5976 = vmatpush1.bf16.msra.mxu0 %v4653
    %5977 = vmatprep.subr.bf16.mxu0 0
    %5978 = vmatpush1.bf16.msra.mxu0 %v4660
    %5979 = vmatprep.subr.bf16.mxu0 0
    %5980 = vmatpush1.bf16.msra.mxu0 %v4667
    %5981 = vmatprep.subr.bf16.mxu0 0
    %5982 = vmatpush1.bf16.msra.mxu0 %v4674
    %5983 = vmatprep.mubr.bf16.mxu0 %v2599
    %5984 = vmatmul.mubr.bf16.gmra.mrb[0].mxu0 %v2598
    %v5985 = vpop.f32.mrb[0].mxu0
    %v5986 = vadd.f32 %v3147, %v5985
    %v5987 = vpop.f32.mrb[0].mxu0
    %v5988 = vpop.f32.mrb[0].mxu0
    %v5989 = vpop.f32.mrb[0].mxu0
    %5990 = vdwg.mxu0
    %5991 = vmatprep.subr.bf16.mxu0 0
    %5992 = vmatpush1.bf16.msra.mxu0 %v4681
    %5993 = vmatprep.subr.bf16.mxu0 0
    %5994 = vmatpush1.bf16.msra.mxu0 %v4688
    %5995 = vmatprep.subr.bf16.mxu0 0
    %5996 = vmatpush1.bf16.msra.mxu0 %v4695
    %5997 = vmatprep.subr.bf16.mxu0 0
    %5998 = vmatpush1.bf16.msra.mxu0 %v4702
    %5999 = vmatprep.subr.bf16.mxu0 0
    %6000 = vmatpush1.bf16.msra.mxu0 %v4709
    %6001 = vmatprep.subr.bf16.mxu0 0
    %6002 = vmatpush1.bf16.msra.mxu0 %v4716
    %6003 = vmatprep.subr.bf16.mxu0 0
    %6004 = vmatpush1.bf16.msra.mxu0 %v4723
    %6005 = vmatprep.subr.bf16.mxu0 0
    %6006 = vmatpush1.bf16.msra.mxu0 %v4730
    %6007 = vmatprep.subr.bf16.mxu0 0
    %6008 = vmatpush1.bf16.msra.mxu0 %v4737
    %6009 = vmatprep.subr.bf16.mxu0 0
    %6010 = vmatpush1.bf16.msra.mxu0 %v4744
    %6011 = vmatprep.subr.bf16.mxu0 0
    %6012 = vmatpush1.bf16.msra.mxu0 %v4751
    %6013 = vmatprep.subr.bf16.mxu0 0
    %6014 = vmatpush1.bf16.msra.mxu0 %v4758
    %6015 = vmatprep.subr.bf16.mxu0 0
    %6016 = vmatpush1.bf16.msra.mxu0 %v4765
    %6017 = vmatprep.subr.bf16.mxu0 0
    %6018 = vmatpush1.bf16.msra.mxu0 %v4772
    %6019 = vmatprep.subr.bf16.mxu0 0
    %6020 = vmatpush1.bf16.msra.mxu0 %v4779
    %6021 = vmatprep.subr.bf16.mxu0 0
    %6022 = vmatpush1.bf16.msra.mxu0 %v4786
    %6023 = vmatprep.mubr.bf16.mxu0 %v2601
    %6024 = vmatmul.mubr.bf16.gmra.mrb[0].mxu0 %v2600
    %v6025 = vpop.f32.mrb[0].mxu0
    %v6026 = vadd.f32 %v5986, %v6025
    %v6027 = vpop.f32.mrb[0].mxu0
    %v6028 = vpop.f32.mrb[0].mxu0
    %v6029 = vpop.f32.mrb[0].mxu0
    %6030 = vdwg.mxu0
    %6031 = vmatprep.subr.bf16.mxu0 0
    %6032 = vmatpush1.bf16.msra.mxu0 %v4793
    %6033 = vmatprep.subr.bf16.mxu0 0
    %6034 = vmatpush1.bf16.msra.mxu0 %v4800
    %6035 = vmatprep.subr.bf16.mxu0 0
    %6036 = vmatpush1.bf16.msra.mxu0 %v4807
    %6037 = vmatprep.subr.bf16.mxu0 0
    %6038 = vmatpush1.bf16.msra.mxu0 %v4814
    %6039 = vmatprep.subr.bf16.mxu0 0
    %6040 = vmatpush1.bf16.msra.mxu0 %v4821
    %6041 = vmatprep.subr.bf16.mxu0 0
    %6042 = vmatpush1.bf16.msra.mxu0 %v4828
    %6043 = vmatprep.subr.bf16.mxu0 0
    %6044 = vmatpush1.bf16.msra.mxu0 %v4835
    %6045 = vmatprep.subr.bf16.mxu0 0
    %6046 = vmatpush1.bf16.msra.mxu0 %v4842
    %6047 = vmatprep.subr.bf16.mxu0 0
    %6048 = vmatpush1.bf16.msra.mxu0 %v4849
    %6049 = vmatprep.subr.bf16.mxu0 0
    %6050 = vmatpush1.bf16.msra.mxu0 %v4856
    %6051 = vmatprep.subr.bf16.mxu0 0
    %6052 = vmatpush1.bf16.msra.mxu0 %v4863
    %6053 = vmatprep.subr.bf16.mxu0 0
    %6054 = vmatpush1.bf16.msra.mxu0 %v4870
    %6055 = vmatprep.subr.bf16.mxu0 0
    %6056 = vmatpush1.bf16.msra.mxu0 %v4877
    %6057 = vmatprep.subr.bf16.mxu0 0
    %6058 = vmatpush1.bf16.msra.mxu0 %v4884
    %6059 = vmatprep.subr.bf16.mxu0 0
    %6060 = vmatpush1.bf16.msra.mxu0 %v4891
    %6061 = vmatprep.subr.bf16.mxu0 0
    %6062 = vmatpush1.bf16.msra.mxu0 %v4898
    %6063 = vmatprep.mubr.bf16.mxu0 %v2603
    %6064 = vmatmul.mubr.bf16.gmra.mrb[0].mxu0 %v2602
    %v6065 = vpop.f32.mrb[0].mxu0
    %v6066 = vadd.f32 %v6026, %v6065
    %v6067 = vpop.f32.mrb[0].mxu0
    %v6068 = vpop.f32.mrb[0].mxu0
    %v6069 = vpop.f32.mrb[0].mxu0
    %6070 = vdwg.mxu0
    %6071 = vmatprep.subr.bf16.mxu0 0
    %6072 = vmatpush1.bf16.msra.mxu0 %v4905
    %6073 = vmatprep.subr.bf16.mxu0 0
    %6074 = vmatpush1.bf16.msra.mxu0 %v4912
    %6075 = vmatprep.subr.bf16.mxu0 0
    %6076 = vmatpush1.bf16.msra.mxu0 %v4919
    %6077 = vmatprep.subr.bf16.mxu0 0
    %6078 = vmatpush1.bf16.msra.mxu0 %v4926
    %6079 = vmatprep.subr.bf16.mxu0 0
    %6080 = vmatpush1.bf16.msra.mxu0 %v4933
    %6081 = vmatprep.subr.bf16.mxu0 0
    %6082 = vmatpush1.bf16.msra.mxu0 %v4940
    %6083 = vmatprep.subr.bf16.mxu0 0
    %6084 = vmatpush1.bf16.msra.mxu0 %v4947
    %6085 = vmatprep.subr.bf16.mxu0 0
    %6086 = vmatpush1.bf16.msra.mxu0 %v4954
    %6087 = vmatprep.subr.bf16.mxu0 0
    %6088 = vmatpush1.bf16.msra.mxu0 %v4961
    %6089 = vmatprep.subr.bf16.mxu0 0
    %6090 = vmatpush1.bf16.msra.mxu0 %v4968
    %6091 = vmatprep.subr.bf16.mxu0 0
    %6092 = vmatpush1.bf16.msra.mxu0 %v4975
    %6093 = vmatprep.subr.bf16.mxu0 0
    %6094 = vmatpush1.bf16.msra.mxu0 %v4982
    %6095 = vmatprep.subr.bf16.mxu0 0
    %6096 = vmatpush1.bf16.msra.mxu0 %v4989
    %6097 = vmatprep.subr.bf16.mxu0 0
    %6098 = vmatpush1.bf16.msra.mxu0 %v4996
    %6099 = vmatprep.subr.bf16.mxu0 0
    %6100 = vmatpush1.bf16.msra.mxu0 %v5003
    %6101 = vmatprep.subr.bf16.mxu0 0
    %6102 = vmatpush1.bf16.msra.mxu0 %v5010
    %6103 = vmatprep.mubr.bf16.mxu0 %v2605
    %6104 = vmatmul.mubr.bf16.gmra.mrb[0].mxu0 %v2604
    %v6105 = vpop.f32.mrb[0].mxu0
    %v6106 = vadd.f32 %v6066, %v6105
    %v6107 = vpop.f32.mrb[0].mxu0
    %v6108 = vpop.f32.mrb[0].mxu0
    %v6109 = vpop.f32.mrb[0].mxu0
    %6110 = vdwg.mxu0
    %v6111 = vtanh.pop %v5617
    %v6112 = vtanh.pop %v5619
    %v6113 = vtanh.pop %v5781
    %v6114 = vtanh.pop %v5783
    %v6115 = vtanh.pop %v5945
    %v6116 = vtanh.pop %v5947
    %v6117 = vtanh.pop %v6106
    %6118 = vst [vmem:[#allocation2] sm:$0xff] %v6111
    %6119 = vst [vmem:[#allocation2 + $0x8] sm:$0xff] %v6112
    %6120 = vst [vmem:[#allocation2 + $0x10] sm:$0xff] %v6113
    %6121 = vst [vmem:[#allocation2 + $0x18] sm:$0xff] %v6114
    %6122 = vst [vmem:[#allocation2 + $0x20] sm:$0xff] %v6115
    %6123 = vst [vmem:[#allocation2 + $0x28] sm:$0xff] %v6116
    %vm6124 = vcmask 130048
    %6125 = vst.msk [vmem:[#allocation2 + $0x30] sm:$0xff] %vm6124, %v6117
    // Predicated region
    $region38: #{tpu_custom_call.1} parent=1 // pred_check
      _
    $region39: #{tpu_custom_call.1} parent=1 // pred_check_branch
      %6127 = sbr.rel (0) target = $region41
    $region40: #{tpu_custom_call.1} parent=1 // pred_region
      %s6129 = ssub.s32 896, 896
      %6130 = vsyncadd [#allocation3], %s6129
      %s6132 = sshll.u32 [#allocation2], 4
      %s6133 = int_to_ptr.vmem [resolvable:$true] %s6132
      %6135 = dma.vmem_to_hbm [thread:$0]  %s6133, 896, %s9, [#allocation3]
    $region41: #{tpu_custom_call.1} parent=1 // pred_fallthru
      _
    // Predicated region
    $region42: #{tpu_custom_call.1} parent=1 // pred_check
      _
    $region43: #{tpu_custom_call.1} parent=1 // pred_check_branch
      %6137 = sbr.rel (0) target = $region45
    $region44: #{tpu_custom_call.1} parent=1 // pred_region
      %6138 = dma.done [#allocation3], 896
    $region45: #{tpu_custom_call.1} parent=1 // pred_fallthru
      _
    %6139 = vsyncpa [#allocation3], 1

</llo_original>
